<compile_context>
chip_gen: v6e
topology: v6e:2x2x1
jax: 0.10.0
libtpu: 0.0.40
codegen_flags: <defaults>
</compile_context>

<pallas_src>
import functools

import jax
import jax.numpy as jnp
from jax.experimental import pallas as pl
from jax.experimental.pallas import tpu as pltpu


def _cdiv(a: int, b: int) -> int:
    return (a + b - 1) // b


def _round_up(a: int, b: int) -> int:
    return _cdiv(a, b) * b


def _vmem_caps():
    """(tile budget, vmem_limit_bytes) derived from the actual chip so the
    same code tiles correctly on v5e/v6e (128 MiB VMEM) and v7x (64 MiB)."""
    try:
        info = pltpu.get_tpu_info()
        cap = int(getattr(info, "vmem_capacity_bytes", 64 * 1024 * 1024))
    except Exception:  # pragma: no cover - conservative fallback (v7x-sized)
        cap = 64 * 1024 * 1024
    budget = int(cap * 0.5)
    limit = max(32 * 1024 * 1024, min(int(cap * 0.85), 120 * 1024 * 1024))
    return budget, limit


def _pick_tiles(B, Ho, Wo, Wp, cin_p, cout, kh, kw, stride, dilation,
                in_itemsize, out_itemsize, budget):
    """Choose output rows per band and the Cout tile against the VMEM budget."""
    tn = cout if cout <= 512 else 256
    rows = max(1, min(Ho, _cdiv(1024, Wo)))        # ~1024 output pixels / step
    # Keep >= 2 blocks on the parallel grid axes so v7x megacore has work.
    if B * _cdiv(Ho, rows) * _cdiv(cout, tn) < 2 and Ho > 1:
        rows = _cdiv(Ho, 2)

    def vmem_bytes(r, n):
        rows_w = (r - 1) * stride + (kh - 1) * dilation + 1
        band = 2 * rows_w * Wp * cin_p * in_itemsize      # double-buffered in
        wblk = 2 * kh * kw * cin_p * n * in_itemsize      # double-buffered in
        oblk = 2 * r * Wo * n * out_itemsize              # double-buffered out
        acc = r * Wo * n * 4                              # f32 accumulator val
        return band + wblk + oblk + acc

    while vmem_bytes(rows, tn) > budget and (rows > 1 or tn > 128):
        if rows > 1:
            rows = max(1, rows // 2)
        else:
            # tn must stay a multiple of 128 (or the full dim) once we pad.
            tn = max(128, (tn // 2) // 128 * 128)
    return rows, tn


def _conv_bn_relu_kernel(x_ref, w_ref, b_ref, o_ref, *, rows, wo, stride,
                         dilation, kh, kw, apply_relu):
    """One (band, Cout-tile) step: sum_{i,j} X_shift(i,j) @ W[i,j] + bias."""
    cin = w_ref.shape[2]
    tn = w_ref.shape[3]
    acc = jnp.zeros((rows * wo, tn), jnp.float32)
    for i in range(kh):                       # static unroll over kernel taps
        for j in range(kw):
            r0, c0 = i * dilation, j * dilation
            if stride == 1:
                tap = x_ref[0, r0:r0 + rows, c0:c0 + wo, :]
            else:
                tap = x_ref[0, pl.ds(r0, rows, stride),
                            pl.ds(c0, wo, stride), :]
            acc += jnp.dot(tap.reshape(rows * wo, cin), w_ref[i, j],
                           preferred_element_type=jnp.float32)
    y = acc + b_ref[...]                      # folded BN/conv bias, f32
    if apply_relu:
        y = jnp.maximum(y, 0.0)
    o_ref[...] = y.reshape(1, rows, wo, tn).astype(o_ref.dtype)


def basic_conv(x, weight, conv_bias=None, bn_gamma=None, bn_beta=None,
               bn_mean=None, bn_var=None, *, stride=1, padding=0, dilation=1,
               groups=1, relu=True, bn=True, eps=1e-5,
               compute_dtype=jnp.bfloat16, out_format="NCHW"):
    """BasicConv forward: Conv2d -> BatchNorm2d(eval) -> ReLU.

    x: (B, C_in, H, W) float32 (NCHW).  weight: (C_out, C_in, kh, kw) (OIHW).
    Returns (B, C_out, H_out, W_out) in x.dtype (or NHWC if out_format="NHWC"
    to skip the final layout pass).
    """
    if groups != 1:
        raise NotImplementedError("groups > 1 not supported")
    if bn and any(a is None for a in (bn_gamma, bn_beta, bn_mean, bn_var)):
        raise ValueError("bn=True requires bn_gamma/bn_beta/bn_mean/bn_var")

    B, cin, H, W = x.shape
    cout, cin_w, kh, kw = weight.shape
    assert cin_w == cin, "channel mismatch"
    s, p, d = stride, padding, dilation

    Ho = (H + 2 * p - d * (kh - 1) - 1) // s + 1
    Wo = (W + 2 * p - d * (kw - 1) - 1) // s + 1
    Wp = W + 2 * p

    in_itemsize = jnp.dtype(compute_dtype).itemsize
    out_itemsize = jnp.dtype(x.dtype).itemsize
    cin_align = 8 * (4 // in_itemsize)          # sublane packing: f32->8, bf16->16
    cin_p = _round_up(cin, cin_align)

    budget, vmem_limit = _vmem_caps()
    rows, tn = _pick_tiles(B, Ho, Wo, Wp, cin_p, cout, kh, kw, s, d,
                           in_itemsize, out_itemsize, budget)
    m_tiles = _cdiv(Ho, rows)
    ho_pad = m_tiles * rows
    n_tiles = _cdiv(cout, tn)
    cout_pad = n_tiles * tn
    rows_w = (rows - 1) * s + (kh - 1) * d + 1
    hp_need = (ho_pad - 1) * s + (kh - 1) * d + 1
    pad_bottom = max(0, hp_need - H - p)

    # ---- fold BN (eval running stats) + conv bias; fold scale into weights.
    if bn:
        scale = (bn_gamma / jnp.sqrt(bn_var + eps)).astype(jnp.float32)
        bias = (bn_beta - bn_mean * scale).astype(jnp.float32)
    else:
        scale = jnp.ones((cout,), jnp.float32)
        bias = jnp.zeros((cout,), jnp.float32)
    if conv_bias is not None:
        bias = bias + conv_bias.astype(jnp.float32) * scale

    w_hwio = jnp.transpose(weight.astype(jnp.float32), (2, 3, 1, 0))
    w_folded = (w_hwio * scale[None, None, None, :]).astype(compute_dtype)
    w_folded = jnp.pad(w_folded, ((0, 0), (0, 0),
                                  (0, cin_p - cin), (0, cout_pad - cout)))
    bias_p = jnp.pad(bias, (0, cout_pad - cout)).reshape(1, cout_pad)
    bias_p = bias_p.astype(jnp.float32)

    # ---- one layout pass: NCHW -> padded NHWC (bf16), then row bands w/ halo.
    x_nhwc = jnp.transpose(x, (0, 2, 3, 1)).astype(compute_dtype)
    x_p = jnp.pad(x_nhwc, ((0, 0), (p, pad_bottom), (p, p), (0, cin_p - cin)))
    bands = jnp.concatenate(
        [x_p[:, None, m * rows * s: m * rows * s + rows_w]
         for m in range(m_tiles)], axis=1)
    bands = bands.reshape(B * m_tiles, rows_w, Wp, cin_p)

    kernel = functools.partial(
        _conv_bn_relu_kernel, rows=rows, wo=Wo, stride=s, dilation=d,
        kh=kh, kw=kw, apply_relu=relu)

    out = pl.pallas_call(
        kernel,
        out_shape=jax.ShapeDtypeStruct((B * m_tiles, rows, Wo, cout_pad),
                                       x.dtype),
        grid_spec=pltpu.PrefetchScalarGridSpec(
            num_scalar_prefetch=0,
            grid=(B * m_tiles, n_tiles),
            in_specs=[
                pl.BlockSpec((1, rows_w, Wp, cin_p), lambda t, n: (t, 0, 0, 0)),
                pl.BlockSpec((kh, kw, cin_p, tn), lambda t, n: (0, 0, 0, n)),
                pl.BlockSpec((1, tn), lambda t, n: (0, n)),
            ],
            out_specs=pl.BlockSpec((1, rows, Wo, tn),
                                   lambda t, n: (t, 0, 0, n)),
        ),
        compiler_params=pltpu.CompilerParams(
            dimension_semantics=("parallel", "parallel"),
            vmem_limit_bytes=vmem_limit,
        ),
    )(bands, w_folded, bias_p)

    out = out.reshape(B, ho_pad, Wo, cout_pad)[:, :Ho, :, :cout]
    if out_format == "NHWC":
        return out
    return jnp.transpose(out, (0, 3, 1, 2))     # NCHW to match the module


def basic_conv_reference(x, weight, conv_bias, bn_gamma, bn_beta, bn_mean,
                         bn_var, *, stride=1, padding=0, dilation=1, groups=1,
                         relu=True, bn=True, eps=1e-5):
    """Pure-JAX f32 reference matching the PyTorch forward (eval-mode BN)."""
    y = jax.lax.conv_general_dilated(
        x, weight,
        window_strides=(stride, stride),
        padding=((padding, padding), (padding, padding)),
        rhs_dilation=(dilation, dilation),
        dimension_numbers=("NCHW", "OIHW", "NCHW"),
        feature_group_count=groups,
        precision=jax.lax.Precision.HIGHEST)
    if conv_bias is not None:
        y = y + conv_bias[None, :, None, None]
    if bn:
        inv = bn_gamma / jnp.sqrt(bn_var + eps)
        y = (y - bn_mean[None, :, None, None]) * inv[None, :, None, None] \
            + bn_beta[None, :, None, None]
    if relu:
        y = jnp.maximum(y, 0.0)
    return y


if __name__ == "__main__":
    key = jax.random.PRNGKey(0)
    kx, kw_, kg, kb, km, kv = jax.random.split(key, 6)

    B, C_IN, C_OUT, H, W = 2, 4, 8, 16, 16
    KH = KW = 3
    STRIDE, PAD, DIL = 1, 1, 1
    EPS = 1e-5

    x = jax.random.normal(kx, (B, C_IN, H, W), dtype=jnp.float32)
    weight = 0.1 * jax.random.normal(kw_, (C_OUT, C_IN, KH, KW),
                                     dtype=jnp.float32)
    gamma = 1.0 + 0.1 * jax.random.normal(kg, (C_OUT,), dtype=jnp.float32)
    beta = 0.1 * jax.random.normal(kb, (C_OUT,), dtype=jnp.float32)
    running_mean = 0.1 * jax.random.normal(km, (C_OUT,), dtype=jnp.float32)
    running_var = jax.random.uniform(kv, (C_OUT,), dtype=jnp.float32,
                                     minval=0.5, maxval=1.5)

    out = basic_conv(x, weight, None, gamma, beta, running_mean, running_var,
                     stride=STRIDE, padding=PAD, dilation=DIL, groups=1,
                     relu=True, bn=True, eps=EPS)
    out = jax.block_until_ready(out)
    assert out.shape == (B, C_OUT, H, W) and out.dtype == x.dtype

    # (1) Tight check: reference fed the SAME bf16-rounded, BN-folded operands
    #     (validates the kernel's GEMM decomposition / folding / epilogue).
    scale = gamma / jnp.sqrt(running_var + EPS)
    bias_f = beta - running_mean * scale
    w_hwio = jnp.transpose(weight, (2, 3, 1, 0)) * scale[None, None, None, :]
    w_q = jnp.transpose(w_hwio.astype(jnp.bfloat16).astype(jnp.float32),
                        (3, 2, 0, 1))
    x_q = x.astype(jnp.bfloat16).astype(jnp.float32)
    ref_tight = jax.lax.conv_general_dilated(
        x_q, w_q, (STRIDE, STRIDE), ((PAD, PAD), (PAD, PAD)),
        rhs_dilation=(DIL, DIL), dimension_numbers=("NCHW", "OIHW", "NCHW"),
        precision=jax.lax.Precision.HIGHEST)
    ref_tight = jnp.maximum(ref_tight + bias_f[None, :, None, None], 0.0)
    assert jnp.allclose(out, ref_tight, atol=1e-3, rtol=1e-3), (
        f"kernel-math mismatch, max abs err "
        f"{jnp.max(jnp.abs(out - ref_tight))}")

    # (2) Module-semantics check vs the pure-f32 reference; the only
    #     difference is bf16 operand rounding (f32 accumulation in both).
    ref = basic_conv_reference(x, weight, None, gamma, beta, running_mean,
                               running_var, stride=STRIDE, padding=PAD,
                               dilation=DIL, groups=1, relu=True, bn=True,
                               eps=EPS)
    assert jnp.allclose(out, ref, atol=2e-2, rtol=2e-2), (
        f"module mismatch, max abs err {jnp.max(jnp.abs(out - ref))}")

    print("KERNEL_OK")
</pallas_src>

<mosaic_0001>
module attributes {stable_mosaic.version = 11 : i64} {
  func.func @_conv_bn_relu_kernel(%arg0: i32, %arg1: i32, %arg2: memref<1x18x18x16xbf16, #tpu.memory_space<vmem>>, %arg3: memref<3x3x16x8xbf16, #tpu.memory_space<vmem>>, %arg4: memref<1x8xf32, #tpu.memory_space<vmem>>, %arg5: memref<1x16x16x8xf32, #tpu.memory_space<vmem>>) attributes {dimension_semantics = [#tpu.dimension_semantics<parallel>, #tpu.dimension_semantics<parallel>], iteration_bounds = array<i64: 2, 1>, scalar_prefetch = 0 : i64, scratch_operands = 0 : i64, tpu.core_type = #tpu.core_type<tc>, window_params = [{transform_indices = @transform_0, window_bounds = array<i64: 1, 18, 18, 16>}, {transform_indices = @transform_1, window_bounds = array<i64: 3, 3, 16, 8>}, {transform_indices = @transform_2, window_bounds = array<i64: 1, 8>}, {transform_indices = @transform_3, window_bounds = array<i64: 1, 16, 16, 8>}]} {
    %cst = arith.constant 0.000000e+00 : f32
    %0 = vector.broadcast %cst : f32 to vector<256x8xf32>
    %c0 = arith.constant 0 : index
    %c0_0 = arith.constant 0 : index
    %c0_1 = arith.constant 0 : index
    %c0_2 = arith.constant 0 : index
    %1 = vector.load %arg2[%c0, %c0_0, %c0_1, %c0_2] : memref<1x18x18x16xbf16, #tpu.memory_space<vmem>>, vector<1x16x16x16xbf16>
    %2 = vector.shape_cast %1 : vector<1x16x16x16xbf16> to vector<16x16x16xbf16>
    %3 = vector.shape_cast %2 : vector<16x16x16xbf16> to vector<256x16xbf16>
    %c0_3 = arith.constant 0 : index
    %c0_4 = arith.constant 0 : index
    %c0_5 = arith.constant 0 : index
    %c0_6 = arith.constant 0 : index
    %4 = vector.load %arg3[%c0_3, %c0_4, %c0_5, %c0_6] : memref<3x3x16x8xbf16, #tpu.memory_space<vmem>>, vector<1x1x16x8xbf16>
    %5 = vector.shape_cast %4 : vector<1x1x16x8xbf16> to vector<16x8xbf16>
    %cst_7 = arith.constant dense<0.000000e+00> : vector<256x8xf32>
    %6 = tpu.matmul %3, %5, %cst_7 {dimension_numbers = #tpu.dot_dimension_numbers<[1], [0], [0], [1], [0, 0, 1, 1], [], []>} : vector<256x16xbf16>, vector<16x8xbf16>, vector<256x8xf32> -> vector<256x8xf32>
    %7 = arith.addf %0, %6 : vector<256x8xf32>
    %c0_8 = arith.constant 0 : index
    %c0_9 = arith.constant 0 : index
    %c1 = arith.constant 1 : index
    %c0_10 = arith.constant 0 : index
    %8 = vector.load %arg2[%c0_8, %c0_9, %c1, %c0_10] : memref<1x18x18x16xbf16, #tpu.memory_space<vmem>>, vector<1x16x16x16xbf16>
    %9 = vector.shape_cast %8 : vector<1x16x16x16xbf16> to vector<16x16x16xbf16>
    %10 = vector.shape_cast %9 : vector<16x16x16xbf16> to vector<256x16xbf16>
    %c0_11 = arith.constant 0 : index
    %c1_12 = arith.constant 1 : index
    %c0_13 = arith.constant 0 : index
    %c0_14 = arith.constant 0 : index
    %11 = vector.load %arg3[%c0_11, %c1_12, %c0_13, %c0_14] : memref<3x3x16x8xbf16, #tpu.memory_space<vmem>>, vector<1x1x16x8xbf16>
    %12 = vector.shape_cast %11 : vector<1x1x16x8xbf16> to vector<16x8xbf16>
    %cst_15 = arith.constant dense<0.000000e+00> : vector<256x8xf32>
    %13 = tpu.matmul %10, %12, %cst_15 {dimension_numbers = #tpu.dot_dimension_numbers<[1], [0], [0], [1], [0, 0, 1, 1], [], []>} : vector<256x16xbf16>, vector<16x8xbf16>, vector<256x8xf32> -> vector<256x8xf32>
    %14 = arith.addf %7, %13 : vector<256x8xf32>
    %c0_16 = arith.constant 0 : index
    %c0_17 = arith.constant 0 : index
    %c2 = arith.constant 2 : index
    %c0_18 = arith.constant 0 : index
    %15 = vector.load %arg2[%c0_16, %c0_17, %c2, %c0_18] : memref<1x18x18x16xbf16, #tpu.memory_space<vmem>>, vector<1x16x16x16xbf16>
    %16 = vector.shape_cast %15 : vector<1x16x16x16xbf16> to vector<16x16x16xbf16>
    %17 = vector.shape_cast %16 : vector<16x16x16xbf16> to vector<256x16xbf16>
    %c0_19 = arith.constant 0 : index
    %c2_20 = arith.constant 2 : index
    %c0_21 = arith.constant 0 : index
    %c0_22 = arith.constant 0 : index
    %18 = vector.load %arg3[%c0_19, %c2_20, %c0_21, %c0_22] : memref<3x3x16x8xbf16, #tpu.memory_space<vmem>>, vector<1x1x16x8xbf16>
    %19 = vector.shape_cast %18 : vector<1x1x16x8xbf16> to vector<16x8xbf16>
    %cst_23 = arith.constant dense<0.000000e+00> : vector<256x8xf32>
    %20 = tpu.matmul %17, %19, %cst_23 {dimension_numbers = #tpu.dot_dimension_numbers<[1], [0], [0], [1], [0, 0, 1, 1], [], []>} : vector<256x16xbf16>, vector<16x8xbf16>, vector<256x8xf32> -> vector<256x8xf32>
    %21 = arith.addf %14, %20 : vector<256x8xf32>
    %c0_24 = arith.constant 0 : index
    %c1_25 = arith.constant 1 : index
    %c0_26 = arith.constant 0 : index
    %c0_27 = arith.constant 0 : index
    %22 = vector.load %arg2[%c0_24, %c1_25, %c0_26, %c0_27] : memref<1x18x18x16xbf16, #tpu.memory_space<vmem>>, vector<1x16x16x16xbf16>
    %23 = vector.shape_cast %22 : vector<1x16x16x16xbf16> to vector<16x16x16xbf16>
    %24 = vector.shape_cast %23 : vector<16x16x16xbf16> to vector<256x16xbf16>
    %c1_28 = arith.constant 1 : index
    %c0_29 = arith.constant 0 : index
    %c0_30 = arith.constant 0 : index
    %c0_31 = arith.constant 0 : index
    %25 = vector.load %arg3[%c1_28, %c0_29, %c0_30, %c0_31] : memref<3x3x16x8xbf16, #tpu.memory_space<vmem>>, vector<1x1x16x8xbf16>
    %26 = vector.shape_cast %25 : vector<1x1x16x8xbf16> to vector<16x8xbf16>
    %cst_32 = arith.constant dense<0.000000e+00> : vector<256x8xf32>
    %27 = tpu.matmul %24, %26, %cst_32 {dimension_numbers = #tpu.dot_dimension_numbers<[1], [0], [0], [1], [0, 0, 1, 1], [], []>} : vector<256x16xbf16>, vector<16x8xbf16>, vector<256x8xf32> -> vector<256x8xf32>
    %28 = arith.addf %21, %27 : vector<256x8xf32>
    %c0_33 = arith.constant 0 : index
    %c1_34 = arith.constant 1 : index
    %c1_35 = arith.constant 1 : index
    %c0_36 = arith.constant 0 : index
    %29 = vector.load %arg2[%c0_33, %c1_34, %c1_35, %c0_36] : memref<1x18x18x16xbf16, #tpu.memory_space<vmem>>, vector<1x16x16x16xbf16>
    %30 = vector.shape_cast %29 : vector<1x16x16x16xbf16> to vector<16x16x16xbf16>
    %31 = vector.shape_cast %30 : vector<16x16x16xbf16> to vector<256x16xbf16>
    %c1_37 = arith.constant 1 : index
    %c1_38 = arith.constant 1 : index
    %c0_39 = arith.constant 0 : index
    %c0_40 = arith.constant 0 : index
    %32 = vector.load %arg3[%c1_37, %c1_38, %c0_39, %c0_40] : memref<3x3x16x8xbf16, #tpu.memory_space<vmem>>, vector<1x1x16x8xbf16>
    %33 = vector.shape_cast %32 : vector<1x1x16x8xbf16> to vector<16x8xbf16>
    %cst_41 = arith.constant dense<0.000000e+00> : vector<256x8xf32>
    %34 = tpu.matmul %31, %33, %cst_41 {dimension_numbers = #tpu.dot_dimension_numbers<[1], [0], [0], [1], [0, 0, 1, 1], [], []>} : vector<256x16xbf16>, vector<16x8xbf16>, vector<256x8xf32> -> vector<256x8xf32>
    %35 = arith.addf %28, %34 : vector<256x8xf32>
    %c0_42 = arith.constant 0 : index
    %c1_43 = arith.constant 1 : index
    %c2_44 = arith.constant 2 : index
    %c0_45 = arith.constant 0 : index
    %36 = vector.load %arg2[%c0_42, %c1_43, %c2_44, %c0_45] : memref<1x18x18x16xbf16, #tpu.memory_space<vmem>>, vector<1x16x16x16xbf16>
    %37 = vector.shape_cast %36 : vector<1x16x16x16xbf16> to vector<16x16x16xbf16>
    %38 = vector.shape_cast %37 : vector<16x16x16xbf16> to vector<256x16xbf16>
    %c1_46 = arith.constant 1 : index
    %c2_47 = arith.constant 2 : index
    %c0_48 = arith.constant 0 : index
    %c0_49 = arith.constant 0 : index
    %39 = vector.load %arg3[%c1_46, %c2_47, %c0_48, %c0_49] : memref<3x3x16x8xbf16, #tpu.memory_space<vmem>>, vector<1x1x16x8xbf16>
    %40 = vector.shape_cast %39 : vector<1x1x16x8xbf16> to vector<16x8xbf16>
    %cst_50 = arith.constant dense<0.000000e+00> : vector<256x8xf32>
    %41 = tpu.matmul %38, %40, %cst_50 {dimension_numbers = #tpu.dot_dimension_numbers<[1], [0], [0], [1], [0, 0, 1, 1], [], []>} : vector<256x16xbf16>, vector<16x8xbf16>, vector<256x8xf32> -> vector<256x8xf32>
    %42 = arith.addf %35, %41 : vector<256x8xf32>
    %c0_51 = arith.constant 0 : index
    %c2_52 = arith.constant 2 : index
    %c0_53 = arith.constant 0 : index
    %c0_54 = arith.constant 0 : index
    %43 = vector.load %arg2[%c0_51, %c2_52, %c0_53, %c0_54] : memref<1x18x18x16xbf16, #tpu.memory_space<vmem>>, vector<1x16x16x16xbf16>
    %44 = vector.shape_cast %43 : vector<1x16x16x16xbf16> to vector<16x16x16xbf16>
    %45 = vector.shape_cast %44 : vector<16x16x16xbf16> to vector<256x16xbf16>
    %c2_55 = arith.constant 2 : index
    %c0_56 = arith.constant 0 : index
    %c0_57 = arith.constant 0 : index
    %c0_58 = arith.constant 0 : index
    %46 = vector.load %arg3[%c2_55, %c0_56, %c0_57, %c0_58] : memref<3x3x16x8xbf16, #tpu.memory_space<vmem>>, vector<1x1x16x8xbf16>
    %47 = vector.shape_cast %46 : vector<1x1x16x8xbf16> to vector<16x8xbf16>
    %cst_59 = arith.constant dense<0.000000e+00> : vector<256x8xf32>
    %48 = tpu.matmul %45, %47, %cst_59 {dimension_numbers = #tpu.dot_dimension_numbers<[1], [0], [0], [1], [0, 0, 1, 1], [], []>} : vector<256x16xbf16>, vector<16x8xbf16>, vector<256x8xf32> -> vector<256x8xf32>
    %49 = arith.addf %42, %48 : vector<256x8xf32>
    %c0_60 = arith.constant 0 : index
    %c2_61 = arith.constant 2 : index
    %c1_62 = arith.constant 1 : index
    %c0_63 = arith.constant 0 : index
    %50 = vector.load %arg2[%c0_60, %c2_61, %c1_62, %c0_63] : memref<1x18x18x16xbf16, #tpu.memory_space<vmem>>, vector<1x16x16x16xbf16>
    %51 = vector.shape_cast %50 : vector<1x16x16x16xbf16> to vector<16x16x16xbf16>
    %52 = vector.shape_cast %51 : vector<16x16x16xbf16> to vector<256x16xbf16>
    %c2_64 = arith.constant 2 : index
    %c1_65 = arith.constant 1 : index
    %c0_66 = arith.constant 0 : index
    %c0_67 = arith.constant 0 : index
    %53 = vector.load %arg3[%c2_64, %c1_65, %c0_66, %c0_67] : memref<3x3x16x8xbf16, #tpu.memory_space<vmem>>, vector<1x1x16x8xbf16>
    %54 = vector.shape_cast %53 : vector<1x1x16x8xbf16> to vector<16x8xbf16>
    %cst_68 = arith.constant dense<0.000000e+00> : vector<256x8xf32>
    %55 = tpu.matmul %52, %54, %cst_68 {dimension_numbers = #tpu.dot_dimension_numbers<[1], [0], [0], [1], [0, 0, 1, 1], [], []>} : vector<256x16xbf16>, vector<16x8xbf16>, vector<256x8xf32> -> vector<256x8xf32>
    %56 = arith.addf %49, %55 : vector<256x8xf32>
    %c0_69 = arith.constant 0 : index
    %c2_70 = arith.constant 2 : index
    %c2_71 = arith.constant 2 : index
    %c0_72 = arith.constant 0 : index
    %57 = vector.load %arg2[%c0_69, %c2_70, %c2_71, %c0_72] : memref<1x18x18x16xbf16, #tpu.memory_space<vmem>>, vector<1x16x16x16xbf16>
    %58 = vector.shape_cast %57 : vector<1x16x16x16xbf16> to vector<16x16x16xbf16>
    %59 = vector.shape_cast %58 : vector<16x16x16xbf16> to vector<256x16xbf16>
    %c2_73 = arith.constant 2 : index
    %c2_74 = arith.constant 2 : index
    %c0_75 = arith.constant 0 : index
    %c0_76 = arith.constant 0 : index
    %60 = vector.load %arg3[%c2_73, %c2_74, %c0_75, %c0_76] : memref<3x3x16x8xbf16, #tpu.memory_space<vmem>>, vector<1x1x16x8xbf16>
    %61 = vector.shape_cast %60 : vector<1x1x16x8xbf16> to vector<16x8xbf16>
    %cst_77 = arith.constant dense<0.000000e+00> : vector<256x8xf32>
    %62 = tpu.matmul %59, %61, %cst_77 {dimension_numbers = #tpu.dot_dimension_numbers<[1], [0], [0], [1], [0, 0, 1, 1], [], []>} : vector<256x16xbf16>, vector<16x8xbf16>, vector<256x8xf32> -> vector<256x8xf32>
    %63 = arith.addf %56, %62 : vector<256x8xf32>
    %c0_78 = arith.constant 0 : index
    %c0_79 = arith.constant 0 : index
    %64 = vector.load %arg4[%c0_78, %c0_79] : memref<1x8xf32, #tpu.memory_space<vmem>>, vector<1x8xf32>
    %65 = vector.broadcast %64 : vector<1x8xf32> to vector<256x8xf32>
    %66 = arith.addf %63, %65 : vector<256x8xf32>
    %cst_80 = arith.constant 0.000000e+00 : f32
    %67 = vector.broadcast %cst_80 : f32 to vector<256x8xf32>
    %68 = arith.maximumf %66, %67 : vector<256x8xf32>
    %69 = vector.shape_cast %68 : vector<256x8xf32> to vector<1x16x16x8xf32>
    %c0_81 = arith.constant 0 : index
    %c0_82 = arith.constant 0 : index
    %c0_83 = arith.constant 0 : index
    %c0_84 = arith.constant 0 : index
    %70 = vector.load %arg5[%c0_81, %c0_82, %c0_83, %c0_84] : memref<1x16x16x8xf32, #tpu.memory_space<vmem>>, vector<1x16x16x8xf32>
    tpu.vector_store %arg5[%c0_81, %c0_82, %c0_83, %c0_84], %69 {strides = array<i32>} : memref<1x16x16x8xf32, #tpu.memory_space<vmem>>, vector<1x16x16x8xf32>,
    return
  }
  func.func @transform_0(%arg0: i32, %arg1: i32) -> (i32, i32, i32, i32) {
    %c0_i32 = arith.constant 0 : i32
    %c0_i32_0 = arith.constant 0 : i32
    %c0_i32_1 = arith.constant 0 : i32
    %c0_i32_2 = arith.constant 0 : i32
    return %arg0, %c0_i32, %c0_i32_0, %c0_i32_1 : i32, i32, i32, i32
  }
  func.func @transform_1(%arg0: i32, %arg1: i32) -> (i32, i32, i32, i32) {
    %c0_i32 = arith.constant 0 : i32
    %c0_i32_0 = arith.constant 0 : i32
    %c0_i32_1 = arith.constant 0 : i32
    %c0_i32_2 = arith.constant 0 : i32
    return %c0_i32, %c0_i32_0, %c0_i32_1, %arg1 : i32, i32, i32, i32
  }
  func.func @transform_2(%arg0: i32, %arg1: i32) -> (i32, i32) {
    %c0_i32 = arith.constant 0 : i32
    %c0_i32_0 = arith.constant 0 : i32
    return %c0_i32, %arg1 : i32, i32
  }
  func.func @transform_3(%arg0: i32, %arg1: i32) -> (i32, i32, i32, i32) {
    %c0_i32 = arith.constant 0 : i32
    %c0_i32_0 = arith.constant 0 : i32
    %c0_i32_1 = arith.constant 0 : i32
    return %arg0, %c0_i32, %c0_i32_0, %arg1 : i32, i32, i32, i32
  }
}

</mosaic_0001>

<llo_original>
// kernel: tpu_custom_call.1
$region0: #{tpu_custom_call.1}
  #allocation0 [shape = 'u32[]', space=smem, size = 0x4, offset = 0x4, fixed_abs, tag = 'smem constant byte address 0x4 - core index']
  #allocation1 [shape = 'u32[144,128]{1,0:T(1,128)}', space=vmem, size = 0x12000, scoped, tag = 'internal scratch']
  %s0 = inlined_call_operand.vmem [shape: bf16[2,18,18,16], index: 0, kind: input, shape index: {}]
  %s1 = inlined_call_operand.vmem [shape: bf16[3,3,16,8], index: 1, kind: input, shape index: {}]
  %s2 = inlined_call_operand.vmem [shape: f32[1,8], index: 2, kind: input, shape index: {}]
  %s3 = inlined_call_operand.vmem [shape: f32[2,16,16,8], index: 3, kind: output, shape index: {}]
  %s4 = sld [smem:[#allocation0]]
  $region45: #{tpu_custom_call.1} parent=0
    _
  %s6 = ssub.s32 1, %s4
  %s7 = scalar_select 0, %s6, %s4
  loop: start=0, step=1, limit=4
  $region2: #{tpu_custom_call.1} parent=0 // loop_pre_header
    _
  $region3: #{tpu_custom_call.1} parent=0 // loop_header
    %s9 = sphi 0, %s13
    %p10 = scmp.ge.s32.totalorder %s9, 4
    %s16 = sphi 0, %s28
    %s17 = sphi 0, %s24
    %s18 = sphi 0, %s16
    %s19 = sphi 0, %s17
    %s20 = sphi 0, %s18
    %s21 = sphi 0, %s19
    %s31 = sphi 0, %s33
    %s34 = sphi 0, %s31
    %s35 = sphi 0, %s34
    %s51 = sphi 0, %s35
    %s57 = sphi 0, %s59
    %s60 = sphi 0, %s57
    %s61 = sphi 0, %s60
    %s77 = sphi 0, %s61
    %s83 = sphi 0, %s85
    %s86 = sphi 0, %s83
    %s87 = sphi 0, %s86
    %s103 = sphi 0, %s87
    %s111 = sphi 0, %s113
    %s114 = sphi 0, %s111
    %s115 = sphi 0, %s114
    %s131 = sphi 0, %s115
  $region4: #{tpu_custom_call.1} parent=0 // loop_header_branch
    %12 = sbr.rel (%p10) target = $region8
  $region5: #{tpu_custom_call.1} parent=0 // loop_body
    %s14 = ssub.s32 %s9, 1
    %s15 = ssub.s32 %s9, 2
    %s22 = sadd.s32 1, %s17
    %p23 = scmp.ge.s32.totalorder %s22, 1
    %s24 = scalar_select %p23, 0, %s22
    %s25 = sadd.s32 1, %s16
    %s26 = scalar_select %p23, %s25, %s16
    %p27 = scmp.ge.s32.totalorder %s26, 2
    %s28 = scalar_select %p27, 0, %s26
    %s29 = ssub.s32 %s16, %s28
    %p30 = scmp.eq.s32.totalorder %s29, 0
    %s32 = sadd.s32 %s31, 1
    %s33 = scalar_select %p30, %s31, %s32
    %p36 = pneg %p30
    %p37 = scmp.eq.s32.totalorder %s9, 1
    %p38 = por %p36, %p37
    %p39 = scmp.ne.s32.totalorder %s31, %s34
    %p40 = scmp.eq.s32.totalorder %s9, 0
    %p41 = por %p39, %p40
    %p42 = scmp.ne.s32.totalorder %s31, %s34
    %p43 = scmp.eq.s32.totalorder %s14, 1
    %p44 = por %p42, %p43
    %p45 = scmp.ne.s32.totalorder %s34, %s35
    %p46 = scmp.eq.s32.totalorder %s14, 0
    %p47 = por %p45, %p46
    %p48 = scmp.ne.s32.totalorder %s34, %s35
    %p49 = scmp.eq.s32.totalorder %s15, 1
    %p50 = por %p48, %p49
    %p52 = scmp.ne.s32.totalorder %s35, %s51
    %p53 = scmp.eq.s32.totalorder %s15, 0
    %p54 = por %p52, %p53
    %s55 = ssub.s32 %s17, %s24
    %p56 = scmp.eq.s32.totalorder %s55, 0
    %s58 = sadd.s32 %s57, 1
    %s59 = scalar_select %p56, %s57, %s58
    %p62 = pneg %p56
    %p63 = scmp.eq.s32.totalorder %s9, 1
    %p64 = por %p62, %p63
    %p65 = scmp.ne.s32.totalorder %s57, %s60
    %p66 = scmp.eq.s32.totalorder %s9, 0
    %p67 = por %p65, %p66
    %p68 = scmp.ne.s32.totalorder %s57, %s60
    %p69 = scmp.eq.s32.totalorder %s14, 1
    %p70 = por %p68, %p69
    %p71 = scmp.ne.s32.totalorder %s60, %s61
    %p72 = scmp.eq.s32.totalorder %s14, 0
    %p73 = por %p71, %p72
    %p74 = scmp.ne.s32.totalorder %s60, %s61
    %p75 = scmp.eq.s32.totalorder %s15, 1
    %p76 = por %p74, %p75
    %p78 = scmp.ne.s32.totalorder %s61, %s77
    %p79 = scmp.eq.s32.totalorder %s15, 0
    %p80 = por %p78, %p79
    %s81 = ssub.s32 %s17, %s24
    %p82 = scmp.eq.s32.totalorder %s81, 0
    %s84 = sadd.s32 %s83, 1
    %s85 = scalar_select %p82, %s83, %s84
    %p88 = pneg %p82
    %p89 = scmp.eq.s32.totalorder %s9, 1
    %p90 = por %p88, %p89
    %p91 = scmp.ne.s32.totalorder %s83, %s86
    %p92 = scmp.eq.s32.totalorder %s9, 0
    %p93 = por %p91, %p92
    %p94 = scmp.ne.s32.totalorder %s83, %s86
    %p95 = scmp.eq.s32.totalorder %s14, 1
    %p96 = por %p94, %p95
    %p97 = scmp.ne.s32.totalorder %s86, %s87
    %p98 = scmp.eq.s32.totalorder %s14, 0
    %p99 = por %p97, %p98
    %p100 = scmp.ne.s32.totalorder %s86, %s87
    %p101 = scmp.eq.s32.totalorder %s15, 1
    %p102 = por %p100, %p101
    %p104 = scmp.ne.s32.totalorder %s87, %s103
    %p105 = scmp.eq.s32.totalorder %s15, 0
    %p106 = por %p104, %p105
    %s107 = ssub.s32 %s16, %s28
    %s108 = ssub.s32 %s17, %s24
    %s109 = sor.u32 %s107, %s108
    %p110 = scmp.eq.s32.totalorder %s109, 0
    %s112 = sadd.s32 %s111, 1
    %s113 = scalar_select %p110, %s111, %s112
    %p116 = pneg %p110
    %p117 = scmp.eq.s32.totalorder %s9, 1
    %p118 = por %p116, %p117
    %p119 = scmp.ne.s32.totalorder %s111, %s114
    %p120 = scmp.eq.s32.totalorder %s9, 0
    %p121 = por %p119, %p120
    %p122 = scmp.ne.s32.totalorder %s111, %s114
    %p123 = scmp.eq.s32.totalorder %s14, 1
    %p124 = por %p122, %p123
    %p125 = scmp.ne.s32.totalorder %s114, %s115
    %p126 = scmp.eq.s32.totalorder %s14, 0
    %p127 = por %p125, %p126
    %p128 = scmp.ne.s32.totalorder %s114, %s115
    %p129 = scmp.eq.s32.totalorder %s15, 1
    %p130 = por %p128, %p129
    %p132 = scmp.ne.s32.totalorder %s115, %s131
    %p133 = scmp.eq.s32.totalorder %s15, 0
    %p134 = por %p132, %p133
    %p135 = scmp.le.s32.totalorder 1, %s9
    %p136 = scmp.lt.s32.totalorder %s9, 3
    %p137 = pnand %p135, %p136
    %p138 = pneg %p137
    // Predicated region
    $region9: #{tpu_custom_call.1} parent=5 // pred_check
      _
    $region10: #{tpu_custom_call.1} parent=5 // pred_check_branch
      %140 = sbr.rel (%p137) target = $region12
    $region11: #{tpu_custom_call.1} parent=5 // pred_region
      %s141 = ssub.s32 %s9, 1
      // Predicated region
      $region13: #{tpu_custom_call.1} parent=11 // pred_check
        %p142 = pneg %p73
      $region14: #{tpu_custom_call.1} parent=11 // pred_check_branch
        %144 = sbr.rel (%p142) target = $region16
      $region15: #{tpu_custom_call.1} parent=11 // pred_region
        %p145 = scmp.lt.s32.totalorder %s19, 0
        %s146 = scalar_select %p145, %s19, 0
        %s147 = smul.addr %s146, 4
        %s148 = scalar_lea.vmem %s1, %s147
      $region16: #{tpu_custom_call.1} parent=11 // pred_fallthru
        _
      // Predicated region
      $region17: #{tpu_custom_call.1} parent=11 // pred_check
        %p149 = pneg %p99
      $region18: #{tpu_custom_call.1} parent=11 // pred_check_branch
        %151 = sbr.rel (%p149) target = $region20
      $region19: #{tpu_custom_call.1} parent=11 // pred_region
        %p152 = scmp.lt.s32.totalorder %s19, 0
        %s153 = scalar_select %p152, %s19, 0
        %s154 = scalar_lea.vmem %s2, %s153
      $region20: #{tpu_custom_call.1} parent=11 // pred_fallthru
        _
    $region12: #{tpu_custom_call.1} parent=5 // pred_fallthru
      _
    %p155 = scmp.lt.s32.totalorder %s9, 2
    // Predicated region
    $region21: #{tpu_custom_call.1} parent=5 // pred_check
      %p156 = pneg %p155
    $region22: #{tpu_custom_call.1} parent=5 // pred_check_branch
      %158 = sbr.rel (%p156) target = $region24
    $region23: #{tpu_custom_call.1} parent=5 // pred_region
      // Predicated region
      $region25: #{tpu_custom_call.1} parent=23 // pred_check
        %p159 = pneg %p41
      $region26: #{tpu_custom_call.1} parent=23 // pred_check_branch
        %161 = sbr.rel (%p159) target = $region28
      $region27: #{tpu_custom_call.1} parent=23 // pred_region
        %p162 = scmp.lt.s32.totalorder %s16, 1
        %s163 = scalar_select %p162, %s16, 1
        %s164 = smul.addr %s163, 54
        %s165 = smul.addr %s164, 4
        %s166 = scalar_lea.vmem %s0, %s165
      $region28: #{tpu_custom_call.1} parent=23 // pred_fallthru
        _
    $region24: #{tpu_custom_call.1} parent=5 // pred_fallthru
      _
    %p167 = scmp.le.s32.totalorder 1, %s9
    %p168 = scmp.lt.s32.totalorder %s9, 3
    %p169 = pnand %p167, %p168
    %p170 = pneg %p169
    // Predicated region
    $region29: #{tpu_custom_call.1} parent=5 // pred_check
      _
    $region30: #{tpu_custom_call.1} parent=5 // pred_check_branch
      %172 = sbr.rel (%p169) target = $region32
    $region31: #{tpu_custom_call.1} parent=5 // pred_region
      %s173 = ssub.s32 %s9, 1
      %p174 = scmp.lt.s32.totalorder %s18, 1
      %s175 = scalar_select %p174, %s18, 1
      %s176 = smul.addr %s175, 54
      %s177 = smul.addr %s176, 4
      %s178 = scalar_lea.vmem %s0, %s177
      %p179 = pneg %p47
      %p180 = pneg %p44
      %p181 = scmp.lt.s32.totalorder %s19, 0
      %s182 = scalar_select %p181, %s19, 0
      %s183 = smul.addr %s182, 4
      %s184 = scalar_lea.vmem %s1, %s183
      %p185 = pneg %p73
      %p186 = pneg %p70
      %p187 = scmp.lt.s32.totalorder %s19, 0
      %s188 = scalar_select %p187, %s19, 0
      %s189 = scalar_lea.vmem %s2, %s188
      %p190 = pneg %p99
      %p191 = pneg %p96
      %p192 = pneg %p127
      %p193 = pneg %p124
      %p194 = scmp.lt.s32.totalorder %s18, 1
      %s195 = scalar_select %p194, %s18, 1
      %p196 = scmp.lt.s32.totalorder %s19, 0
      %s197 = scalar_select %p196, %s19, 0
      %s198 = smul.addr %s195, 32
      %s199 = sadd.s32 %s197, %s198
      %s200 = smul.addr %s199, 8
      %s201 = scalar_lea.vmem %s3, %s200
      %p202 = scmp.lt.s32.totalorder %s18, 1
      %s203 = scalar_select %p202, %s18, 1
      %s204 = smul.addr %s203, 54
      %s205 = smul.addr %s204, 4
      %s206 = scalar_lea.vmem %s0, %s205
      %p207 = scmp.lt.s32.totalorder %s19, 0
      %s208 = scalar_select %p207, %s19, 0
      %s209 = smul.addr %s208, 4
      %s210 = scalar_lea.vmem %s1, %s209
      %p211 = scmp.lt.s32.totalorder %s19, 0
      %s212 = scalar_select %p211, %s19, 0
      %s213 = scalar_lea.vmem %s2, %s212
      %p214 = scmp.lt.s32.totalorder %s18, 1
      %s215 = scalar_select %p214, %s18, 1
      %p216 = scmp.lt.s32.totalorder %s19, 0
      %s217 = scalar_select %p216, %s19, 0
      %s218 = smul.addr %s215, 32
      %s219 = sadd.s32 %s217, %s218
      %s220 = smul.addr %s219, 8
      %s221 = scalar_lea.vmem %s3, %s220
      %v223 = vld [vmem:[%s206] sm:$0xf]
      %v224 = vld [vmem:[%s206 + $0x4] sm:$0xf]
      %v225 = vld [vmem:[%s206 + $0xc] sm:$0xf]
      %v226 = vld [vmem:[%s206 + $0x10] sm:$0xf]
      %v227 = vld [vmem:[%s206 + $0x18] sm:$0xf]
      %v228 = vld [vmem:[%s206 + $0x1c] sm:$0xf]
      %v229 = vld [vmem:[%s206 + $0x24] sm:$0xf]
      %v230 = vld [vmem:[%s206 + $0x28] sm:$0xf]
      %v231 = vld [vmem:[%s206 + $0x30] sm:$0xf]
      %v232 = vld [vmem:[%s206 + $0x34] sm:$0xf]
      %v233 = vld [vmem:[%s206 + $0x3c] sm:$0xf]
      %v234 = vld [vmem:[%s206 + $0x40] sm:$0xf]
      %v235 = vld [vmem:[%s206 + $0x48] sm:$0xf]
      %v236 = vld [vmem:[%s206 + $0x4c] sm:$0xf]
      %v237 = vld [vmem:[%s206 + $0x54] sm:$0xf]
      %v238 = vld [vmem:[%s206 + $0x58] sm:$0xf]
      %v239 = vld [vmem:[%s206 + $0x60] sm:$0xf]
      %v240 = vld [vmem:[%s206 + $0x64] sm:$0xf]
      %v241 = vld [vmem:[%s206 + $0x6c] sm:$0xf]
      %v242 = vld [vmem:[%s206 + $0x70] sm:$0xf]
      %v243 = vld [vmem:[%s206 + $0x78] sm:$0xf]
      %v244 = vld [vmem:[%s206 + $0x7c] sm:$0xf]
      %v245 = vld [vmem:[%s206 + $0x84] sm:$0xf]
      %v246 = vld [vmem:[%s206 + $0x88] sm:$0xf]
      %v247 = vld [vmem:[%s206 + $0x90] sm:$0xf]
      %v248 = vld [vmem:[%s206 + $0x94] sm:$0xf]
      %v249 = vld [vmem:[%s206 + $0x9c] sm:$0xf]
      %v250 = vld [vmem:[%s206 + $0xa0] sm:$0xf]
      %v251 = vld [vmem:[%s206 + $0xa8] sm:$0xf]
      %v252 = vld [vmem:[%s206 + $0xac] sm:$0xf]
      %v253 = vld [vmem:[%s206 + $0xb4] sm:$0xf]
      %v254 = vld [vmem:[%s206 + $0xb8] sm:$0xf]
      %v255 = vld [vmem:[%s210] sm:$0xf]
      %v256 = vld [vmem:[%s210 + $0x4] sm:$0xf]
      %v257 = vld [vmem:[%s206 + $0x8] sm:$0x1]
      %v258 = vld [vmem:[%s206 + $0x14] sm:$0x1]
      %v259 = vld [vmem:[%s206 + $0x20] sm:$0x1]
      %v260 = vld [vmem:[%s206 + $0x2c] sm:$0x1]
      %v261 = vld [vmem:[%s206 + $0x38] sm:$0x1]
      %v262 = vld [vmem:[%s206 + $0x44] sm:$0x1]
      %v263 = vld [vmem:[%s206 + $0x50] sm:$0x1]
      %v264 = vld [vmem:[%s206 + $0x5c] sm:$0x1]
      %v265 = vld [vmem:[%s206 + $0x68] sm:$0x1]
      %v266 = vld [vmem:[%s206 + $0x74] sm:$0x1]
      %v267 = vld [vmem:[%s206 + $0x80] sm:$0x1]
      %v268 = vld [vmem:[%s206 + $0x8c] sm:$0x1]
      %v269 = vld [vmem:[%s206 + $0x98] sm:$0x1]
      %v270 = vld [vmem:[%s206 + $0xa4] sm:$0x1]
      %v271 = vld [vmem:[%s206 + $0xb0] sm:$0x1]
      %v272 = vld [vmem:[%s206 + $0xbc] sm:$0x1]
      %vm273 = vsmask.f32 3328
      %vm274 = vsmask.f32 7440
      %vm275 = vmor %vm273, %vm274
      %v277 = vshrl.u32 %v223, 16
      %v279 = vrot.slane %v277, 4
      %v280 = vshll.u32 %v223, 16
      %v282 = vrot.slane %v280, 5
      %v283 = vor.u32 %v279, %v282
      %v284 = vrot.slane %v283, 4
      %v286 = vshll.u32 %v224, 16
      %v288 = vrot.slane %v286, 5
      %v289 = vsel %vm275, %v284, %v288
      %v290 = vshrl.u32 %v224, 16
      %v292 = vrot.slane %v290, 4
      %v293 = vor.u32 %v292, %v288
      %v294 = vrot.slane %v293, 4
      %v296 = vshll.u32 %v257, 16
      %v298 = vrot.slane %v296, 5
      %v299 = vsel %vm275, %v294, %v298
      %v301 = vshrl.u32 %v225, 16
      %v303 = vrot.slane %v301, 4
      %v304 = vshll.u32 %v225, 16
      %v306 = vrot.slane %v304, 5
      %v307 = vor.u32 %v303, %v306
      %v308 = vrot.slane %v307, 4
      %v310 = vshll.u32 %v226, 16
      %v312 = vrot.slane %v310, 5
      %v313 = vsel %vm275, %v308, %v312
      %v314 = vshrl.u32 %v226, 16
      %v316 = vrot.slane %v314, 4
      %v317 = vor.u32 %v316, %v312
      %v318 = vrot.slane %v317, 4
      %v320 = vshll.u32 %v258, 16
      %v322 = vrot.slane %v320, 5
      %v323 = vsel %vm275, %v318, %v322
      %v325 = vshrl.u32 %v227, 16
      %v327 = vrot.slane %v325, 4
      %v328 = vshll.u32 %v227, 16
      %v330 = vrot.slane %v328, 5
      %v331 = vor.u32 %v327, %v330
      %v332 = vrot.slane %v331, 4
      %v334 = vshll.u32 %v228, 16
      %v336 = vrot.slane %v334, 5
      %v337 = vsel %vm275, %v332, %v336
      %v338 = vshrl.u32 %v228, 16
      %v340 = vrot.slane %v338, 4
      %v341 = vor.u32 %v340, %v336
      %v342 = vrot.slane %v341, 4
      %v344 = vshll.u32 %v259, 16
      %v346 = vrot.slane %v344, 5
      %v347 = vsel %vm275, %v342, %v346
      %v349 = vshrl.u32 %v229, 16
      %v351 = vrot.slane %v349, 4
      %v352 = vshll.u32 %v229, 16
      %v354 = vrot.slane %v352, 5
      %v355 = vor.u32 %v351, %v354
      %v356 = vrot.slane %v355, 4
      %v358 = vshll.u32 %v230, 16
      %v360 = vrot.slane %v358, 5
      %v361 = vsel %vm275, %v356, %v360
      %v362 = vshrl.u32 %v230, 16
      %v364 = vrot.slane %v362, 4
      %v365 = vor.u32 %v364, %v360
      %v366 = vrot.slane %v365, 4
      %v368 = vshll.u32 %v260, 16
      %v370 = vrot.slane %v368, 5
      %v371 = vsel %vm275, %v366, %v370
      %v373 = vshrl.u32 %v231, 16
      %v375 = vrot.slane %v373, 4
      %v376 = vshll.u32 %v231, 16
      %v378 = vrot.slane %v376, 5
      %v379 = vor.u32 %v375, %v378
      %v380 = vrot.slane %v379, 4
      %v382 = vshll.u32 %v232, 16
      %v384 = vrot.slane %v382, 5
      %v385 = vsel %vm275, %v380, %v384
      %v386 = vshrl.u32 %v232, 16
      %v388 = vrot.slane %v386, 4
      %v389 = vor.u32 %v388, %v384
      %v390 = vrot.slane %v389, 4
      %v392 = vshll.u32 %v261, 16
      %v394 = vrot.slane %v392, 5
      %v395 = vsel %vm275, %v390, %v394
      %v397 = vshrl.u32 %v233, 16
      %v399 = vrot.slane %v397, 4
      %v400 = vshll.u32 %v233, 16
      %v402 = vrot.slane %v400, 5
      %v403 = vor.u32 %v399, %v402
      %v404 = vrot.slane %v403, 4
      %v406 = vshll.u32 %v234, 16
      %v408 = vrot.slane %v406, 5
      %v409 = vsel %vm275, %v404, %v408
      %v410 = vshrl.u32 %v234, 16
      %v412 = vrot.slane %v410, 4
      %v413 = vor.u32 %v412, %v408
      %v414 = vrot.slane %v413, 4
      %v416 = vshll.u32 %v262, 16
      %v418 = vrot.slane %v416, 5
      %v419 = vsel %vm275, %v414, %v418
      %v421 = vshrl.u32 %v235, 16
      %v423 = vrot.slane %v421, 4
      %v424 = vshll.u32 %v235, 16
      %v426 = vrot.slane %v424, 5
      %v427 = vor.u32 %v423, %v426
      %v428 = vrot.slane %v427, 4
      %v430 = vshll.u32 %v236, 16
      %v432 = vrot.slane %v430, 5
      %v433 = vsel %vm275, %v428, %v432
      %v434 = vshrl.u32 %v236, 16
      %v436 = vrot.slane %v434, 4
      %v437 = vor.u32 %v436, %v432
      %v438 = vrot.slane %v437, 4
      %v440 = vshll.u32 %v263, 16
      %v442 = vrot.slane %v440, 5
      %v443 = vsel %vm275, %v438, %v442
      %v445 = vshrl.u32 %v237, 16
      %v447 = vrot.slane %v445, 4
      %v448 = vshll.u32 %v237, 16
      %v450 = vrot.slane %v448, 5
      %v451 = vor.u32 %v447, %v450
      %v452 = vrot.slane %v451, 4
      %v454 = vshll.u32 %v238, 16
      %v456 = vrot.slane %v454, 5
      %v457 = vsel %vm275, %v452, %v456
      %v458 = vshrl.u32 %v238, 16
      %v460 = vrot.slane %v458, 4
      %v461 = vor.u32 %v460, %v456
      %v462 = vrot.slane %v461, 4
      %v464 = vshll.u32 %v264, 16
      %v466 = vrot.slane %v464, 5
      %v467 = vsel %vm275, %v462, %v466
      %v469 = vshrl.u32 %v239, 16
      %v471 = vrot.slane %v469, 4
      %v472 = vshll.u32 %v239, 16
      %v474 = vrot.slane %v472, 5
      %v475 = vor.u32 %v471, %v474
      %v476 = vrot.slane %v475, 4
      %v478 = vshll.u32 %v240, 16
      %v480 = vrot.slane %v478, 5
      %v481 = vsel %vm275, %v476, %v480
      %v482 = vshrl.u32 %v240, 16
      %v484 = vrot.slane %v482, 4
      %v485 = vor.u32 %v484, %v480
      %v486 = vrot.slane %v485, 4
      %v488 = vshll.u32 %v265, 16
      %v490 = vrot.slane %v488, 5
      %v491 = vsel %vm275, %v486, %v490
      %v493 = vshrl.u32 %v241, 16
      %v495 = vrot.slane %v493, 4
      %v496 = vshll.u32 %v241, 16
      %v498 = vrot.slane %v496, 5
      %v499 = vor.u32 %v495, %v498
      %v500 = vrot.slane %v499, 4
      %v502 = vshll.u32 %v242, 16
      %v504 = vrot.slane %v502, 5
      %v505 = vsel %vm275, %v500, %v504
      %v506 = vshrl.u32 %v242, 16
      %v508 = vrot.slane %v506, 4
      %v509 = vor.u32 %v508, %v504
      %v510 = vrot.slane %v509, 4
      %v512 = vshll.u32 %v266, 16
      %v514 = vrot.slane %v512, 5
      %v515 = vsel %vm275, %v510, %v514
      %v517 = vshrl.u32 %v243, 16
      %v519 = vrot.slane %v517, 4
      %v520 = vshll.u32 %v243, 16
      %v522 = vrot.slane %v520, 5
      %v523 = vor.u32 %v519, %v522
      %v524 = vrot.slane %v523, 4
      %v526 = vshll.u32 %v244, 16
      %v528 = vrot.slane %v526, 5
      %v529 = vsel %vm275, %v524, %v528
      %v530 = vshrl.u32 %v244, 16
      %v532 = vrot.slane %v530, 4
      %v533 = vor.u32 %v532, %v528
      %v534 = vrot.slane %v533, 4
      %v536 = vshll.u32 %v267, 16
      %v538 = vrot.slane %v536, 5
      %v539 = vsel %vm275, %v534, %v538
      %v541 = vshrl.u32 %v245, 16
      %v543 = vrot.slane %v541, 4
      %v544 = vshll.u32 %v245, 16
      %v546 = vrot.slane %v544, 5
      %v547 = vor.u32 %v543, %v546
      %v548 = vrot.slane %v547, 4
      %v550 = vshll.u32 %v246, 16
      %v552 = vrot.slane %v550, 5
      %v553 = vsel %vm275, %v548, %v552
      %v554 = vshrl.u32 %v246, 16
      %v556 = vrot.slane %v554, 4
      %v557 = vor.u32 %v556, %v552
      %v558 = vrot.slane %v557, 4
      %v560 = vshll.u32 %v268, 16
      %v562 = vrot.slane %v560, 5
      %v563 = vsel %vm275, %v558, %v562
      %v565 = vshrl.u32 %v247, 16
      %v567 = vrot.slane %v565, 4
      %v568 = vshll.u32 %v247, 16
      %v570 = vrot.slane %v568, 5
      %v571 = vor.u32 %v567, %v570
      %v572 = vrot.slane %v571, 4
      %v574 = vshll.u32 %v248, 16
      %v576 = vrot.slane %v574, 5
      %v577 = vsel %vm275, %v572, %v576
      %v578 = vshrl.u32 %v248, 16
      %v580 = vrot.slane %v578, 4
      %v581 = vor.u32 %v580, %v576
      %v582 = vrot.slane %v581, 4
      %v584 = vshll.u32 %v269, 16
      %v586 = vrot.slane %v584, 5
      %v587 = vsel %vm275, %v582, %v586
      %v589 = vshrl.u32 %v249, 16
      %v591 = vrot.slane %v589, 4
      %v592 = vshll.u32 %v249, 16
      %v594 = vrot.slane %v592, 5
      %v595 = vor.u32 %v591, %v594
      %v596 = vrot.slane %v595, 4
      %v598 = vshll.u32 %v250, 16
      %v600 = vrot.slane %v598, 5
      %v601 = vsel %vm275, %v596, %v600
      %v602 = vshrl.u32 %v250, 16
      %v604 = vrot.slane %v602, 4
      %v605 = vor.u32 %v604, %v600
      %v606 = vrot.slane %v605, 4
      %v608 = vshll.u32 %v270, 16
      %v610 = vrot.slane %v608, 5
      %v611 = vsel %vm275, %v606, %v610
      %v613 = vshrl.u32 %v251, 16
      %v615 = vrot.slane %v613, 4
      %v616 = vshll.u32 %v251, 16
      %v618 = vrot.slane %v616, 5
      %v619 = vor.u32 %v615, %v618
      %v620 = vrot.slane %v619, 4
      %v622 = vshll.u32 %v252, 16
      %v624 = vrot.slane %v622, 5
      %v625 = vsel %vm275, %v620, %v624
      %v626 = vshrl.u32 %v252, 16
      %v628 = vrot.slane %v626, 4
      %v629 = vor.u32 %v628, %v624
      %v630 = vrot.slane %v629, 4
      %v632 = vshll.u32 %v271, 16
      %v634 = vrot.slane %v632, 5
      %v635 = vsel %vm275, %v630, %v634
      %v637 = vshrl.u32 %v253, 16
      %v639 = vrot.slane %v637, 4
      %v640 = vshll.u32 %v253, 16
      %v642 = vrot.slane %v640, 5
      %v643 = vor.u32 %v639, %v642
      %v644 = vrot.slane %v643, 4
      %v646 = vshll.u32 %v254, 16
      %v648 = vrot.slane %v646, 5
      %v649 = vsel %vm275, %v644, %v648
      %v650 = vshrl.u32 %v254, 16
      %v652 = vrot.slane %v650, 4
      %v653 = vor.u32 %v652, %v648
      %v654 = vrot.slane %v653, 4
      %v656 = vshll.u32 %v272, 16
      %v658 = vrot.slane %v656, 5
      %v659 = vsel %vm275, %v654, %v658
      %s660 = scalar_lea.vmem %s210, 8
      %v661 = vld [vmem:[%s660] sm:$0xf]
      %v662 = vld [vmem:[%s660 + $0x4] sm:$0xf]
      %v663 = vunpack.c.l.b16 %v289
      %v664 = vunpack.c.l.b16 %v299
      %v665 = vunpack.c.l.b16 %v313
      %v666 = vunpack.c.l.b16 %v323
      %v667 = vunpack.c.l.b16 %v337
      %v668 = vunpack.c.l.b16 %v347
      %v669 = vunpack.c.l.b16 %v361
      %v670 = vunpack.c.l.b16 %v371
      %v671 = vunpack.c.l.b16 %v385
      %v672 = vunpack.c.l.b16 %v395
      %v673 = vunpack.c.l.b16 %v409
      %v674 = vunpack.c.l.b16 %v419
      %v675 = vunpack.c.l.b16 %v433
      %v676 = vunpack.c.l.b16 %v443
      %v677 = vunpack.c.l.b16 %v457
      %v678 = vunpack.c.l.b16 %v467
      %v679 = vunpack.c.l.b16 %v481
      %v680 = vunpack.c.l.b16 %v491
      %v681 = vunpack.c.l.b16 %v505
      %v682 = vunpack.c.l.b16 %v515
      %v683 = vunpack.c.l.b16 %v529
      %v684 = vunpack.c.l.b16 %v539
      %v685 = vunpack.c.l.b16 %v553
      %v686 = vunpack.c.l.b16 %v563
      %v687 = vunpack.c.l.b16 %v577
      %v688 = vunpack.c.l.b16 %v587
      %v689 = vunpack.c.l.b16 %v601
      %v690 = vunpack.c.l.b16 %v611
      %v691 = vunpack.c.l.b16 %v625
      %v692 = vunpack.c.l.b16 %v635
      %v693 = vunpack.c.l.b16 %v649
      %v694 = vunpack.c.l.b16 %v659
      %v695 = vpack.c.b16 %v664, %v663
      %v696 = vpack.c.b16 %v666, %v665
      %v697 = vpack.c.b16 %v668, %v667
      %v698 = vpack.c.b16 %v670, %v669
      %v699 = vpack.c.b16 %v672, %v671
      %v700 = vpack.c.b16 %v674, %v673
      %v701 = vpack.c.b16 %v676, %v675
      %v702 = vpack.c.b16 %v678, %v677
      %v703 = vpack.c.b16 %v680, %v679
      %v704 = vpack.c.b16 %v682, %v681
      %v705 = vpack.c.b16 %v684, %v683
      %v706 = vpack.c.b16 %v686, %v685
      %v707 = vpack.c.b16 %v688, %v687
      %v708 = vpack.c.b16 %v690, %v689
      %v709 = vpack.c.b16 %v692, %v691
      %v710 = vpack.c.b16 %v694, %v693
      %v713 = vunpack.c.l.b16 %v661
      %v714 = vunpack.c.l.b16 %v662
      %v715 = vpack.c.b16 %v714, %v713
      %vm717 = vcmask 130048
      %v719 = vsel %vm717, %v695, 0
      %v722 = vsel %vm717, %v696, 0
      %v725 = vsel %vm717, %v697, 0
      %v728 = vsel %vm717, %v698, 0
      %v731 = vsel %vm717, %v699, 0
      %v734 = vsel %vm717, %v700, 0
      %v737 = vsel %vm717, %v701, 0
      %v740 = vsel %vm717, %v702, 0
      %v743 = vsel %vm717, %v703, 0
      %v746 = vsel %vm717, %v704, 0
      %v749 = vsel %vm717, %v705, 0
      %v752 = vsel %vm717, %v706, 0
      %v755 = vsel %vm717, %v707, 0
      %v758 = vsel %vm717, %v708, 0
      %v761 = vsel %vm717, %v709, 0
      %v764 = vsel %vm717, %v710, 0
      %766 = vmatprep.subr.bf16.mxu0 0
      %767 = vmatpush1.bf16.msra.mxu0 0
      %768 = vmatprep.subr.bf16.mxu0 0
      %769 = vmatpush1.bf16.msra.mxu0 0
      %770 = vmatprep.subr.bf16.mxu0 0
      %771 = vmatpush1.bf16.msra.mxu0 0
      %772 = vmatprep.subr.bf16.mxu0 0
      %773 = vmatpush1.bf16.msra.mxu0 0
      %774 = vmatprep.subr.bf16.mxu0 0
      %775 = vmatpush1.bf16.msra.mxu0 0
      %776 = vmatprep.subr.bf16.mxu0 0
      %777 = vmatpush1.bf16.msra.mxu0 0
      %778 = vmatprep.subr.bf16.mxu0 0
      %779 = vmatpush1.bf16.msra.mxu0 0
      %780 = vmatprep.subr.bf16.mxu0 0
      %781 = vmatpush1.bf16.msra.mxu0 %v715
      %782 = vmatprep.subr.bf16.mxu0 0
      %783 = vmatpush2.bf16.msra.mxu0 0
      %784 = vmatprep.subr.bf16.mxu0 0
      %785 = vmatpush2.bf16.msra.mxu0 0
      %786 = vmatprep.subr.bf16.mxu0 0
      %787 = vmatpush2.bf16.msra.mxu0 0
      %788 = vmatprep.subr.bf16.mxu0 0
      %789 = vmatpush2.bf16.msra.mxu0 0
      %790 = vmatprep.subr.bf16.mxu0 0
      %791 = vmatpush2.bf16.msra.mxu0 0
      %792 = vmatprep.subr.bf16.mxu0 0
      %793 = vmatpush2.bf16.msra.mxu0 0
      %794 = vmatprep.subr.bf16.mxu0 0
      %795 = vmatpush2.bf16.msra.mxu0 0
      %796 = vmatprep.subr.bf16.mxu0 0
      %797 = vmatpush2.bf16.msra.mxu0 0
      %798 = vmatprep.mubr.bf16.mxu0 0
      %799 = vmatmul.mubr.bf16.gmra.mxu0 %v719
      %v800 = vpop.f32.mrf.mxu0
      %v801 = vadd.f32 0.0, %v800
      %v802 = vpop.f32.mrf.mxu0
      %v803 = vpop.f32.mrf.mxu0
      %v804 = vadd.f32 0.0, %v803
      %v805 = vpop.f32.mrf.mxu0
      %806 = vmatprep.mubr.bf16.mxu0 0
      %807 = vmatmul.mubr.bf16.gmra.mxu0 %v722
      %v808 = vpop.f32.mrf.mxu0
      %v809 = vadd.f32 0.0, %v808
      %v810 = vpop.f32.mrf.mxu0
      %v811 = vpop.f32.mrf.mxu0
      %v812 = vadd.f32 0.0, %v811
      %v813 = vpop.f32.mrf.mxu0
      %814 = vmatprep.mubr.bf16.mxu0 0
      %815 = vmatmul.mubr.bf16.gmra.mxu0 %v725
      %v816 = vpop.f32.mrf.mxu0
      %v817 = vadd.f32 0.0, %v816
      %v818 = vpop.f32.mrf.mxu0
      %v819 = vpop.f32.mrf.mxu0
      %v820 = vadd.f32 0.0, %v819
      %v821 = vpop.f32.mrf.mxu0
      %822 = vmatprep.mubr.bf16.mxu0 0
      %823 = vmatmul.mubr.bf16.gmra.mxu0 %v728
      %v824 = vpop.f32.mrf.mxu0
      %v825 = vadd.f32 0.0, %v824
      %v826 = vpop.f32.mrf.mxu0
      %v827 = vpop.f32.mrf.mxu0
      %v828 = vadd.f32 0.0, %v827
      %v829 = vpop.f32.mrf.mxu0
      %830 = vmatprep.mubr.bf16.mxu0 0
      %831 = vmatmul.mubr.bf16.gmra.mxu0 %v731
      %v832 = vpop.f32.mrf.mxu0
      %v833 = vadd.f32 0.0, %v832
      %v834 = vpop.f32.mrf.mxu0
      %v835 = vpop.f32.mrf.mxu0
      %v836 = vadd.f32 0.0, %v835
      %v837 = vpop.f32.mrf.mxu0
      %838 = vmatprep.mubr.bf16.mxu0 0
      %839 = vmatmul.mubr.bf16.gmra.mxu0 %v734
      %v840 = vpop.f32.mrf.mxu0
      %v841 = vadd.f32 0.0, %v840
      %v842 = vpop.f32.mrf.mxu0
      %v843 = vpop.f32.mrf.mxu0
      %v844 = vadd.f32 0.0, %v843
      %v845 = vpop.f32.mrf.mxu0
      %846 = vmatprep.mubr.bf16.mxu0 0
      %847 = vmatmul.mubr.bf16.gmra.mxu0 %v737
      %v848 = vpop.f32.mrf.mxu0
      %v849 = vadd.f32 0.0, %v848
      %v850 = vpop.f32.mrf.mxu0
      %v851 = vpop.f32.mrf.mxu0
      %v852 = vadd.f32 0.0, %v851
      %v853 = vpop.f32.mrf.mxu0
      %854 = vmatprep.mubr.bf16.mxu0 0
      %855 = vmatmul.mubr.bf16.gmra.mxu0 %v740
      %v856 = vpop.f32.mrf.mxu0
      %v857 = vadd.f32 0.0, %v856
      %v858 = vpop.f32.mrf.mxu0
      %v859 = vpop.f32.mrf.mxu0
      %v860 = vadd.f32 0.0, %v859
      %v861 = vpop.f32.mrf.mxu0
      %862 = vmatprep.mubr.bf16.mxu0 0
      %863 = vmatmul.mubr.bf16.gmra.mxu0 %v743
      %v864 = vpop.f32.mrf.mxu0
      %v865 = vadd.f32 0.0, %v864
      %v866 = vpop.f32.mrf.mxu0
      %v867 = vpop.f32.mrf.mxu0
      %v868 = vadd.f32 0.0, %v867
      %v869 = vpop.f32.mrf.mxu0
      %870 = vmatprep.mubr.bf16.mxu0 0
      %871 = vmatmul.mubr.bf16.gmra.mxu0 %v746
      %v872 = vpop.f32.mrf.mxu0
      %v873 = vadd.f32 0.0, %v872
      %v874 = vpop.f32.mrf.mxu0
      %v875 = vpop.f32.mrf.mxu0
      %v876 = vadd.f32 0.0, %v875
      %v877 = vpop.f32.mrf.mxu0
      %878 = vmatprep.mubr.bf16.mxu0 0
      %879 = vmatmul.mubr.bf16.gmra.mxu0 %v749
      %v880 = vpop.f32.mrf.mxu0
      %v881 = vadd.f32 0.0, %v880
      %v882 = vpop.f32.mrf.mxu0
      %v883 = vpop.f32.mrf.mxu0
      %v884 = vadd.f32 0.0, %v883
      %v885 = vpop.f32.mrf.mxu0
      %886 = vmatprep.mubr.bf16.mxu0 0
      %887 = vmatmul.mubr.bf16.gmra.mxu0 %v752
      %v888 = vpop.f32.mrf.mxu0
      %v889 = vadd.f32 0.0, %v888
      %v890 = vpop.f32.mrf.mxu0
      %v891 = vpop.f32.mrf.mxu0
      %v892 = vadd.f32 0.0, %v891
      %v893 = vpop.f32.mrf.mxu0
      %894 = vmatprep.mubr.bf16.mxu0 0
      %895 = vmatmul.mubr.bf16.gmra.mxu0 %v755
      %v896 = vpop.f32.mrf.mxu0
      %v897 = vadd.f32 0.0, %v896
      %v898 = vpop.f32.mrf.mxu0
      %v899 = vpop.f32.mrf.mxu0
      %v900 = vadd.f32 0.0, %v899
      %v901 = vpop.f32.mrf.mxu0
      %902 = vmatprep.mubr.bf16.mxu0 0
      %903 = vmatmul.mubr.bf16.gmra.mxu0 %v758
      %v904 = vpop.f32.mrf.mxu0
      %v905 = vadd.f32 0.0, %v904
      %v906 = vpop.f32.mrf.mxu0
      %v907 = vpop.f32.mrf.mxu0
      %v908 = vadd.f32 0.0, %v907
      %v909 = vpop.f32.mrf.mxu0
      %910 = vmatprep.mubr.bf16.mxu0 0
      %911 = vmatmul.mubr.bf16.gmra.mxu0 %v761
      %v912 = vpop.f32.mrf.mxu0
      %v913 = vadd.f32 0.0, %v912
      %v914 = vpop.f32.mrf.mxu0
      %v915 = vpop.f32.mrf.mxu0
      %v916 = vadd.f32 0.0, %v915
      %v917 = vpop.f32.mrf.mxu0
      %918 = vmatprep.mubr.bf16.mxu0 0
      %919 = vmatmul.mubr.bf16.gmra.mxu0 %v764
      %v920 = vpop.f32.mrf.mxu0
      %v921 = vadd.f32 0.0, %v920
      %v922 = vpop.f32.mrf.mxu0
      %v923 = vpop.f32.mrf.mxu0
      %v924 = vadd.f32 0.0, %v923
      %v925 = vpop.f32.mrf.mxu0
      %926 = vdwg.mxu0
      %v959 = vunpack.c.l.b16 %v223
      %v960 = vunpack.c.l.b16 %v224
      %v961 = vunpack.c.l.b16 %v225
      %v962 = vunpack.c.l.b16 %v226
      %v963 = vunpack.c.l.b16 %v227
      %v964 = vunpack.c.l.b16 %v228
      %v965 = vunpack.c.l.b16 %v229
      %v966 = vunpack.c.l.b16 %v230
      %v967 = vunpack.c.l.b16 %v231
      %v968 = vunpack.c.l.b16 %v232
      %v969 = vunpack.c.l.b16 %v233
      %v970 = vunpack.c.l.b16 %v234
      %v971 = vunpack.c.l.b16 %v235
      %v972 = vunpack.c.l.b16 %v236
      %v973 = vunpack.c.l.b16 %v237
      %v974 = vunpack.c.l.b16 %v238
      %v975 = vunpack.c.l.b16 %v239
      %v976 = vunpack.c.l.b16 %v240
      %v977 = vunpack.c.l.b16 %v241
      %v978 = vunpack.c.l.b16 %v242
      %v979 = vunpack.c.l.b16 %v243
      %v980 = vunpack.c.l.b16 %v244
      %v981 = vunpack.c.l.b16 %v245
      %v982 = vunpack.c.l.b16 %v246
      %v983 = vunpack.c.l.b16 %v247
      %v984 = vunpack.c.l.b16 %v248
      %v985 = vunpack.c.l.b16 %v249
      %v986 = vunpack.c.l.b16 %v250
      %v987 = vunpack.c.l.b16 %v251
      %v988 = vunpack.c.l.b16 %v252
      %v989 = vunpack.c.l.b16 %v253
      %v990 = vunpack.c.l.b16 %v254
      %v991 = vpack.c.b16 %v960, %v959
      %v992 = vpack.c.b16 %v962, %v961
      %v993 = vpack.c.b16 %v964, %v963
      %v994 = vpack.c.b16 %v966, %v965
      %v995 = vpack.c.b16 %v968, %v967
      %v996 = vpack.c.b16 %v970, %v969
      %v997 = vpack.c.b16 %v972, %v971
      %v998 = vpack.c.b16 %v974, %v973
      %v999 = vpack.c.b16 %v976, %v975
      %v1000 = vpack.c.b16 %v978, %v977
      %v1001 = vpack.c.b16 %v980, %v979
      %v1002 = vpack.c.b16 %v982, %v981
      %v1003 = vpack.c.b16 %v984, %v983
      %v1004 = vpack.c.b16 %v986, %v985
      %v1005 = vpack.c.b16 %v988, %v987
      %v1006 = vpack.c.b16 %v990, %v989
      %v1009 = vunpack.c.l.b16 %v255
      %v1010 = vunpack.c.l.b16 %v256
      %v1011 = vpack.c.b16 %v1010, %v1009
      %v1014 = vsel %vm717, %v991, 0
      %v1017 = vsel %vm717, %v992, 0
      %v1020 = vsel %vm717, %v993, 0
      %v1023 = vsel %vm717, %v994, 0
      %v1026 = vsel %vm717, %v995, 0
      %v1029 = vsel %vm717, %v996, 0
      %v1032 = vsel %vm717, %v997, 0
      %v1035 = vsel %vm717, %v998, 0
      %v1038 = vsel %vm717, %v999, 0
      %v1041 = vsel %vm717, %v1000, 0
      %v1044 = vsel %vm717, %v1001, 0
      %v1047 = vsel %vm717, %v1002, 0
      %v1050 = vsel %vm717, %v1003, 0
      %v1053 = vsel %vm717, %v1004, 0
      %v1056 = vsel %vm717, %v1005, 0
      %v1059 = vsel %vm717, %v1006, 0
      %1061 = vmatprep.subr.bf16.mxu0 0
      %1062 = vmatpush1.bf16.msra.mxu0 0
      %1063 = vmatprep.subr.bf16.mxu0 0
      %1064 = vmatpush1.bf16.msra.mxu0 0
      %1065 = vmatprep.subr.bf16.mxu0 0
      %1066 = vmatpush1.bf16.msra.mxu0 0
      %1067 = vmatprep.subr.bf16.mxu0 0
      %1068 = vmatpush1.bf16.msra.mxu0 0
      %1069 = vmatprep.subr.bf16.mxu0 0
      %1070 = vmatpush1.bf16.msra.mxu0 0
      %1071 = vmatprep.subr.bf16.mxu0 0
      %1072 = vmatpush1.bf16.msra.mxu0 0
      %1073 = vmatprep.subr.bf16.mxu0 0
      %1074 = vmatpush1.bf16.msra.mxu0 0
      %1075 = vmatprep.subr.bf16.mxu0 0
      %1076 = vmatpush1.bf16.msra.mxu0 %v1011
      %1077 = vmatprep.subr.bf16.mxu0 0
      %1078 = vmatpush2.bf16.msra.mxu0 0
      %1079 = vmatprep.subr.bf16.mxu0 0
      %1080 = vmatpush2.bf16.msra.mxu0 0
      %1081 = vmatprep.subr.bf16.mxu0 0
      %1082 = vmatpush2.bf16.msra.mxu0 0
      %1083 = vmatprep.subr.bf16.mxu0 0
      %1084 = vmatpush2.bf16.msra.mxu0 0
      %1085 = vmatprep.subr.bf16.mxu0 0
      %1086 = vmatpush2.bf16.msra.mxu0 0
      %1087 = vmatprep.subr.bf16.mxu0 0
      %1088 = vmatpush2.bf16.msra.mxu0 0
      %1089 = vmatprep.subr.bf16.mxu0 0
      %1090 = vmatpush2.bf16.msra.mxu0 0
      %1091 = vmatprep.subr.bf16.mxu0 0
      %1092 = vmatpush2.bf16.msra.mxu0 0
      %1093 = vmatprep.mubr.bf16.mxu0 0
      %1094 = vmatmul.mubr.bf16.gmra.mxu0 %v1014
      %v1095 = vpop.f32.mrf.mxu0
      %v1096 = vadd.f32 %v801, %v1095
      %v1097 = vpop.f32.mrf.mxu0
      %v1098 = vpop.f32.mrf.mxu0
      %v1099 = vadd.f32 %v804, %v1098
      %v1100 = vpop.f32.mrf.mxu0
      %1101 = vmatprep.mubr.bf16.mxu0 0
      %1102 = vmatmul.mubr.bf16.gmra.mxu0 %v1017
      %v1103 = vpop.f32.mrf.mxu0
      %v1104 = vadd.f32 %v809, %v1103
      %v1105 = vpop.f32.mrf.mxu0
      %v1106 = vpop.f32.mrf.mxu0
      %v1107 = vadd.f32 %v812, %v1106
      %v1108 = vpop.f32.mrf.mxu0
      %1109 = vmatprep.mubr.bf16.mxu0 0
      %1110 = vmatmul.mubr.bf16.gmra.mxu0 %v1020
      %v1111 = vpop.f32.mrf.mxu0
      %v1112 = vadd.f32 %v817, %v1111
      %v1113 = vpop.f32.mrf.mxu0
      %v1114 = vpop.f32.mrf.mxu0
      %v1115 = vadd.f32 %v820, %v1114
      %v1116 = vpop.f32.mrf.mxu0
      %1117 = vmatprep.mubr.bf16.mxu0 0
      %1118 = vmatmul.mubr.bf16.gmra.mxu0 %v1023
      %v1119 = vpop.f32.mrf.mxu0
      %v1120 = vadd.f32 %v825, %v1119
      %v1121 = vpop.f32.mrf.mxu0
      %v1122 = vpop.f32.mrf.mxu0
      %v1123 = vadd.f32 %v828, %v1122
      %v1124 = vpop.f32.mrf.mxu0
      %1125 = vmatprep.mubr.bf16.mxu0 0
      %1126 = vmatmul.mubr.bf16.gmra.mxu0 %v1026
      %v1127 = vpop.f32.mrf.mxu0
      %v1128 = vadd.f32 %v833, %v1127
      %v1129 = vpop.f32.mrf.mxu0
      %v1130 = vpop.f32.mrf.mxu0
      %v1131 = vadd.f32 %v836, %v1130
      %v1132 = vpop.f32.mrf.mxu0
      %1133 = vmatprep.mubr.bf16.mxu0 0
      %1134 = vmatmul.mubr.bf16.gmra.mxu0 %v1029
      %v1135 = vpop.f32.mrf.mxu0
      %v1136 = vadd.f32 %v841, %v1135
      %v1137 = vpop.f32.mrf.mxu0
      %v1138 = vpop.f32.mrf.mxu0
      %v1139 = vadd.f32 %v844, %v1138
      %v1140 = vpop.f32.mrf.mxu0
      %1141 = vmatprep.mubr.bf16.mxu0 0
      %1142 = vmatmul.mubr.bf16.gmra.mxu0 %v1032
      %v1143 = vpop.f32.mrf.mxu0
      %v1144 = vadd.f32 %v849, %v1143
      %v1145 = vpop.f32.mrf.mxu0
      %v1146 = vpop.f32.mrf.mxu0
      %v1147 = vadd.f32 %v852, %v1146
      %v1148 = vpop.f32.mrf.mxu0
      %1149 = vmatprep.mubr.bf16.mxu0 0
      %1150 = vmatmul.mubr.bf16.gmra.mxu0 %v1035
      %v1151 = vpop.f32.mrf.mxu0
      %v1152 = vadd.f32 %v857, %v1151
      %v1153 = vpop.f32.mrf.mxu0
      %v1154 = vpop.f32.mrf.mxu0
      %v1155 = vadd.f32 %v860, %v1154
      %v1156 = vpop.f32.mrf.mxu0
      %1157 = vmatprep.mubr.bf16.mxu0 0
      %1158 = vmatmul.mubr.bf16.gmra.mxu0 %v1038
      %v1159 = vpop.f32.mrf.mxu0
      %v1160 = vadd.f32 %v865, %v1159
      %v1161 = vpop.f32.mrf.mxu0
      %v1162 = vpop.f32.mrf.mxu0
      %v1163 = vadd.f32 %v868, %v1162
      %v1164 = vpop.f32.mrf.mxu0
      %1165 = vmatprep.mubr.bf16.mxu0 0
      %1166 = vmatmul.mubr.bf16.gmra.mxu0 %v1041
      %v1167 = vpop.f32.mrf.mxu0
      %v1168 = vadd.f32 %v873, %v1167
      %v1169 = vpop.f32.mrf.mxu0
      %v1170 = vpop.f32.mrf.mxu0
      %v1171 = vadd.f32 %v876, %v1170
      %v1172 = vpop.f32.mrf.mxu0
      %1173 = vmatprep.mubr.bf16.mxu0 0
      %1174 = vmatmul.mubr.bf16.gmra.mxu0 %v1044
      %v1175 = vpop.f32.mrf.mxu0
      %v1176 = vadd.f32 %v881, %v1175
      %v1177 = vpop.f32.mrf.mxu0
      %v1178 = vpop.f32.mrf.mxu0
      %v1179 = vadd.f32 %v884, %v1178
      %v1180 = vpop.f32.mrf.mxu0
      %1181 = vmatprep.mubr.bf16.mxu0 0
      %1182 = vmatmul.mubr.bf16.gmra.mxu0 %v1047
      %v1183 = vpop.f32.mrf.mxu0
      %v1184 = vadd.f32 %v889, %v1183
      %v1185 = vpop.f32.mrf.mxu0
      %v1186 = vpop.f32.mrf.mxu0
      %v1187 = vadd.f32 %v892, %v1186
      %v1188 = vpop.f32.mrf.mxu0
      %1189 = vmatprep.mubr.bf16.mxu0 0
      %1190 = vmatmul.mubr.bf16.gmra.mxu0 %v1050
      %v1191 = vpop.f32.mrf.mxu0
      %v1192 = vadd.f32 %v897, %v1191
      %v1193 = vpop.f32.mrf.mxu0
      %v1194 = vpop.f32.mrf.mxu0
      %v1195 = vadd.f32 %v900, %v1194
      %v1196 = vpop.f32.mrf.mxu0
      %1197 = vmatprep.mubr.bf16.mxu0 0
      %1198 = vmatmul.mubr.bf16.gmra.mxu0 %v1053
      %v1199 = vpop.f32.mrf.mxu0
      %v1200 = vadd.f32 %v905, %v1199
      %v1201 = vpop.f32.mrf.mxu0
      %v1202 = vpop.f32.mrf.mxu0
      %v1203 = vadd.f32 %v908, %v1202
      %v1204 = vpop.f32.mrf.mxu0
      %1205 = vmatprep.mubr.bf16.mxu0 0
      %1206 = vmatmul.mubr.bf16.gmra.mxu0 %v1056
      %v1207 = vpop.f32.mrf.mxu0
      %v1208 = vadd.f32 %v913, %v1207
      %v1209 = vpop.f32.mrf.mxu0
      %v1210 = vpop.f32.mrf.mxu0
      %v1211 = vadd.f32 %v916, %v1210
      %v1212 = vpop.f32.mrf.mxu0
      %1213 = vmatprep.mubr.bf16.mxu0 0
      %1214 = vmatmul.mubr.bf16.gmra.mxu0 %v1059
      %v1215 = vpop.f32.mrf.mxu0
      %v1216 = vadd.f32 %v921, %v1215
      %v1217 = vpop.f32.mrf.mxu0
      %v1218 = vpop.f32.mrf.mxu0
      %v1219 = vadd.f32 %v924, %v1218
      %v1220 = vpop.f32.mrf.mxu0
      %1221 = vdwg.mxu0
      %v1222 = vld [vmem:[%s206] sm:$0xe]
      %v1223 = vld [vmem:[%s206 + $0xc] sm:$0xe]
      %v1224 = vld [vmem:[%s206 + $0x18] sm:$0xe]
      %v1225 = vld [vmem:[%s206 + $0x24] sm:$0xe]
      %v1226 = vld [vmem:[%s206 + $0x30] sm:$0xe]
      %v1227 = vld [vmem:[%s206 + $0x3c] sm:$0xe]
      %v1228 = vld [vmem:[%s206 + $0x48] sm:$0xe]
      %v1229 = vld [vmem:[%s206 + $0x54] sm:$0xe]
      %v1230 = vld [vmem:[%s206 + $0x60] sm:$0xe]
      %v1231 = vld [vmem:[%s206 + $0x6c] sm:$0xe]
      %v1232 = vld [vmem:[%s206 + $0x78] sm:$0xe]
      %v1233 = vld [vmem:[%s206 + $0x84] sm:$0xe]
      %v1234 = vld [vmem:[%s206 + $0x90] sm:$0xe]
      %v1235 = vld [vmem:[%s206 + $0x9c] sm:$0xe]
      %v1236 = vld [vmem:[%s206 + $0xa8] sm:$0xe]
      %v1237 = vld [vmem:[%s206 + $0xb4] sm:$0xe]
      %vm1270 = vcmask 1042432
      %vm1271 = vcmask 1046532
      %vm1272 = vmor %vm1270, %vm1271
      %v1273 = vrot.slane %v1222, 5
      %v1274 = vrot.slane %v1273, 4
      %v1275 = vrot.slane %v224, 5
      %v1276 = vsel %vm1272, %v1274, %v1275
      %v1277 = vrot.slane %v1275, 4
      %v1278 = vrot.slane %v257, 5
      %v1279 = vsel %vm1272, %v1277, %v1278
      %v1280 = vrot.slane %v1223, 5
      %v1281 = vrot.slane %v1280, 4
      %v1282 = vrot.slane %v226, 5
      %v1283 = vsel %vm1272, %v1281, %v1282
      %v1284 = vrot.slane %v1282, 4
      %v1285 = vrot.slane %v258, 5
      %v1286 = vsel %vm1272, %v1284, %v1285
      %v1287 = vrot.slane %v1224, 5
      %v1288 = vrot.slane %v1287, 4
      %v1289 = vrot.slane %v228, 5
      %v1290 = vsel %vm1272, %v1288, %v1289
      %v1291 = vrot.slane %v1289, 4
      %v1292 = vrot.slane %v259, 5
      %v1293 = vsel %vm1272, %v1291, %v1292
      %v1294 = vrot.slane %v1225, 5
      %v1295 = vrot.slane %v1294, 4
      %v1296 = vrot.slane %v230, 5
      %v1297 = vsel %vm1272, %v1295, %v1296
      %v1298 = vrot.slane %v1296, 4
      %v1299 = vrot.slane %v260, 5
      %v1300 = vsel %vm1272, %v1298, %v1299
      %v1301 = vrot.slane %v1226, 5
      %v1302 = vrot.slane %v1301, 4
      %v1303 = vrot.slane %v232, 5
      %v1304 = vsel %vm1272, %v1302, %v1303
      %v1305 = vrot.slane %v1303, 4
      %v1306 = vrot.slane %v261, 5
      %v1307 = vsel %vm1272, %v1305, %v1306
      %v1308 = vrot.slane %v1227, 5
      %v1309 = vrot.slane %v1308, 4
      %v1310 = vrot.slane %v234, 5
      %v1311 = vsel %vm1272, %v1309, %v1310
      %v1312 = vrot.slane %v1310, 4
      %v1313 = vrot.slane %v262, 5
      %v1314 = vsel %vm1272, %v1312, %v1313
      %v1315 = vrot.slane %v1228, 5
      %v1316 = vrot.slane %v1315, 4
      %v1317 = vrot.slane %v236, 5
      %v1318 = vsel %vm1272, %v1316, %v1317
      %v1319 = vrot.slane %v1317, 4
      %v1320 = vrot.slane %v263, 5
      %v1321 = vsel %vm1272, %v1319, %v1320
      %v1322 = vrot.slane %v1229, 5
      %v1323 = vrot.slane %v1322, 4
      %v1324 = vrot.slane %v238, 5
      %v1325 = vsel %vm1272, %v1323, %v1324
      %v1326 = vrot.slane %v1324, 4
      %v1327 = vrot.slane %v264, 5
      %v1328 = vsel %vm1272, %v1326, %v1327
      %v1329 = vrot.slane %v1230, 5
      %v1330 = vrot.slane %v1329, 4
      %v1331 = vrot.slane %v240, 5
      %v1332 = vsel %vm1272, %v1330, %v1331
      %v1333 = vrot.slane %v1331, 4
      %v1334 = vrot.slane %v265, 5
      %v1335 = vsel %vm1272, %v1333, %v1334
      %v1336 = vrot.slane %v1231, 5
      %v1337 = vrot.slane %v1336, 4
      %v1338 = vrot.slane %v242, 5
      %v1339 = vsel %vm1272, %v1337, %v1338
      %v1340 = vrot.slane %v1338, 4
      %v1341 = vrot.slane %v266, 5
      %v1342 = vsel %vm1272, %v1340, %v1341
      %v1343 = vrot.slane %v1232, 5
      %v1344 = vrot.slane %v1343, 4
      %v1345 = vrot.slane %v244, 5
      %v1346 = vsel %vm1272, %v1344, %v1345
      %v1347 = vrot.slane %v1345, 4
      %v1348 = vrot.slane %v267, 5
      %v1349 = vsel %vm1272, %v1347, %v1348
      %v1350 = vrot.slane %v1233, 5
      %v1351 = vrot.slane %v1350, 4
      %v1352 = vrot.slane %v246, 5
      %v1353 = vsel %vm1272, %v1351, %v1352
      %v1354 = vrot.slane %v1352, 4
      %v1355 = vrot.slane %v268, 5
      %v1356 = vsel %vm1272, %v1354, %v1355
      %v1357 = vrot.slane %v1234, 5
      %v1358 = vrot.slane %v1357, 4
      %v1359 = vrot.slane %v248, 5
      %v1360 = vsel %vm1272, %v1358, %v1359
      %v1361 = vrot.slane %v1359, 4
      %v1362 = vrot.slane %v269, 5
      %v1363 = vsel %vm1272, %v1361, %v1362
      %v1364 = vrot.slane %v1235, 5
      %v1365 = vrot.slane %v1364, 4
      %v1366 = vrot.slane %v250, 5
      %v1367 = vsel %vm1272, %v1365, %v1366
      %v1368 = vrot.slane %v1366, 4
      %v1369 = vrot.slane %v270, 5
      %v1370 = vsel %vm1272, %v1368, %v1369
      %v1371 = vrot.slane %v1236, 5
      %v1372 = vrot.slane %v1371, 4
      %v1373 = vrot.slane %v252, 5
      %v1374 = vsel %vm1272, %v1372, %v1373
      %v1375 = vrot.slane %v1373, 4
      %v1376 = vrot.slane %v271, 5
      %v1377 = vsel %vm1272, %v1375, %v1376
      %v1378 = vrot.slane %v1237, 5
      %v1379 = vrot.slane %v1378, 4
      %v1380 = vrot.slane %v254, 5
      %v1381 = vsel %vm1272, %v1379, %v1380
      %v1382 = vrot.slane %v1380, 4
      %v1383 = vrot.slane %v272, 5
      %v1384 = vsel %vm1272, %v1382, %v1383
      %s1385 = scalar_lea.vmem %s210, 16
      %v1386 = vld [vmem:[%s1385] sm:$0xf]
      %v1387 = vld [vmem:[%s1385 + $0x4] sm:$0xf]
      %v1388 = vunpack.c.l.b16 %v1276
      %v1389 = vunpack.c.l.b16 %v1279
      %v1390 = vunpack.c.l.b16 %v1283
      %v1391 = vunpack.c.l.b16 %v1286
      %v1392 = vunpack.c.l.b16 %v1290
      %v1393 = vunpack.c.l.b16 %v1293
      %v1394 = vunpack.c.l.b16 %v1297
      %v1395 = vunpack.c.l.b16 %v1300
      %v1396 = vunpack.c.l.b16 %v1304
      %v1397 = vunpack.c.l.b16 %v1307
      %v1398 = vunpack.c.l.b16 %v1311
      %v1399 = vunpack.c.l.b16 %v1314
      %v1400 = vunpack.c.l.b16 %v1318
      %v1401 = vunpack.c.l.b16 %v1321
      %v1402 = vunpack.c.l.b16 %v1325
      %v1403 = vunpack.c.l.b16 %v1328
      %v1404 = vunpack.c.l.b16 %v1332
      %v1405 = vunpack.c.l.b16 %v1335
      %v1406 = vunpack.c.l.b16 %v1339
      %v1407 = vunpack.c.l.b16 %v1342
      %v1408 = vunpack.c.l.b16 %v1346
      %v1409 = vunpack.c.l.b16 %v1349
      %v1410 = vunpack.c.l.b16 %v1353
      %v1411 = vunpack.c.l.b16 %v1356
      %v1412 = vunpack.c.l.b16 %v1360
      %v1413 = vunpack.c.l.b16 %v1363
      %v1414 = vunpack.c.l.b16 %v1367
      %v1415 = vunpack.c.l.b16 %v1370
      %v1416 = vunpack.c.l.b16 %v1374
      %v1417 = vunpack.c.l.b16 %v1377
      %v1418 = vunpack.c.l.b16 %v1381
      %v1419 = vunpack.c.l.b16 %v1384
      %v1420 = vpack.c.b16 %v1389, %v1388
      %v1421 = vpack.c.b16 %v1391, %v1390
      %v1422 = vpack.c.b16 %v1393, %v1392
      %v1423 = vpack.c.b16 %v1395, %v1394
      %v1424 = vpack.c.b16 %v1397, %v1396
      %v1425 = vpack.c.b16 %v1399, %v1398
      %v1426 = vpack.c.b16 %v1401, %v1400
      %v1427 = vpack.c.b16 %v1403, %v1402
      %v1428 = vpack.c.b16 %v1405, %v1404
      %v1429 = vpack.c.b16 %v1407, %v1406
      %v1430 = vpack.c.b16 %v1409, %v1408
      %v1431 = vpack.c.b16 %v1411, %v1410
      %v1432 = vpack.c.b16 %v1413, %v1412
      %v1433 = vpack.c.b16 %v1415, %v1414
      %v1434 = vpack.c.b16 %v1417, %v1416
      %v1435 = vpack.c.b16 %v1419, %v1418
      %v1438 = vunpack.c.l.b16 %v1386
      %v1439 = vunpack.c.l.b16 %v1387
      %v1440 = vpack.c.b16 %v1439, %v1438
      %v1443 = vsel %vm717, %v1420, 0
      %v1446 = vsel %vm717, %v1421, 0
      %v1449 = vsel %vm717, %v1422, 0
      %v1452 = vsel %vm717, %v1423, 0
      %v1455 = vsel %vm717, %v1424, 0
      %v1458 = vsel %vm717, %v1425, 0
      %v1461 = vsel %vm717, %v1426, 0
      %v1464 = vsel %vm717, %v1427, 0
      %v1467 = vsel %vm717, %v1428, 0
      %v1470 = vsel %vm717, %v1429, 0
      %v1473 = vsel %vm717, %v1430, 0
      %v1476 = vsel %vm717, %v1431, 0
      %v1479 = vsel %vm717, %v1432, 0
      %v1482 = vsel %vm717, %v1433, 0
      %v1485 = vsel %vm717, %v1434, 0
      %v1488 = vsel %vm717, %v1435, 0
      %1490 = vmatprep.subr.bf16.mxu0 0
      %1491 = vmatpush1.bf16.msra.mxu0 0
      %1492 = vmatprep.subr.bf16.mxu0 0
      %1493 = vmatpush1.bf16.msra.mxu0 0
      %1494 = vmatprep.subr.bf16.mxu0 0
      %1495 = vmatpush1.bf16.msra.mxu0 0
      %1496 = vmatprep.subr.bf16.mxu0 0
      %1497 = vmatpush1.bf16.msra.mxu0 0
      %1498 = vmatprep.subr.bf16.mxu0 0
      %1499 = vmatpush1.bf16.msra.mxu0 0
      %1500 = vmatprep.subr.bf16.mxu0 0
      %1501 = vmatpush1.bf16.msra.mxu0 0
      %1502 = vmatprep.subr.bf16.mxu0 0
      %1503 = vmatpush1.bf16.msra.mxu0 0
      %1504 = vmatprep.subr.bf16.mxu0 0
      %1505 = vmatpush1.bf16.msra.mxu0 %v1440
      %1506 = vmatprep.subr.bf16.mxu0 0
      %1507 = vmatpush2.bf16.msra.mxu0 0
      %1508 = vmatprep.subr.bf16.mxu0 0
      %1509 = vmatpush2.bf16.msra.mxu0 0
      %1510 = vmatprep.subr.bf16.mxu0 0
      %1511 = vmatpush2.bf16.msra.mxu0 0
      %1512 = vmatprep.subr.bf16.mxu0 0
      %1513 = vmatpush2.bf16.msra.mxu0 0
      %1514 = vmatprep.subr.bf16.mxu0 0
      %1515 = vmatpush2.bf16.msra.mxu0 0
      %1516 = vmatprep.subr.bf16.mxu0 0
      %1517 = vmatpush2.bf16.msra.mxu0 0
      %1518 = vmatprep.subr.bf16.mxu0 0
      %1519 = vmatpush2.bf16.msra.mxu0 0
      %1520 = vmatprep.subr.bf16.mxu0 0
      %1521 = vmatpush2.bf16.msra.mxu0 0
      %1522 = vmatprep.mubr.bf16.mxu0 0
      %1523 = vmatmul.mubr.bf16.gmra.mxu0 %v1443
      %v1524 = vpop.f32.mrf.mxu0
      %v1525 = vadd.f32 0.0, %v1524
      %v1526 = vpop.f32.mrf.mxu0
      %v1527 = vpop.f32.mrf.mxu0
      %v1528 = vadd.f32 0.0, %v1527
      %v1529 = vpop.f32.mrf.mxu0
      %1530 = vmatprep.mubr.bf16.mxu0 0
      %1531 = vmatmul.mubr.bf16.gmra.mxu0 %v1446
      %v1532 = vpop.f32.mrf.mxu0
      %v1533 = vadd.f32 0.0, %v1532
      %v1534 = vpop.f32.mrf.mxu0
      %v1535 = vpop.f32.mrf.mxu0
      %v1536 = vadd.f32 0.0, %v1535
      %v1537 = vpop.f32.mrf.mxu0
      %1538 = vmatprep.mubr.bf16.mxu0 0
      %1539 = vmatmul.mubr.bf16.gmra.mxu0 %v1449
      %v1540 = vpop.f32.mrf.mxu0
      %v1541 = vadd.f32 0.0, %v1540
      %v1542 = vpop.f32.mrf.mxu0
      %v1543 = vpop.f32.mrf.mxu0
      %v1544 = vadd.f32 0.0, %v1543
      %v1545 = vpop.f32.mrf.mxu0
      %1546 = vmatprep.mubr.bf16.mxu0 0
      %1547 = vmatmul.mubr.bf16.gmra.mxu0 %v1452
      %v1548 = vpop.f32.mrf.mxu0
      %v1549 = vadd.f32 0.0, %v1548
      %v1550 = vpop.f32.mrf.mxu0
      %v1551 = vpop.f32.mrf.mxu0
      %v1552 = vadd.f32 0.0, %v1551
      %v1553 = vpop.f32.mrf.mxu0
      %1554 = vmatprep.mubr.bf16.mxu0 0
      %1555 = vmatmul.mubr.bf16.gmra.mxu0 %v1455
      %v1556 = vpop.f32.mrf.mxu0
      %v1557 = vadd.f32 0.0, %v1556
      %v1558 = vpop.f32.mrf.mxu0
      %v1559 = vpop.f32.mrf.mxu0
      %v1560 = vadd.f32 0.0, %v1559
      %v1561 = vpop.f32.mrf.mxu0
      %1562 = vmatprep.mubr.bf16.mxu0 0
      %1563 = vmatmul.mubr.bf16.gmra.mxu0 %v1458
      %v1564 = vpop.f32.mrf.mxu0
      %v1565 = vadd.f32 0.0, %v1564
      %v1566 = vpop.f32.mrf.mxu0
      %v1567 = vpop.f32.mrf.mxu0
      %v1568 = vadd.f32 0.0, %v1567
      %v1569 = vpop.f32.mrf.mxu0
      %1570 = vmatprep.mubr.bf16.mxu0 0
      %1571 = vmatmul.mubr.bf16.gmra.mxu0 %v1461
      %v1572 = vpop.f32.mrf.mxu0
      %v1573 = vadd.f32 0.0, %v1572
      %v1574 = vpop.f32.mrf.mxu0
      %v1575 = vpop.f32.mrf.mxu0
      %v1576 = vadd.f32 0.0, %v1575
      %v1577 = vpop.f32.mrf.mxu0
      %1578 = vmatprep.mubr.bf16.mxu0 0
      %1579 = vmatmul.mubr.bf16.gmra.mxu0 %v1464
      %v1580 = vpop.f32.mrf.mxu0
      %v1581 = vadd.f32 0.0, %v1580
      %v1582 = vpop.f32.mrf.mxu0
      %v1583 = vpop.f32.mrf.mxu0
      %v1584 = vadd.f32 0.0, %v1583
      %v1585 = vpop.f32.mrf.mxu0
      %1586 = vmatprep.mubr.bf16.mxu0 0
      %1587 = vmatmul.mubr.bf16.gmra.mxu0 %v1467
      %v1588 = vpop.f32.mrf.mxu0
      %v1589 = vadd.f32 0.0, %v1588
      %v1590 = vpop.f32.mrf.mxu0
      %v1591 = vpop.f32.mrf.mxu0
      %v1592 = vadd.f32 0.0, %v1591
      %v1593 = vpop.f32.mrf.mxu0
      %1594 = vmatprep.mubr.bf16.mxu0 0
      %1595 = vmatmul.mubr.bf16.gmra.mxu0 %v1470
      %v1596 = vpop.f32.mrf.mxu0
      %v1597 = vadd.f32 0.0, %v1596
      %v1598 = vpop.f32.mrf.mxu0
      %v1599 = vpop.f32.mrf.mxu0
      %v1600 = vadd.f32 0.0, %v1599
      %v1601 = vpop.f32.mrf.mxu0
      %1602 = vmatprep.mubr.bf16.mxu0 0
      %1603 = vmatmul.mubr.bf16.gmra.mxu0 %v1473
      %v1604 = vpop.f32.mrf.mxu0
      %v1605 = vadd.f32 0.0, %v1604
      %v1606 = vpop.f32.mrf.mxu0
      %v1607 = vpop.f32.mrf.mxu0
      %v1608 = vadd.f32 0.0, %v1607
      %v1609 = vpop.f32.mrf.mxu0
      %1610 = vmatprep.mubr.bf16.mxu0 0
      %1611 = vmatmul.mubr.bf16.gmra.mxu0 %v1476
      %v1612 = vpop.f32.mrf.mxu0
      %v1613 = vadd.f32 0.0, %v1612
      %v1614 = vpop.f32.mrf.mxu0
      %v1615 = vpop.f32.mrf.mxu0
      %v1616 = vadd.f32 0.0, %v1615
      %v1617 = vpop.f32.mrf.mxu0
      %1618 = vmatprep.mubr.bf16.mxu0 0
      %1619 = vmatmul.mubr.bf16.gmra.mxu0 %v1479
      %v1620 = vpop.f32.mrf.mxu0
      %v1621 = vadd.f32 0.0, %v1620
      %v1622 = vpop.f32.mrf.mxu0
      %v1623 = vpop.f32.mrf.mxu0
      %v1624 = vadd.f32 0.0, %v1623
      %v1625 = vpop.f32.mrf.mxu0
      %1626 = vmatprep.mubr.bf16.mxu0 0
      %1627 = vmatmul.mubr.bf16.gmra.mxu0 %v1482
      %v1628 = vpop.f32.mrf.mxu0
      %v1629 = vadd.f32 0.0, %v1628
      %v1630 = vpop.f32.mrf.mxu0
      %v1631 = vpop.f32.mrf.mxu0
      %v1632 = vadd.f32 0.0, %v1631
      %v1633 = vpop.f32.mrf.mxu0
      %1634 = vmatprep.mubr.bf16.mxu0 0
      %1635 = vmatmul.mubr.bf16.gmra.mxu0 %v1485
      %v1636 = vpop.f32.mrf.mxu0
      %v1637 = vadd.f32 0.0, %v1636
      %v1638 = vpop.f32.mrf.mxu0
      %v1639 = vpop.f32.mrf.mxu0
      %v1640 = vadd.f32 0.0, %v1639
      %v1641 = vpop.f32.mrf.mxu0
      %1642 = vmatprep.mubr.bf16.mxu0 0
      %1643 = vmatmul.mubr.bf16.gmra.mxu0 %v1488
      %v1644 = vpop.f32.mrf.mxu0
      %v1645 = vadd.f32 0.0, %v1644
      %v1646 = vpop.f32.mrf.mxu0
      %v1647 = vpop.f32.mrf.mxu0
      %v1648 = vadd.f32 0.0, %v1647
      %v1649 = vpop.f32.mrf.mxu0
      %1650 = vdwg.mxu0
      %v1651 = vadd.f32 %v1096, %v1525
      %v1652 = vadd.f32 %v1099, %v1528
      %v1653 = vadd.f32 %v1104, %v1533
      %v1654 = vadd.f32 %v1107, %v1536
      %v1655 = vadd.f32 %v1112, %v1541
      %v1656 = vadd.f32 %v1115, %v1544
      %v1657 = vadd.f32 %v1120, %v1549
      %v1658 = vadd.f32 %v1123, %v1552
      %v1659 = vadd.f32 %v1128, %v1557
      %v1660 = vadd.f32 %v1131, %v1560
      %v1661 = vadd.f32 %v1136, %v1565
      %v1662 = vadd.f32 %v1139, %v1568
      %v1663 = vadd.f32 %v1144, %v1573
      %v1664 = vadd.f32 %v1147, %v1576
      %v1665 = vadd.f32 %v1152, %v1581
      %v1666 = vadd.f32 %v1155, %v1584
      %v1667 = vadd.f32 %v1160, %v1589
      %v1668 = vadd.f32 %v1163, %v1592
      %v1669 = vadd.f32 %v1168, %v1597
      %v1670 = vadd.f32 %v1171, %v1600
      %v1671 = vadd.f32 %v1176, %v1605
      %v1672 = vadd.f32 %v1179, %v1608
      %v1673 = vadd.f32 %v1184, %v1613
      %v1674 = vadd.f32 %v1187, %v1616
      %v1675 = vadd.f32 %v1192, %v1621
      %v1676 = vadd.f32 %v1195, %v1624
      %v1677 = vadd.f32 %v1200, %v1629
      %v1678 = vadd.f32 %v1203, %v1632
      %v1679 = vadd.f32 %v1208, %v1637
      %v1680 = vadd.f32 %v1211, %v1640
      %v1681 = vadd.f32 %v1216, %v1645
      %v1682 = vadd.f32 %v1219, %v1648
      %s1683 = scalar_lea.vmem %s206, 12
      %v1684 = vld [vmem:[%s1683] sm:$0xf]
      %v1685 = vld [vmem:[%s1683 + $0x4] sm:$0xf]
      %v1686 = vld [vmem:[%s1683 + $0xc] sm:$0xf]
      %v1687 = vld [vmem:[%s1683 + $0x10] sm:$0xf]
      %v1688 = vld [vmem:[%s1683 + $0x18] sm:$0xf]
      %v1689 = vld [vmem:[%s1683 + $0x1c] sm:$0xf]
      %v1690 = vld [vmem:[%s1683 + $0x24] sm:$0xf]
      %v1691 = vld [vmem:[%s1683 + $0x28] sm:$0xf]
      %v1692 = vld [vmem:[%s1683 + $0x30] sm:$0xf]
      %v1693 = vld [vmem:[%s1683 + $0x34] sm:$0xf]
      %v1694 = vld [vmem:[%s1683 + $0x3c] sm:$0xf]
      %v1695 = vld [vmem:[%s1683 + $0x40] sm:$0xf]
      %v1696 = vld [vmem:[%s1683 + $0x48] sm:$0xf]
      %v1697 = vld [vmem:[%s1683 + $0x4c] sm:$0xf]
      %v1698 = vld [vmem:[%s1683 + $0x54] sm:$0xf]
      %v1699 = vld [vmem:[%s1683 + $0x58] sm:$0xf]
      %v1700 = vld [vmem:[%s1683 + $0x60] sm:$0xf]
      %v1701 = vld [vmem:[%s1683 + $0x64] sm:$0xf]
      %v1702 = vld [vmem:[%s1683 + $0x6c] sm:$0xf]
      %v1703 = vld [vmem:[%s1683 + $0x70] sm:$0xf]
      %v1704 = vld [vmem:[%s1683 + $0x78] sm:$0xf]
      %v1705 = vld [vmem:[%s1683 + $0x7c] sm:$0xf]
      %v1706 = vld [vmem:[%s1683 + $0x84] sm:$0xf]
      %v1707 = vld [vmem:[%s1683 + $0x88] sm:$0xf]
      %v1708 = vld [vmem:[%s1683 + $0x90] sm:$0xf]
      %v1709 = vld [vmem:[%s1683 + $0x94] sm:$0xf]
      %v1710 = vld [vmem:[%s1683 + $0x9c] sm:$0xf]
      %v1711 = vld [vmem:[%s1683 + $0xa0] sm:$0xf]
      %v1712 = vld [vmem:[%s1683 + $0xa8] sm:$0xf]
      %v1713 = vld [vmem:[%s1683 + $0xac] sm:$0xf]
      %v1714 = vld [vmem:[%s1683 + $0xb4] sm:$0xf]
      %v1715 = vld [vmem:[%s1683 + $0xb8] sm:$0xf]
      %s1716 = scalar_lea.vmem %s210, 24
      %v1717 = vld [vmem:[%s1716] sm:$0xf]
      %v1718 = vld [vmem:[%s1716 + $0x4] sm:$0xf]
      %v1751 = vunpack.c.l.b16 %v1684
      %v1752 = vunpack.c.l.b16 %v1685
      %v1753 = vunpack.c.l.b16 %v1686
      %v1754 = vunpack.c.l.b16 %v1687
      %v1755 = vunpack.c.l.b16 %v1688
      %v1756 = vunpack.c.l.b16 %v1689
      %v1757 = vunpack.c.l.b16 %v1690
      %v1758 = vunpack.c.l.b16 %v1691
      %v1759 = vunpack.c.l.b16 %v1692
      %v1760 = vunpack.c.l.b16 %v1693
      %v1761 = vunpack.c.l.b16 %v1694
      %v1762 = vunpack.c.l.b16 %v1695
      %v1763 = vunpack.c.l.b16 %v1696
      %v1764 = vunpack.c.l.b16 %v1697
      %v1765 = vunpack.c.l.b16 %v1698
      %v1766 = vunpack.c.l.b16 %v1699
      %v1767 = vunpack.c.l.b16 %v1700
      %v1768 = vunpack.c.l.b16 %v1701
      %v1769 = vunpack.c.l.b16 %v1702
      %v1770 = vunpack.c.l.b16 %v1703
      %v1771 = vunpack.c.l.b16 %v1704
      %v1772 = vunpack.c.l.b16 %v1705
      %v1773 = vunpack.c.l.b16 %v1706
      %v1774 = vunpack.c.l.b16 %v1707
      %v1775 = vunpack.c.l.b16 %v1708
      %v1776 = vunpack.c.l.b16 %v1709
      %v1777 = vunpack.c.l.b16 %v1710
      %v1778 = vunpack.c.l.b16 %v1711
      %v1779 = vunpack.c.l.b16 %v1712
      %v1780 = vunpack.c.l.b16 %v1713
      %v1781 = vunpack.c.l.b16 %v1714
      %v1782 = vunpack.c.l.b16 %v1715
      %v1783 = vpack.c.b16 %v1752, %v1751
      %v1784 = vpack.c.b16 %v1754, %v1753
      %v1785 = vpack.c.b16 %v1756, %v1755
      %v1786 = vpack.c.b16 %v1758, %v1757
      %v1787 = vpack.c.b16 %v1760, %v1759
      %v1788 = vpack.c.b16 %v1762, %v1761
      %v1789 = vpack.c.b16 %v1764, %v1763
      %v1790 = vpack.c.b16 %v1766, %v1765
      %v1791 = vpack.c.b16 %v1768, %v1767
      %v1792 = vpack.c.b16 %v1770, %v1769
      %v1793 = vpack.c.b16 %v1772, %v1771
      %v1794 = vpack.c.b16 %v1774, %v1773
      %v1795 = vpack.c.b16 %v1776, %v1775
      %v1796 = vpack.c.b16 %v1778, %v1777
      %v1797 = vpack.c.b16 %v1780, %v1779
      %v1798 = vpack.c.b16 %v1782, %v1781
      %v1801 = vunpack.c.l.b16 %v1717
      %v1802 = vunpack.c.l.b16 %v1718
      %v1803 = vpack.c.b16 %v1802, %v1801
      %v1806 = vsel %vm717, %v1783, 0
      %v1809 = vsel %vm717, %v1784, 0
      %v1812 = vsel %vm717, %v1785, 0
      %v1815 = vsel %vm717, %v1786, 0
      %v1818 = vsel %vm717, %v1787, 0
      %v1821 = vsel %vm717, %v1788, 0
      %v1824 = vsel %vm717, %v1789, 0
      %v1827 = vsel %vm717, %v1790, 0
      %v1830 = vsel %vm717, %v1791, 0
      %v1833 = vsel %vm717, %v1792, 0
      %v1836 = vsel %vm717, %v1793, 0
      %v1839 = vsel %vm717, %v1794, 0
      %v1842 = vsel %vm717, %v1795, 0
      %v1845 = vsel %vm717, %v1796, 0
      %v1848 = vsel %vm717, %v1797, 0
      %v1851 = vsel %vm717, %v1798, 0
      %1853 = vmatprep.subr.bf16.mxu0 0
      %1854 = vmatpush1.bf16.msra.mxu0 0
      %1855 = vmatprep.subr.bf16.mxu0 0
      %1856 = vmatpush1.bf16.msra.mxu0 0
      %1857 = vmatprep.subr.bf16.mxu0 0
      %1858 = vmatpush1.bf16.msra.mxu0 0
      %1859 = vmatprep.subr.bf16.mxu0 0
      %1860 = vmatpush1.bf16.msra.mxu0 0
      %1861 = vmatprep.subr.bf16.mxu0 0
      %1862 = vmatpush1.bf16.msra.mxu0 0
      %1863 = vmatprep.subr.bf16.mxu0 0
      %1864 = vmatpush1.bf16.msra.mxu0 0
      %1865 = vmatprep.subr.bf16.mxu0 0
      %1866 = vmatpush1.bf16.msra.mxu0 0
      %1867 = vmatprep.subr.bf16.mxu0 0
      %1868 = vmatpush1.bf16.msra.mxu0 %v1803
      %1869 = vmatprep.subr.bf16.mxu0 0
      %1870 = vmatpush2.bf16.msra.mxu0 0
      %1871 = vmatprep.subr.bf16.mxu0 0
      %1872 = vmatpush2.bf16.msra.mxu0 0
      %1873 = vmatprep.subr.bf16.mxu0 0
      %1874 = vmatpush2.bf16.msra.mxu0 0
      %1875 = vmatprep.subr.bf16.mxu0 0
      %1876 = vmatpush2.bf16.msra.mxu0 0
      %1877 = vmatprep.subr.bf16.mxu0 0
      %1878 = vmatpush2.bf16.msra.mxu0 0
      %1879 = vmatprep.subr.bf16.mxu0 0
      %1880 = vmatpush2.bf16.msra.mxu0 0
      %1881 = vmatprep.subr.bf16.mxu0 0
      %1882 = vmatpush2.bf16.msra.mxu0 0
      %1883 = vmatprep.subr.bf16.mxu0 0
      %1884 = vmatpush2.bf16.msra.mxu0 0
      %1885 = vmatprep.mubr.bf16.mxu0 0
      %1886 = vmatmul.mubr.bf16.gmra.mxu0 %v1806
      %v1887 = vpop.f32.mrf.mxu0
      %v1888 = vadd.f32 0.0, %v1887
      %v1889 = vpop.f32.mrf.mxu0
      %v1890 = vpop.f32.mrf.mxu0
      %v1891 = vadd.f32 0.0, %v1890
      %v1892 = vpop.f32.mrf.mxu0
      %1893 = vmatprep.mubr.bf16.mxu0 0
      %1894 = vmatmul.mubr.bf16.gmra.mxu0 %v1809
      %v1895 = vpop.f32.mrf.mxu0
      %v1896 = vadd.f32 0.0, %v1895
      %v1897 = vpop.f32.mrf.mxu0
      %v1898 = vpop.f32.mrf.mxu0
      %v1899 = vadd.f32 0.0, %v1898
      %v1900 = vpop.f32.mrf.mxu0
      %1901 = vmatprep.mubr.bf16.mxu0 0
      %1902 = vmatmul.mubr.bf16.gmra.mxu0 %v1812
      %v1903 = vpop.f32.mrf.mxu0
      %v1904 = vadd.f32 0.0, %v1903
      %v1905 = vpop.f32.mrf.mxu0
      %v1906 = vpop.f32.mrf.mxu0
      %v1907 = vadd.f32 0.0, %v1906
      %v1908 = vpop.f32.mrf.mxu0
      %1909 = vmatprep.mubr.bf16.mxu0 0
      %1910 = vmatmul.mubr.bf16.gmra.mxu0 %v1815
      %v1911 = vpop.f32.mrf.mxu0
      %v1912 = vadd.f32 0.0, %v1911
      %v1913 = vpop.f32.mrf.mxu0
      %v1914 = vpop.f32.mrf.mxu0
      %v1915 = vadd.f32 0.0, %v1914
      %v1916 = vpop.f32.mrf.mxu0
      %1917 = vmatprep.mubr.bf16.mxu0 0
      %1918 = vmatmul.mubr.bf16.gmra.mxu0 %v1818
      %v1919 = vpop.f32.mrf.mxu0
      %v1920 = vadd.f32 0.0, %v1919
      %v1921 = vpop.f32.mrf.mxu0
      %v1922 = vpop.f32.mrf.mxu0
      %v1923 = vadd.f32 0.0, %v1922
      %v1924 = vpop.f32.mrf.mxu0
      %1925 = vmatprep.mubr.bf16.mxu0 0
      %1926 = vmatmul.mubr.bf16.gmra.mxu0 %v1821
      %v1927 = vpop.f32.mrf.mxu0
      %v1928 = vadd.f32 0.0, %v1927
      %v1929 = vpop.f32.mrf.mxu0
      %v1930 = vpop.f32.mrf.mxu0
      %v1931 = vadd.f32 0.0, %v1930
      %v1932 = vpop.f32.mrf.mxu0
      %1933 = vmatprep.mubr.bf16.mxu0 0
      %1934 = vmatmul.mubr.bf16.gmra.mxu0 %v1824
      %v1935 = vpop.f32.mrf.mxu0
      %v1936 = vadd.f32 0.0, %v1935
      %v1937 = vpop.f32.mrf.mxu0
      %v1938 = vpop.f32.mrf.mxu0
      %v1939 = vadd.f32 0.0, %v1938
      %v1940 = vpop.f32.mrf.mxu0
      %1941 = vmatprep.mubr.bf16.mxu0 0
      %1942 = vmatmul.mubr.bf16.gmra.mxu0 %v1827
      %v1943 = vpop.f32.mrf.mxu0
      %v1944 = vadd.f32 0.0, %v1943
      %v1945 = vpop.f32.mrf.mxu0
      %v1946 = vpop.f32.mrf.mxu0
      %v1947 = vadd.f32 0.0, %v1946
      %v1948 = vpop.f32.mrf.mxu0
      %1949 = vmatprep.mubr.bf16.mxu0 0
      %1950 = vmatmul.mubr.bf16.gmra.mxu0 %v1830
      %v1951 = vpop.f32.mrf.mxu0
      %v1952 = vadd.f32 0.0, %v1951
      %v1953 = vpop.f32.mrf.mxu0
      %v1954 = vpop.f32.mrf.mxu0
      %v1955 = vadd.f32 0.0, %v1954
      %v1956 = vpop.f32.mrf.mxu0
      %1957 = vmatprep.mubr.bf16.mxu0 0
      %1958 = vmatmul.mubr.bf16.gmra.mxu0 %v1833
      %v1959 = vpop.f32.mrf.mxu0
      %v1960 = vadd.f32 0.0, %v1959
      %v1961 = vpop.f32.mrf.mxu0
      %v1962 = vpop.f32.mrf.mxu0
      %v1963 = vadd.f32 0.0, %v1962
      %v1964 = vpop.f32.mrf.mxu0
      %1965 = vmatprep.mubr.bf16.mxu0 0
      %1966 = vmatmul.mubr.bf16.gmra.mxu0 %v1836
      %v1967 = vpop.f32.mrf.mxu0
      %v1968 = vadd.f32 0.0, %v1967
      %v1969 = vpop.f32.mrf.mxu0
      %v1970 = vpop.f32.mrf.mxu0
      %v1971 = vadd.f32 0.0, %v1970
      %v1972 = vpop.f32.mrf.mxu0
      %1973 = vmatprep.mubr.bf16.mxu0 0
      %1974 = vmatmul.mubr.bf16.gmra.mxu0 %v1839
      %v1975 = vpop.f32.mrf.mxu0
      %v1976 = vadd.f32 0.0, %v1975
      %v1977 = vpop.f32.mrf.mxu0
      %v1978 = vpop.f32.mrf.mxu0
      %v1979 = vadd.f32 0.0, %v1978
      %v1980 = vpop.f32.mrf.mxu0
      %1981 = vmatprep.mubr.bf16.mxu0 0
      %1982 = vmatmul.mubr.bf16.gmra.mxu0 %v1842
      %v1983 = vpop.f32.mrf.mxu0
      %v1984 = vadd.f32 0.0, %v1983
      %v1985 = vpop.f32.mrf.mxu0
      %v1986 = vpop.f32.mrf.mxu0
      %v1987 = vadd.f32 0.0, %v1986
      %v1988 = vpop.f32.mrf.mxu0
      %1989 = vmatprep.mubr.bf16.mxu0 0
      %1990 = vmatmul.mubr.bf16.gmra.mxu0 %v1845
      %v1991 = vpop.f32.mrf.mxu0
      %v1992 = vadd.f32 0.0, %v1991
      %v1993 = vpop.f32.mrf.mxu0
      %v1994 = vpop.f32.mrf.mxu0
      %v1995 = vadd.f32 0.0, %v1994
      %v1996 = vpop.f32.mrf.mxu0
      %1997 = vmatprep.mubr.bf16.mxu0 0
      %1998 = vmatmul.mubr.bf16.gmra.mxu0 %v1848
      %v1999 = vpop.f32.mrf.mxu0
      %v2000 = vadd.f32 0.0, %v1999
      %v2001 = vpop.f32.mrf.mxu0
      %v2002 = vpop.f32.mrf.mxu0
      %v2003 = vadd.f32 0.0, %v2002
      %v2004 = vpop.f32.mrf.mxu0
      %2005 = vmatprep.mubr.bf16.mxu0 0
      %2006 = vmatmul.mubr.bf16.gmra.mxu0 %v1851
      %v2007 = vpop.f32.mrf.mxu0
      %v2008 = vadd.f32 0.0, %v2007
      %v2009 = vpop.f32.mrf.mxu0
      %v2010 = vpop.f32.mrf.mxu0
      %v2011 = vadd.f32 0.0, %v2010
      %v2012 = vpop.f32.mrf.mxu0
      %2013 = vdwg.mxu0
      %v2014 = vadd.f32 %v1651, %v1888
      %v2015 = vadd.f32 %v1652, %v1891
      %v2016 = vadd.f32 %v1653, %v1896
      %v2017 = vadd.f32 %v1654, %v1899
      %v2018 = vadd.f32 %v1655, %v1904
      %v2019 = vadd.f32 %v1656, %v1907
      %v2020 = vadd.f32 %v1657, %v1912
      %v2021 = vadd.f32 %v1658, %v1915
      %v2022 = vadd.f32 %v1659, %v1920
      %v2023 = vadd.f32 %v1660, %v1923
      %v2024 = vadd.f32 %v1661, %v1928
      %v2025 = vadd.f32 %v1662, %v1931
      %v2026 = vadd.f32 %v1663, %v1936
      %v2027 = vadd.f32 %v1664, %v1939
      %v2028 = vadd.f32 %v1665, %v1944
      %v2029 = vadd.f32 %v1666, %v1947
      %v2030 = vadd.f32 %v1667, %v1952
      %v2031 = vadd.f32 %v1668, %v1955
      %v2032 = vadd.f32 %v1669, %v1960
      %v2033 = vadd.f32 %v1670, %v1963
      %v2034 = vadd.f32 %v1671, %v1968
      %v2035 = vadd.f32 %v1672, %v1971
      %v2036 = vadd.f32 %v1673, %v1976
      %v2037 = vadd.f32 %v1674, %v1979
      %v2038 = vadd.f32 %v1675, %v1984
      %v2039 = vadd.f32 %v1676, %v1987
      %v2040 = vadd.f32 %v1677, %v1992
      %v2041 = vadd.f32 %v1678, %v1995
      %v2042 = vadd.f32 %v1679, %v2000
      %v2043 = vadd.f32 %v1680, %v2003
      %v2044 = vadd.f32 %v1681, %v2008
      %v2045 = vadd.f32 %v1682, %v2011
      %v2046 = vld [vmem:[%s1683] sm:$0xf]
      %v2047 = vld [vmem:[%s1683 + $0x4] sm:$0xf]
      %v2048 = vld [vmem:[%s1683 + $0x8] sm:$0x1]
      %v2049 = vld [vmem:[%s1683 + $0xc] sm:$0xf]
      %v2050 = vld [vmem:[%s1683 + $0x10] sm:$0xf]
      %v2051 = vld [vmem:[%s1683 + $0x14] sm:$0x1]
      %v2052 = vld [vmem:[%s1683 + $0x18] sm:$0xf]
      %v2053 = vld [vmem:[%s1683 + $0x1c] sm:$0xf]
      %v2054 = vld [vmem:[%s1683 + $0x20] sm:$0x1]
      %v2055 = vld [vmem:[%s1683 + $0x24] sm:$0xf]
      %v2056 = vld [vmem:[%s1683 + $0x28] sm:$0xf]
      %v2057 = vld [vmem:[%s1683 + $0x2c] sm:$0x1]
      %v2058 = vld [vmem:[%s1683 + $0x30] sm:$0xf]
      %v2059 = vld [vmem:[%s1683 + $0x34] sm:$0xf]
      %v2060 = vld [vmem:[%s1683 + $0x38] sm:$0x1]
      %v2061 = vld [vmem:[%s1683 + $0x3c] sm:$0xf]
      %v2062 = vld [vmem:[%s1683 + $0x40] sm:$0xf]
      %v2063 = vld [vmem:[%s1683 + $0x44] sm:$0x1]
      %v2064 = vld [vmem:[%s1683 + $0x48] sm:$0xf]
      %v2065 = vld [vmem:[%s1683 + $0x4c] sm:$0xf]
      %v2066 = vld [vmem:[%s1683 + $0x50] sm:$0x1]
      %v2067 = vld [vmem:[%s1683 + $0x54] sm:$0xf]
      %v2068 = vld [vmem:[%s1683 + $0x58] sm:$0xf]
      %v2069 = vld [vmem:[%s1683 + $0x5c] sm:$0x1]
      %v2070 = vld [vmem:[%s1683 + $0x60] sm:$0xf]
      %v2071 = vld [vmem:[%s1683 + $0x64] sm:$0xf]
      %v2072 = vld [vmem:[%s1683 + $0x68] sm:$0x1]
      %v2073 = vld [vmem:[%s1683 + $0x6c] sm:$0xf]
      %v2074 = vld [vmem:[%s1683 + $0x70] sm:$0xf]
      %v2075 = vld [vmem:[%s1683 + $0x74] sm:$0x1]
      %v2076 = vld [vmem:[%s1683 + $0x78] sm:$0xf]
      %v2077 = vld [vmem:[%s1683 + $0x7c] sm:$0xf]
      %v2078 = vld [vmem:[%s1683 + $0x80] sm:$0x1]
      %v2079 = vld [vmem:[%s1683 + $0x84] sm:$0xf]
      %v2080 = vld [vmem:[%s1683 + $0x88] sm:$0xf]
      %v2081 = vld [vmem:[%s1683 + $0x8c] sm:$0x1]
      %v2082 = vld [vmem:[%s1683 + $0x90] sm:$0xf]
      %v2083 = vld [vmem:[%s1683 + $0x94] sm:$0xf]
      %v2084 = vld [vmem:[%s1683 + $0x98] sm:$0x1]
      %v2085 = vld [vmem:[%s1683 + $0x9c] sm:$0xf]
      %v2086 = vld [vmem:[%s1683 + $0xa0] sm:$0xf]
      %v2087 = vld [vmem:[%s1683 + $0xa4] sm:$0x1]
      %v2088 = vld [vmem:[%s1683 + $0xa8] sm:$0xf]
      %v2089 = vld [vmem:[%s1683 + $0xac] sm:$0xf]
      %v2090 = vld [vmem:[%s1683 + $0xb0] sm:$0x1]
      %v2091 = vld [vmem:[%s1683 + $0xb4] sm:$0xf]
      %v2092 = vld [vmem:[%s1683 + $0xb8] sm:$0xf]
      %v2093 = vld [vmem:[%s1683 + $0xbc] sm:$0x1]
      %v2095 = vshrl.u32 %v2046, 16
      %v2097 = vrot.slane %v2095, 4
      %v2098 = vshll.u32 %v2046, 16
      %v2100 = vrot.slane %v2098, 5
      %v2101 = vor.u32 %v2097, %v2100
      %v2102 = vrot.slane %v2101, 4
      %v2104 = vshll.u32 %v2047, 16
      %v2106 = vrot.slane %v2104, 5
      %v2107 = vsel %vm275, %v2102, %v2106
      %v2108 = vshrl.u32 %v2047, 16
      %v2110 = vrot.slane %v2108, 4
      %v2111 = vor.u32 %v2110, %v2106
      %v2112 = vrot.slane %v2111, 4
      %v2114 = vshll.u32 %v2048, 16
      %v2116 = vrot.slane %v2114, 5
      %v2117 = vsel %vm275, %v2112, %v2116
      %v2119 = vshrl.u32 %v2049, 16
      %v2121 = vrot.slane %v2119, 4
      %v2122 = vshll.u32 %v2049, 16
      %v2124 = vrot.slane %v2122, 5
      %v2125 = vor.u32 %v2121, %v2124
      %v2126 = vrot.slane %v2125, 4
      %v2128 = vshll.u32 %v2050, 16
      %v2130 = vrot.slane %v2128, 5
      %v2131 = vsel %vm275, %v2126, %v2130
      %v2132 = vshrl.u32 %v2050, 16
      %v2134 = vrot.slane %v2132, 4
      %v2135 = vor.u32 %v2134, %v2130
      %v2136 = vrot.slane %v2135, 4
      %v2138 = vshll.u32 %v2051, 16
      %v2140 = vrot.slane %v2138, 5
      %v2141 = vsel %vm275, %v2136, %v2140
      %v2143 = vshrl.u32 %v2052, 16
      %v2145 = vrot.slane %v2143, 4
      %v2146 = vshll.u32 %v2052, 16
      %v2148 = vrot.slane %v2146, 5
      %v2149 = vor.u32 %v2145, %v2148
      %v2150 = vrot.slane %v2149, 4
      %v2152 = vshll.u32 %v2053, 16
      %v2154 = vrot.slane %v2152, 5
      %v2155 = vsel %vm275, %v2150, %v2154
      %v2156 = vshrl.u32 %v2053, 16
      %v2158 = vrot.slane %v2156, 4
      %v2159 = vor.u32 %v2158, %v2154
      %v2160 = vrot.slane %v2159, 4
      %v2162 = vshll.u32 %v2054, 16
      %v2164 = vrot.slane %v2162, 5
      %v2165 = vsel %vm275, %v2160, %v2164
      %v2167 = vshrl.u32 %v2055, 16
      %v2169 = vrot.slane %v2167, 4
      %v2170 = vshll.u32 %v2055, 16
      %v2172 = vrot.slane %v2170, 5
      %v2173 = vor.u32 %v2169, %v2172
      %v2174 = vrot.slane %v2173, 4
      %v2176 = vshll.u32 %v2056, 16
      %v2178 = vrot.slane %v2176, 5
      %v2179 = vsel %vm275, %v2174, %v2178
      %v2180 = vshrl.u32 %v2056, 16
      %v2182 = vrot.slane %v2180, 4
      %v2183 = vor.u32 %v2182, %v2178
      %v2184 = vrot.slane %v2183, 4
      %v2186 = vshll.u32 %v2057, 16
      %v2188 = vrot.slane %v2186, 5
      %v2189 = vsel %vm275, %v2184, %v2188
      %v2191 = vshrl.u32 %v2058, 16
      %v2193 = vrot.slane %v2191, 4
      %v2194 = vshll.u32 %v2058, 16
      %v2196 = vrot.slane %v2194, 5
      %v2197 = vor.u32 %v2193, %v2196
      %v2198 = vrot.slane %v2197, 4
      %v2200 = vshll.u32 %v2059, 16
      %v2202 = vrot.slane %v2200, 5
      %v2203 = vsel %vm275, %v2198, %v2202
      %v2204 = vshrl.u32 %v2059, 16
      %v2206 = vrot.slane %v2204, 4
      %v2207 = vor.u32 %v2206, %v2202
      %v2208 = vrot.slane %v2207, 4
      %v2210 = vshll.u32 %v2060, 16
      %v2212 = vrot.slane %v2210, 5
      %v2213 = vsel %vm275, %v2208, %v2212
      %v2215 = vshrl.u32 %v2061, 16
      %v2217 = vrot.slane %v2215, 4
      %v2218 = vshll.u32 %v2061, 16
      %v2220 = vrot.slane %v2218, 5
      %v2221 = vor.u32 %v2217, %v2220
      %v2222 = vrot.slane %v2221, 4
      %v2224 = vshll.u32 %v2062, 16
      %v2226 = vrot.slane %v2224, 5
      %v2227 = vsel %vm275, %v2222, %v2226
      %v2228 = vshrl.u32 %v2062, 16
      %v2230 = vrot.slane %v2228, 4
      %v2231 = vor.u32 %v2230, %v2226
      %v2232 = vrot.slane %v2231, 4
      %v2234 = vshll.u32 %v2063, 16
      %v2236 = vrot.slane %v2234, 5
      %v2237 = vsel %vm275, %v2232, %v2236
      %v2239 = vshrl.u32 %v2064, 16
      %v2241 = vrot.slane %v2239, 4
      %v2242 = vshll.u32 %v2064, 16
      %v2244 = vrot.slane %v2242, 5
      %v2245 = vor.u32 %v2241, %v2244
      %v2246 = vrot.slane %v2245, 4
      %v2248 = vshll.u32 %v2065, 16
      %v2250 = vrot.slane %v2248, 5
      %v2251 = vsel %vm275, %v2246, %v2250
      %v2252 = vshrl.u32 %v2065, 16
      %v2254 = vrot.slane %v2252, 4
      %v2255 = vor.u32 %v2254, %v2250
      %v2256 = vrot.slane %v2255, 4
      %v2258 = vshll.u32 %v2066, 16
      %v2260 = vrot.slane %v2258, 5
      %v2261 = vsel %vm275, %v2256, %v2260
      %v2263 = vshrl.u32 %v2067, 16
      %v2265 = vrot.slane %v2263, 4
      %v2266 = vshll.u32 %v2067, 16
      %v2268 = vrot.slane %v2266, 5
      %v2269 = vor.u32 %v2265, %v2268
      %v2270 = vrot.slane %v2269, 4
      %v2272 = vshll.u32 %v2068, 16
      %v2274 = vrot.slane %v2272, 5
      %v2275 = vsel %vm275, %v2270, %v2274
      %v2276 = vshrl.u32 %v2068, 16
      %v2278 = vrot.slane %v2276, 4
      %v2279 = vor.u32 %v2278, %v2274
      %v2280 = vrot.slane %v2279, 4
      %v2282 = vshll.u32 %v2069, 16
      %v2284 = vrot.slane %v2282, 5
      %v2285 = vsel %vm275, %v2280, %v2284
      %v2287 = vshrl.u32 %v2070, 16
      %v2289 = vrot.slane %v2287, 4
      %v2290 = vshll.u32 %v2070, 16
      %v2292 = vrot.slane %v2290, 5
      %v2293 = vor.u32 %v2289, %v2292
      %v2294 = vrot.slane %v2293, 4
      %v2296 = vshll.u32 %v2071, 16
      %v2298 = vrot.slane %v2296, 5
      %v2299 = vsel %vm275, %v2294, %v2298
      %v2300 = vshrl.u32 %v2071, 16
      %v2302 = vrot.slane %v2300, 4
      %v2303 = vor.u32 %v2302, %v2298
      %v2304 = vrot.slane %v2303, 4
      %v2306 = vshll.u32 %v2072, 16
      %v2308 = vrot.slane %v2306, 5
      %v2309 = vsel %vm275, %v2304, %v2308
      %v2311 = vshrl.u32 %v2073, 16
      %v2313 = vrot.slane %v2311, 4
      %v2314 = vshll.u32 %v2073, 16
      %v2316 = vrot.slane %v2314, 5
      %v2317 = vor.u32 %v2313, %v2316
      %v2318 = vrot.slane %v2317, 4
      %v2320 = vshll.u32 %v2074, 16
      %v2322 = vrot.slane %v2320, 5
      %v2323 = vsel %vm275, %v2318, %v2322
      %v2324 = vshrl.u32 %v2074, 16
      %v2326 = vrot.slane %v2324, 4
      %v2327 = vor.u32 %v2326, %v2322
      %v2328 = vrot.slane %v2327, 4
      %v2330 = vshll.u32 %v2075, 16
      %v2332 = vrot.slane %v2330, 5
      %v2333 = vsel %vm275, %v2328, %v2332
      %v2335 = vshrl.u32 %v2076, 16
      %v2337 = vrot.slane %v2335, 4
      %v2338 = vshll.u32 %v2076, 16
      %v2340 = vrot.slane %v2338, 5
      %v2341 = vor.u32 %v2337, %v2340
      %v2342 = vrot.slane %v2341, 4
      %v2344 = vshll.u32 %v2077, 16
      %v2346 = vrot.slane %v2344, 5
      %v2347 = vsel %vm275, %v2342, %v2346
      %v2348 = vshrl.u32 %v2077, 16
      %v2350 = vrot.slane %v2348, 4
      %v2351 = vor.u32 %v2350, %v2346
      %v2352 = vrot.slane %v2351, 4
      %v2354 = vshll.u32 %v2078, 16
      %v2356 = vrot.slane %v2354, 5
      %v2357 = vsel %vm275, %v2352, %v2356
      %v2359 = vshrl.u32 %v2079, 16
      %v2361 = vrot.slane %v2359, 4
      %v2362 = vshll.u32 %v2079, 16
      %v2364 = vrot.slane %v2362, 5
      %v2365 = vor.u32 %v2361, %v2364
      %v2366 = vrot.slane %v2365, 4
      %v2368 = vshll.u32 %v2080, 16
      %v2370 = vrot.slane %v2368, 5
      %v2371 = vsel %vm275, %v2366, %v2370
      %v2372 = vshrl.u32 %v2080, 16
      %v2374 = vrot.slane %v2372, 4
      %v2375 = vor.u32 %v2374, %v2370
      %v2376 = vrot.slane %v2375, 4
      %v2378 = vshll.u32 %v2081, 16
      %v2380 = vrot.slane %v2378, 5
      %v2381 = vsel %vm275, %v2376, %v2380
      %v2383 = vshrl.u32 %v2082, 16
      %v2385 = vrot.slane %v2383, 4
      %v2386 = vshll.u32 %v2082, 16
      %v2388 = vrot.slane %v2386, 5
      %v2389 = vor.u32 %v2385, %v2388
      %v2390 = vrot.slane %v2389, 4
      %v2392 = vshll.u32 %v2083, 16
      %v2394 = vrot.slane %v2392, 5
      %v2395 = vsel %vm275, %v2390, %v2394
      %v2396 = vshrl.u32 %v2083, 16
      %v2398 = vrot.slane %v2396, 4
      %v2399 = vor.u32 %v2398, %v2394
      %v2400 = vrot.slane %v2399, 4
      %v2402 = vshll.u32 %v2084, 16
      %v2404 = vrot.slane %v2402, 5
      %v2405 = vsel %vm275, %v2400, %v2404
      %v2407 = vshrl.u32 %v2085, 16
      %v2409 = vrot.slane %v2407, 4
      %v2410 = vshll.u32 %v2085, 16
      %v2412 = vrot.slane %v2410, 5
      %v2413 = vor.u32 %v2409, %v2412
      %v2414 = vrot.slane %v2413, 4
      %v2416 = vshll.u32 %v2086, 16
      %v2418 = vrot.slane %v2416, 5
      %v2419 = vsel %vm275, %v2414, %v2418
      %v2420 = vshrl.u32 %v2086, 16
      %v2422 = vrot.slane %v2420, 4
      %v2423 = vor.u32 %v2422, %v2418
      %v2424 = vrot.slane %v2423, 4
      %v2426 = vshll.u32 %v2087, 16
      %v2428 = vrot.slane %v2426, 5
      %v2429 = vsel %vm275, %v2424, %v2428
      %v2431 = vshrl.u32 %v2088, 16
      %v2433 = vrot.slane %v2431, 4
      %v2434 = vshll.u32 %v2088, 16
      %v2436 = vrot.slane %v2434, 5
      %v2437 = vor.u32 %v2433, %v2436
      %v2438 = vrot.slane %v2437, 4
      %v2440 = vshll.u32 %v2089, 16
      %v2442 = vrot.slane %v2440, 5
      %v2443 = vsel %vm275, %v2438, %v2442
      %v2444 = vshrl.u32 %v2089, 16
      %v2446 = vrot.slane %v2444, 4
      %v2447 = vor.u32 %v2446, %v2442
      %v2448 = vrot.slane %v2447, 4
      %v2450 = vshll.u32 %v2090, 16
      %v2452 = vrot.slane %v2450, 5
      %v2453 = vsel %vm275, %v2448, %v2452
      %v2455 = vshrl.u32 %v2091, 16
      %v2457 = vrot.slane %v2455, 4
      %v2458 = vshll.u32 %v2091, 16
      %v2460 = vrot.slane %v2458, 5
      %v2461 = vor.u32 %v2457, %v2460
      %v2462 = vrot.slane %v2461, 4
      %v2464 = vshll.u32 %v2092, 16
      %v2466 = vrot.slane %v2464, 5
      %v2467 = vsel %vm275, %v2462, %v2466
      %v2468 = vshrl.u32 %v2092, 16
      %v2470 = vrot.slane %v2468, 4
      %v2471 = vor.u32 %v2470, %v2466
      %v2472 = vrot.slane %v2471, 4
      %v2474 = vshll.u32 %v2093, 16
      %v2476 = vrot.slane %v2474, 5
      %v2477 = vsel %vm275, %v2472, %v2476
      %s2478 = scalar_lea.vmem %s210, 32
      %v2479 = vld [vmem:[%s2478] sm:$0xf]
      %v2480 = vld [vmem:[%s2478 + $0x4] sm:$0xf]
      %v2481 = vunpack.c.l.b16 %v2107
      %v2482 = vunpack.c.l.b16 %v2117
      %v2483 = vunpack.c.l.b16 %v2131
      %v2484 = vunpack.c.l.b16 %v2141
      %v2485 = vunpack.c.l.b16 %v2155
      %v2486 = vunpack.c.l.b16 %v2165
      %v2487 = vunpack.c.l.b16 %v2179
      %v2488 = vunpack.c.l.b16 %v2189
      %v2489 = vunpack.c.l.b16 %v2203
      %v2490 = vunpack.c.l.b16 %v2213
      %v2491 = vunpack.c.l.b16 %v2227
      %v2492 = vunpack.c.l.b16 %v2237
      %v2493 = vunpack.c.l.b16 %v2251
      %v2494 = vunpack.c.l.b16 %v2261
      %v2495 = vunpack.c.l.b16 %v2275
      %v2496 = vunpack.c.l.b16 %v2285
      %v2497 = vunpack.c.l.b16 %v2299
      %v2498 = vunpack.c.l.b16 %v2309
      %v2499 = vunpack.c.l.b16 %v2323
      %v2500 = vunpack.c.l.b16 %v2333
      %v2501 = vunpack.c.l.b16 %v2347
      %v2502 = vunpack.c.l.b16 %v2357
      %v2503 = vunpack.c.l.b16 %v2371
      %v2504 = vunpack.c.l.b16 %v2381
      %v2505 = vunpack.c.l.b16 %v2395
      %v2506 = vunpack.c.l.b16 %v2405
      %v2507 = vunpack.c.l.b16 %v2419
      %v2508 = vunpack.c.l.b16 %v2429
      %v2509 = vunpack.c.l.b16 %v2443
      %v2510 = vunpack.c.l.b16 %v2453
      %v2511 = vunpack.c.l.b16 %v2467
      %v2512 = vunpack.c.l.b16 %v2477
      %v2513 = vpack.c.b16 %v2482, %v2481
      %v2514 = vpack.c.b16 %v2484, %v2483
      %v2515 = vpack.c.b16 %v2486, %v2485
      %v2516 = vpack.c.b16 %v2488, %v2487
      %v2517 = vpack.c.b16 %v2490, %v2489
      %v2518 = vpack.c.b16 %v2492, %v2491
      %v2519 = vpack.c.b16 %v2494, %v2493
      %v2520 = vpack.c.b16 %v2496, %v2495
      %v2521 = vpack.c.b16 %v2498, %v2497
      %v2522 = vpack.c.b16 %v2500, %v2499
      %v2523 = vpack.c.b16 %v2502, %v2501
      %v2524 = vpack.c.b16 %v2504, %v2503
      %v2525 = vpack.c.b16 %v2506, %v2505
      %v2526 = vpack.c.b16 %v2508, %v2507
      %v2527 = vpack.c.b16 %v2510, %v2509
      %v2528 = vpack.c.b16 %v2512, %v2511
      %v2531 = vunpack.c.l.b16 %v2479
      %v2532 = vunpack.c.l.b16 %v2480
      %v2533 = vpack.c.b16 %v2532, %v2531
      %v2536 = vsel %vm717, %v2513, 0
      %v2539 = vsel %vm717, %v2514, 0
      %v2542 = vsel %vm717, %v2515, 0
      %v2545 = vsel %vm717, %v2516, 0
      %v2548 = vsel %vm717, %v2517, 0
      %v2551 = vsel %vm717, %v2518, 0
      %v2554 = vsel %vm717, %v2519, 0
      %v2557 = vsel %vm717, %v2520, 0
      %v2560 = vsel %vm717, %v2521, 0
      %v2563 = vsel %vm717, %v2522, 0
      %v2566 = vsel %vm717, %v2523, 0
      %v2569 = vsel %vm717, %v2524, 0
      %v2572 = vsel %vm717, %v2525, 0
      %v2575 = vsel %vm717, %v2526, 0
      %v2578 = vsel %vm717, %v2527, 0
      %v2581 = vsel %vm717, %v2528, 0
      %2583 = vmatprep.subr.bf16.mxu0 0
      %2584 = vmatpush1.bf16.msra.mxu0 0
      %2585 = vmatprep.subr.bf16.mxu0 0
      %2586 = vmatpush1.bf16.msra.mxu0 0
      %2587 = vmatprep.subr.bf16.mxu0 0
      %2588 = vmatpush1.bf16.msra.mxu0 0
      %2589 = vmatprep.subr.bf16.mxu0 0
      %2590 = vmatpush1.bf16.msra.mxu0 0
      %2591 = vmatprep.subr.bf16.mxu0 0
      %2592 = vmatpush1.bf16.msra.mxu0 0
      %2593 = vmatprep.subr.bf16.mxu0 0
      %2594 = vmatpush1.bf16.msra.mxu0 0
      %2595 = vmatprep.subr.bf16.mxu0 0
      %2596 = vmatpush1.bf16.msra.mxu0 0
      %2597 = vmatprep.subr.bf16.mxu0 0
      %2598 = vmatpush1.bf16.msra.mxu0 %v2533
      %2599 = vmatprep.subr.bf16.mxu0 0
      %2600 = vmatpush2.bf16.msra.mxu0 0
      %2601 = vmatprep.subr.bf16.mxu0 0
      %2602 = vmatpush2.bf16.msra.mxu0 0
      %2603 = vmatprep.subr.bf16.mxu0 0
      %2604 = vmatpush2.bf16.msra.mxu0 0
      %2605 = vmatprep.subr.bf16.mxu0 0
      %2606 = vmatpush2.bf16.msra.mxu0 0
      %2607 = vmatprep.subr.bf16.mxu0 0
      %2608 = vmatpush2.bf16.msra.mxu0 0
      %2609 = vmatprep.subr.bf16.mxu0 0
      %2610 = vmatpush2.bf16.msra.mxu0 0
      %2611 = vmatprep.subr.bf16.mxu0 0
      %2612 = vmatpush2.bf16.msra.mxu0 0
      %2613 = vmatprep.subr.bf16.mxu0 0
      %2614 = vmatpush2.bf16.msra.mxu0 0
      %2615 = vmatprep.mubr.bf16.mxu0 0
      %2616 = vmatmul.mubr.bf16.gmra.mxu0 %v2536
      %v2617 = vpop.f32.mrf.mxu0
      %v2618 = vadd.f32 0.0, %v2617
      %v2619 = vpop.f32.mrf.mxu0
      %v2620 = vpop.f32.mrf.mxu0
      %v2621 = vadd.f32 0.0, %v2620
      %v2622 = vpop.f32.mrf.mxu0
      %2623 = vmatprep.mubr.bf16.mxu0 0
      %2624 = vmatmul.mubr.bf16.gmra.mxu0 %v2539
      %v2625 = vpop.f32.mrf.mxu0
      %v2626 = vadd.f32 0.0, %v2625
      %v2627 = vpop.f32.mrf.mxu0
      %v2628 = vpop.f32.mrf.mxu0
      %v2629 = vadd.f32 0.0, %v2628
      %v2630 = vpop.f32.mrf.mxu0
      %2631 = vmatprep.mubr.bf16.mxu0 0
      %2632 = vmatmul.mubr.bf16.gmra.mxu0 %v2542
      %v2633 = vpop.f32.mrf.mxu0
      %v2634 = vadd.f32 0.0, %v2633
      %v2635 = vpop.f32.mrf.mxu0
      %v2636 = vpop.f32.mrf.mxu0
      %v2637 = vadd.f32 0.0, %v2636
      %v2638 = vpop.f32.mrf.mxu0
      %2639 = vmatprep.mubr.bf16.mxu0 0
      %2640 = vmatmul.mubr.bf16.gmra.mxu0 %v2545
      %v2641 = vpop.f32.mrf.mxu0
      %v2642 = vadd.f32 0.0, %v2641
      %v2643 = vpop.f32.mrf.mxu0
      %v2644 = vpop.f32.mrf.mxu0
      %v2645 = vadd.f32 0.0, %v2644
      %v2646 = vpop.f32.mrf.mxu0
      %2647 = vmatprep.mubr.bf16.mxu0 0
      %2648 = vmatmul.mubr.bf16.gmra.mxu0 %v2548
      %v2649 = vpop.f32.mrf.mxu0
      %v2650 = vadd.f32 0.0, %v2649
      %v2651 = vpop.f32.mrf.mxu0
      %v2652 = vpop.f32.mrf.mxu0
      %v2653 = vadd.f32 0.0, %v2652
      %v2654 = vpop.f32.mrf.mxu0
      %2655 = vmatprep.mubr.bf16.mxu0 0
      %2656 = vmatmul.mubr.bf16.gmra.mxu0 %v2551
      %v2657 = vpop.f32.mrf.mxu0
      %v2658 = vadd.f32 0.0, %v2657
      %v2659 = vpop.f32.mrf.mxu0
      %v2660 = vpop.f32.mrf.mxu0
      %v2661 = vadd.f32 0.0, %v2660
      %v2662 = vpop.f32.mrf.mxu0
      %2663 = vmatprep.mubr.bf16.mxu0 0
      %2664 = vmatmul.mubr.bf16.gmra.mxu0 %v2554
      %v2665 = vpop.f32.mrf.mxu0
      %v2666 = vadd.f32 0.0, %v2665
      %v2667 = vpop.f32.mrf.mxu0
      %v2668 = vpop.f32.mrf.mxu0
      %v2669 = vadd.f32 0.0, %v2668
      %v2670 = vpop.f32.mrf.mxu0
      %2671 = vmatprep.mubr.bf16.mxu0 0
      %2672 = vmatmul.mubr.bf16.gmra.mxu0 %v2557
      %v2673 = vpop.f32.mrf.mxu0
      %v2674 = vadd.f32 0.0, %v2673
      %v2675 = vpop.f32.mrf.mxu0
      %v2676 = vpop.f32.mrf.mxu0
      %v2677 = vadd.f32 0.0, %v2676
      %v2678 = vpop.f32.mrf.mxu0
      %2679 = vmatprep.mubr.bf16.mxu0 0
      %2680 = vmatmul.mubr.bf16.gmra.mxu0 %v2560
      %v2681 = vpop.f32.mrf.mxu0
      %v2682 = vadd.f32 0.0, %v2681
      %v2683 = vpop.f32.mrf.mxu0
      %v2684 = vpop.f32.mrf.mxu0
      %v2685 = vadd.f32 0.0, %v2684
      %v2686 = vpop.f32.mrf.mxu0
      %2687 = vmatprep.mubr.bf16.mxu0 0
      %2688 = vmatmul.mubr.bf16.gmra.mxu0 %v2563
      %v2689 = vpop.f32.mrf.mxu0
      %v2690 = vadd.f32 0.0, %v2689
      %v2691 = vpop.f32.mrf.mxu0
      %v2692 = vpop.f32.mrf.mxu0
      %v2693 = vadd.f32 0.0, %v2692
      %v2694 = vpop.f32.mrf.mxu0
      %2695 = vmatprep.mubr.bf16.mxu0 0
      %2696 = vmatmul.mubr.bf16.gmra.mxu0 %v2566
      %v2697 = vpop.f32.mrf.mxu0
      %v2698 = vadd.f32 0.0, %v2697
      %v2699 = vpop.f32.mrf.mxu0
      %v2700 = vpop.f32.mrf.mxu0
      %v2701 = vadd.f32 0.0, %v2700
      %v2702 = vpop.f32.mrf.mxu0
      %2703 = vmatprep.mubr.bf16.mxu0 0
      %2704 = vmatmul.mubr.bf16.gmra.mxu0 %v2569
      %v2705 = vpop.f32.mrf.mxu0
      %v2706 = vadd.f32 0.0, %v2705
      %v2707 = vpop.f32.mrf.mxu0
      %v2708 = vpop.f32.mrf.mxu0
      %v2709 = vadd.f32 0.0, %v2708
      %v2710 = vpop.f32.mrf.mxu0
      %2711 = vmatprep.mubr.bf16.mxu0 0
      %2712 = vmatmul.mubr.bf16.gmra.mxu0 %v2572
      %v2713 = vpop.f32.mrf.mxu0
      %v2714 = vadd.f32 0.0, %v2713
      %v2715 = vpop.f32.mrf.mxu0
      %v2716 = vpop.f32.mrf.mxu0
      %v2717 = vadd.f32 0.0, %v2716
      %v2718 = vpop.f32.mrf.mxu0
      %2719 = vmatprep.mubr.bf16.mxu0 0
      %2720 = vmatmul.mubr.bf16.gmra.mxu0 %v2575
      %v2721 = vpop.f32.mrf.mxu0
      %v2722 = vadd.f32 0.0, %v2721
      %v2723 = vpop.f32.mrf.mxu0
      %v2724 = vpop.f32.mrf.mxu0
      %v2725 = vadd.f32 0.0, %v2724
      %v2726 = vpop.f32.mrf.mxu0
      %2727 = vmatprep.mubr.bf16.mxu0 0
      %2728 = vmatmul.mubr.bf16.gmra.mxu0 %v2578
      %v2729 = vpop.f32.mrf.mxu0
      %v2730 = vadd.f32 0.0, %v2729
      %v2731 = vpop.f32.mrf.mxu0
      %v2732 = vpop.f32.mrf.mxu0
      %v2733 = vadd.f32 0.0, %v2732
      %v2734 = vpop.f32.mrf.mxu0
      %2735 = vmatprep.mubr.bf16.mxu0 0
      %2736 = vmatmul.mubr.bf16.gmra.mxu0 %v2581
      %v2737 = vpop.f32.mrf.mxu0
      %v2738 = vadd.f32 0.0, %v2737
      %v2739 = vpop.f32.mrf.mxu0
      %v2740 = vpop.f32.mrf.mxu0
      %v2741 = vadd.f32 0.0, %v2740
      %v2742 = vpop.f32.mrf.mxu0
      %2743 = vdwg.mxu0
      %v2744 = vadd.f32 %v2014, %v2618
      %v2745 = vadd.f32 %v2015, %v2621
      %v2746 = vadd.f32 %v2016, %v2626
      %v2747 = vadd.f32 %v2017, %v2629
      %v2748 = vadd.f32 %v2018, %v2634
      %v2749 = vadd.f32 %v2019, %v2637
      %v2750 = vadd.f32 %v2020, %v2642
      %v2751 = vadd.f32 %v2021, %v2645
      %v2752 = vadd.f32 %v2022, %v2650
      %v2753 = vadd.f32 %v2023, %v2653
      %v2754 = vadd.f32 %v2024, %v2658
      %v2755 = vadd.f32 %v2025, %v2661
      %v2756 = vadd.f32 %v2026, %v2666
      %v2757 = vadd.f32 %v2027, %v2669
      %v2758 = vadd.f32 %v2028, %v2674
      %v2759 = vadd.f32 %v2029, %v2677
      %v2760 = vadd.f32 %v2030, %v2682
      %v2761 = vadd.f32 %v2031, %v2685
      %v2762 = vadd.f32 %v2032, %v2690
      %v2763 = vadd.f32 %v2033, %v2693
      %v2764 = vadd.f32 %v2034, %v2698
      %v2765 = vadd.f32 %v2035, %v2701
      %v2766 = vadd.f32 %v2036, %v2706
      %v2767 = vadd.f32 %v2037, %v2709
      %v2768 = vadd.f32 %v2038, %v2714
      %v2769 = vadd.f32 %v2039, %v2717
      %v2770 = vadd.f32 %v2040, %v2722
      %v2771 = vadd.f32 %v2041, %v2725
      %v2772 = vadd.f32 %v2042, %v2730
      %v2773 = vadd.f32 %v2043, %v2733
      %v2774 = vadd.f32 %v2044, %v2738
      %v2775 = vadd.f32 %v2045, %v2741
      %v2776 = vld [vmem:[%s1683] sm:$0xe]
      %v2777 = vld [vmem:[%s1683 + $0xc] sm:$0xe]
      %v2778 = vld [vmem:[%s1683 + $0x18] sm:$0xe]
      %v2779 = vld [vmem:[%s1683 + $0x24] sm:$0xe]
      %v2780 = vld [vmem:[%s1683 + $0x30] sm:$0xe]
      %v2781 = vld [vmem:[%s1683 + $0x3c] sm:$0xe]
      %v2782 = vld [vmem:[%s1683 + $0x48] sm:$0xe]
      %v2783 = vld [vmem:[%s1683 + $0x54] sm:$0xe]
      %v2784 = vld [vmem:[%s1683 + $0x60] sm:$0xe]
      %v2785 = vld [vmem:[%s1683 + $0x6c] sm:$0xe]
      %v2786 = vld [vmem:[%s1683 + $0x78] sm:$0xe]
      %v2787 = vld [vmem:[%s1683 + $0x84] sm:$0xe]
      %v2788 = vld [vmem:[%s1683 + $0x90] sm:$0xe]
      %v2789 = vld [vmem:[%s1683 + $0x9c] sm:$0xe]
      %v2790 = vld [vmem:[%s1683 + $0xa8] sm:$0xe]
      %v2791 = vld [vmem:[%s1683 + $0xb4] sm:$0xe]
      %v2840 = vrot.slane %v2776, 5
      %v2841 = vrot.slane %v2840, 4
      %v2842 = vrot.slane %v2047, 5
      %v2843 = vsel %vm1272, %v2841, %v2842
      %v2844 = vrot.slane %v2842, 4
      %v2845 = vrot.slane %v2048, 5
      %v2846 = vsel %vm1272, %v2844, %v2845
      %v2847 = vrot.slane %v2777, 5
      %v2848 = vrot.slane %v2847, 4
      %v2849 = vrot.slane %v2050, 5
      %v2850 = vsel %vm1272, %v2848, %v2849
      %v2851 = vrot.slane %v2849, 4
      %v2852 = vrot.slane %v2051, 5
      %v2853 = vsel %vm1272, %v2851, %v2852
      %v2854 = vrot.slane %v2778, 5
      %v2855 = vrot.slane %v2854, 4
      %v2856 = vrot.slane %v2053, 5
      %v2857 = vsel %vm1272, %v2855, %v2856
      %v2858 = vrot.slane %v2856, 4
      %v2859 = vrot.slane %v2054, 5
      %v2860 = vsel %vm1272, %v2858, %v2859
      %v2861 = vrot.slane %v2779, 5
      %v2862 = vrot.slane %v2861, 4
      %v2863 = vrot.slane %v2056, 5
      %v2864 = vsel %vm1272, %v2862, %v2863
      %v2865 = vrot.slane %v2863, 4
      %v2866 = vrot.slane %v2057, 5
      %v2867 = vsel %vm1272, %v2865, %v2866
      %v2868 = vrot.slane %v2780, 5
      %v2869 = vrot.slane %v2868, 4
      %v2870 = vrot.slane %v2059, 5
      %v2871 = vsel %vm1272, %v2869, %v2870
      %v2872 = vrot.slane %v2870, 4
      %v2873 = vrot.slane %v2060, 5
      %v2874 = vsel %vm1272, %v2872, %v2873
      %v2875 = vrot.slane %v2781, 5
      %v2876 = vrot.slane %v2875, 4
      %v2877 = vrot.slane %v2062, 5
      %v2878 = vsel %vm1272, %v2876, %v2877
      %v2879 = vrot.slane %v2877, 4
      %v2880 = vrot.slane %v2063, 5
      %v2881 = vsel %vm1272, %v2879, %v2880
      %v2882 = vrot.slane %v2782, 5
      %v2883 = vrot.slane %v2882, 4
      %v2884 = vrot.slane %v2065, 5
      %v2885 = vsel %vm1272, %v2883, %v2884
      %v2886 = vrot.slane %v2884, 4
      %v2887 = vrot.slane %v2066, 5
      %v2888 = vsel %vm1272, %v2886, %v2887
      %v2889 = vrot.slane %v2783, 5
      %v2890 = vrot.slane %v2889, 4
      %v2891 = vrot.slane %v2068, 5
      %v2892 = vsel %vm1272, %v2890, %v2891
      %v2893 = vrot.slane %v2891, 4
      %v2894 = vrot.slane %v2069, 5
      %v2895 = vsel %vm1272, %v2893, %v2894
      %v2896 = vrot.slane %v2784, 5
      %v2897 = vrot.slane %v2896, 4
      %v2898 = vrot.slane %v2071, 5
      %v2899 = vsel %vm1272, %v2897, %v2898
      %v2900 = vrot.slane %v2898, 4
      %v2901 = vrot.slane %v2072, 5
      %v2902 = vsel %vm1272, %v2900, %v2901
      %v2903 = vrot.slane %v2785, 5
      %v2904 = vrot.slane %v2903, 4
      %v2905 = vrot.slane %v2074, 5
      %v2906 = vsel %vm1272, %v2904, %v2905
      %v2907 = vrot.slane %v2905, 4
      %v2908 = vrot.slane %v2075, 5
      %v2909 = vsel %vm1272, %v2907, %v2908
      %v2910 = vrot.slane %v2786, 5
      %v2911 = vrot.slane %v2910, 4
      %v2912 = vrot.slane %v2077, 5
      %v2913 = vsel %vm1272, %v2911, %v2912
      %v2914 = vrot.slane %v2912, 4
      %v2915 = vrot.slane %v2078, 5
      %v2916 = vsel %vm1272, %v2914, %v2915
      %v2917 = vrot.slane %v2787, 5
      %v2918 = vrot.slane %v2917, 4
      %v2919 = vrot.slane %v2080, 5
      %v2920 = vsel %vm1272, %v2918, %v2919
      %v2921 = vrot.slane %v2919, 4
      %v2922 = vrot.slane %v2081, 5
      %v2923 = vsel %vm1272, %v2921, %v2922
      %v2924 = vrot.slane %v2788, 5
      %v2925 = vrot.slane %v2924, 4
      %v2926 = vrot.slane %v2083, 5
      %v2927 = vsel %vm1272, %v2925, %v2926
      %v2928 = vrot.slane %v2926, 4
      %v2929 = vrot.slane %v2084, 5
      %v2930 = vsel %vm1272, %v2928, %v2929
      %v2931 = vrot.slane %v2789, 5
      %v2932 = vrot.slane %v2931, 4
      %v2933 = vrot.slane %v2086, 5
      %v2934 = vsel %vm1272, %v2932, %v2933
      %v2935 = vrot.slane %v2933, 4
      %v2936 = vrot.slane %v2087, 5
      %v2937 = vsel %vm1272, %v2935, %v2936
      %v2938 = vrot.slane %v2790, 5
      %v2939 = vrot.slane %v2938, 4
      %v2940 = vrot.slane %v2089, 5
      %v2941 = vsel %vm1272, %v2939, %v2940
      %v2942 = vrot.slane %v2940, 4
      %v2943 = vrot.slane %v2090, 5
      %v2944 = vsel %vm1272, %v2942, %v2943
      %v2945 = vrot.slane %v2791, 5
      %v2946 = vrot.slane %v2945, 4
      %v2947 = vrot.slane %v2092, 5
      %v2948 = vsel %vm1272, %v2946, %v2947
      %v2949 = vrot.slane %v2947, 4
      %v2950 = vrot.slane %v2093, 5
      %v2951 = vsel %vm1272, %v2949, %v2950
      %s2952 = scalar_lea.vmem %s210, 40
      %v2953 = vld [vmem:[%s2952] sm:$0xf]
      %v2954 = vld [vmem:[%s2952 + $0x4] sm:$0xf]
      %v2955 = vunpack.c.l.b16 %v2843
      %v2956 = vunpack.c.l.b16 %v2846
      %v2957 = vunpack.c.l.b16 %v2850
      %v2958 = vunpack.c.l.b16 %v2853
      %v2959 = vunpack.c.l.b16 %v2857
      %v2960 = vunpack.c.l.b16 %v2860
      %v2961 = vunpack.c.l.b16 %v2864
      %v2962 = vunpack.c.l.b16 %v2867
      %v2963 = vunpack.c.l.b16 %v2871
      %v2964 = vunpack.c.l.b16 %v2874
      %v2965 = vunpack.c.l.b16 %v2878
      %v2966 = vunpack.c.l.b16 %v2881
      %v2967 = vunpack.c.l.b16 %v2885
      %v2968 = vunpack.c.l.b16 %v2888
      %v2969 = vunpack.c.l.b16 %v2892
      %v2970 = vunpack.c.l.b16 %v2895
      %v2971 = vunpack.c.l.b16 %v2899
      %v2972 = vunpack.c.l.b16 %v2902
      %v2973 = vunpack.c.l.b16 %v2906
      %v2974 = vunpack.c.l.b16 %v2909
      %v2975 = vunpack.c.l.b16 %v2913
      %v2976 = vunpack.c.l.b16 %v2916
      %v2977 = vunpack.c.l.b16 %v2920
      %v2978 = vunpack.c.l.b16 %v2923
      %v2979 = vunpack.c.l.b16 %v2927
      %v2980 = vunpack.c.l.b16 %v2930
      %v2981 = vunpack.c.l.b16 %v2934
      %v2982 = vunpack.c.l.b16 %v2937
      %v2983 = vunpack.c.l.b16 %v2941
      %v2984 = vunpack.c.l.b16 %v2944
      %v2985 = vunpack.c.l.b16 %v2948
      %v2986 = vunpack.c.l.b16 %v2951
      %v2987 = vpack.c.b16 %v2956, %v2955
      %v2988 = vpack.c.b16 %v2958, %v2957
      %v2989 = vpack.c.b16 %v2960, %v2959
      %v2990 = vpack.c.b16 %v2962, %v2961
      %v2991 = vpack.c.b16 %v2964, %v2963
      %v2992 = vpack.c.b16 %v2966, %v2965
      %v2993 = vpack.c.b16 %v2968, %v2967
      %v2994 = vpack.c.b16 %v2970, %v2969
      %v2995 = vpack.c.b16 %v2972, %v2971
      %v2996 = vpack.c.b16 %v2974, %v2973
      %v2997 = vpack.c.b16 %v2976, %v2975
      %v2998 = vpack.c.b16 %v2978, %v2977
      %v2999 = vpack.c.b16 %v2980, %v2979
      %v3000 = vpack.c.b16 %v2982, %v2981
      %v3001 = vpack.c.b16 %v2984, %v2983
      %v3002 = vpack.c.b16 %v2986, %v2985
      %v3005 = vunpack.c.l.b16 %v2953
      %v3006 = vunpack.c.l.b16 %v2954
      %v3007 = vpack.c.b16 %v3006, %v3005
      %v3010 = vsel %vm717, %v2987, 0
      %v3013 = vsel %vm717, %v2988, 0
      %v3016 = vsel %vm717, %v2989, 0
      %v3019 = vsel %vm717, %v2990, 0
      %v3022 = vsel %vm717, %v2991, 0
      %v3025 = vsel %vm717, %v2992, 0
      %v3028 = vsel %vm717, %v2993, 0
      %v3031 = vsel %vm717, %v2994, 0
      %v3034 = vsel %vm717, %v2995, 0
      %v3037 = vsel %vm717, %v2996, 0
      %v3040 = vsel %vm717, %v2997, 0
      %v3043 = vsel %vm717, %v2998, 0
      %v3046 = vsel %vm717, %v2999, 0
      %v3049 = vsel %vm717, %v3000, 0
      %v3052 = vsel %vm717, %v3001, 0
      %v3055 = vsel %vm717, %v3002, 0
      %3057 = vmatprep.subr.bf16.mxu0 0
      %3058 = vmatpush1.bf16.msra.mxu0 0
      %3059 = vmatprep.subr.bf16.mxu0 0
      %3060 = vmatpush1.bf16.msra.mxu0 0
      %3061 = vmatprep.subr.bf16.mxu0 0
      %3062 = vmatpush1.bf16.msra.mxu0 0
      %3063 = vmatprep.subr.bf16.mxu0 0
      %3064 = vmatpush1.bf16.msra.mxu0 0
      %3065 = vmatprep.subr.bf16.mxu0 0
      %3066 = vmatpush1.bf16.msra.mxu0 0
      %3067 = vmatprep.subr.bf16.mxu0 0
      %3068 = vmatpush1.bf16.msra.mxu0 0
      %3069 = vmatprep.subr.bf16.mxu0 0
      %3070 = vmatpush1.bf16.msra.mxu0 0
      %3071 = vmatprep.subr.bf16.mxu0 0
      %3072 = vmatpush1.bf16.msra.mxu0 %v3007
      %3073 = vmatprep.subr.bf16.mxu0 0
      %3074 = vmatpush2.bf16.msra.mxu0 0
      %3075 = vmatprep.subr.bf16.mxu0 0
      %3076 = vmatpush2.bf16.msra.mxu0 0
      %3077 = vmatprep.subr.bf16.mxu0 0
      %3078 = vmatpush2.bf16.msra.mxu0 0
      %3079 = vmatprep.subr.bf16.mxu0 0
      %3080 = vmatpush2.bf16.msra.mxu0 0
      %3081 = vmatprep.subr.bf16.mxu0 0
      %3082 = vmatpush2.bf16.msra.mxu0 0
      %3083 = vmatprep.subr.bf16.mxu0 0
      %3084 = vmatpush2.bf16.msra.mxu0 0
      %3085 = vmatprep.subr.bf16.mxu0 0
      %3086 = vmatpush2.bf16.msra.mxu0 0
      %3087 = vmatprep.subr.bf16.mxu0 0
      %3088 = vmatpush2.bf16.msra.mxu0 0
      %3089 = vmatprep.mubr.bf16.mxu0 0
      %3090 = vmatmul.mubr.bf16.gmra.mxu0 %v3010
      %v3091 = vpop.f32.mrf.mxu0
      %v3092 = vadd.f32 0.0, %v3091
      %v3093 = vpop.f32.mrf.mxu0
      %v3094 = vpop.f32.mrf.mxu0
      %v3095 = vadd.f32 0.0, %v3094
      %v3096 = vpop.f32.mrf.mxu0
      %3097 = vmatprep.mubr.bf16.mxu0 0
      %3098 = vmatmul.mubr.bf16.gmra.mxu0 %v3013
      %v3099 = vpop.f32.mrf.mxu0
      %v3100 = vadd.f32 0.0, %v3099
      %v3101 = vpop.f32.mrf.mxu0
      %v3102 = vpop.f32.mrf.mxu0
      %v3103 = vadd.f32 0.0, %v3102
      %v3104 = vpop.f32.mrf.mxu0
      %3105 = vmatprep.mubr.bf16.mxu0 0
      %3106 = vmatmul.mubr.bf16.gmra.mxu0 %v3016
      %v3107 = vpop.f32.mrf.mxu0
      %v3108 = vadd.f32 0.0, %v3107
      %v3109 = vpop.f32.mrf.mxu0
      %v3110 = vpop.f32.mrf.mxu0
      %v3111 = vadd.f32 0.0, %v3110
      %v3112 = vpop.f32.mrf.mxu0
      %3113 = vmatprep.mubr.bf16.mxu0 0
      %3114 = vmatmul.mubr.bf16.gmra.mxu0 %v3019
      %v3115 = vpop.f32.mrf.mxu0
      %v3116 = vadd.f32 0.0, %v3115
      %v3117 = vpop.f32.mrf.mxu0
      %v3118 = vpop.f32.mrf.mxu0
      %v3119 = vadd.f32 0.0, %v3118
      %v3120 = vpop.f32.mrf.mxu0
      %3121 = vmatprep.mubr.bf16.mxu0 0
      %3122 = vmatmul.mubr.bf16.gmra.mxu0 %v3022
      %v3123 = vpop.f32.mrf.mxu0
      %v3124 = vadd.f32 0.0, %v3123
      %v3125 = vpop.f32.mrf.mxu0
      %v3126 = vpop.f32.mrf.mxu0
      %v3127 = vadd.f32 0.0, %v3126
      %v3128 = vpop.f32.mrf.mxu0
      %3129 = vmatprep.mubr.bf16.mxu0 0
      %3130 = vmatmul.mubr.bf16.gmra.mxu0 %v3025
      %v3131 = vpop.f32.mrf.mxu0
      %v3132 = vadd.f32 0.0, %v3131
      %v3133 = vpop.f32.mrf.mxu0
      %v3134 = vpop.f32.mrf.mxu0
      %v3135 = vadd.f32 0.0, %v3134
      %v3136 = vpop.f32.mrf.mxu0
      %3137 = vmatprep.mubr.bf16.mxu0 0
      %3138 = vmatmul.mubr.bf16.gmra.mxu0 %v3028
      %v3139 = vpop.f32.mrf.mxu0
      %v3140 = vadd.f32 0.0, %v3139
      %v3141 = vpop.f32.mrf.mxu0
      %v3142 = vpop.f32.mrf.mxu0
      %v3143 = vadd.f32 0.0, %v3142
      %v3144 = vpop.f32.mrf.mxu0
      %3145 = vmatprep.mubr.bf16.mxu0 0
      %3146 = vmatmul.mubr.bf16.gmra.mxu0 %v3031
      %v3147 = vpop.f32.mrf.mxu0
      %v3148 = vadd.f32 0.0, %v3147
      %v3149 = vpop.f32.mrf.mxu0
      %v3150 = vpop.f32.mrf.mxu0
      %v3151 = vadd.f32 0.0, %v3150
      %v3152 = vpop.f32.mrf.mxu0
      %3153 = vmatprep.mubr.bf16.mxu0 0
      %3154 = vmatmul.mubr.bf16.gmra.mxu0 %v3034
      %v3155 = vpop.f32.mrf.mxu0
      %v3156 = vadd.f32 0.0, %v3155
      %v3157 = vpop.f32.mrf.mxu0
      %v3158 = vpop.f32.mrf.mxu0
      %v3159 = vadd.f32 0.0, %v3158
      %v3160 = vpop.f32.mrf.mxu0
      %3161 = vmatprep.mubr.bf16.mxu0 0
      %3162 = vmatmul.mubr.bf16.gmra.mxu0 %v3037
      %v3163 = vpop.f32.mrf.mxu0
      %v3164 = vadd.f32 0.0, %v3163
      %v3165 = vpop.f32.mrf.mxu0
      %v3166 = vpop.f32.mrf.mxu0
      %v3167 = vadd.f32 0.0, %v3166
      %v3168 = vpop.f32.mrf.mxu0
      %3169 = vmatprep.mubr.bf16.mxu0 0
      %3170 = vmatmul.mubr.bf16.gmra.mxu0 %v3040
      %v3171 = vpop.f32.mrf.mxu0
      %v3172 = vadd.f32 0.0, %v3171
      %v3173 = vpop.f32.mrf.mxu0
      %v3174 = vpop.f32.mrf.mxu0
      %v3175 = vadd.f32 0.0, %v3174
      %v3176 = vpop.f32.mrf.mxu0
      %3177 = vmatprep.mubr.bf16.mxu0 0
      %3178 = vmatmul.mubr.bf16.gmra.mxu0 %v3043
      %v3179 = vpop.f32.mrf.mxu0
      %v3180 = vadd.f32 0.0, %v3179
      %v3181 = vpop.f32.mrf.mxu0
      %v3182 = vpop.f32.mrf.mxu0
      %v3183 = vadd.f32 0.0, %v3182
      %v3184 = vpop.f32.mrf.mxu0
      %3185 = vmatprep.mubr.bf16.mxu0 0
      %3186 = vmatmul.mubr.bf16.gmra.mxu0 %v3046
      %v3187 = vpop.f32.mrf.mxu0
      %v3188 = vadd.f32 0.0, %v3187
      %v3189 = vpop.f32.mrf.mxu0
      %v3190 = vpop.f32.mrf.mxu0
      %v3191 = vadd.f32 0.0, %v3190
      %v3192 = vpop.f32.mrf.mxu0
      %3193 = vmatprep.mubr.bf16.mxu0 0
      %3194 = vmatmul.mubr.bf16.gmra.mxu0 %v3049
      %v3195 = vpop.f32.mrf.mxu0
      %v3196 = vadd.f32 0.0, %v3195
      %v3197 = vpop.f32.mrf.mxu0
      %v3198 = vpop.f32.mrf.mxu0
      %v3199 = vadd.f32 0.0, %v3198
      %v3200 = vpop.f32.mrf.mxu0
      %3201 = vmatprep.mubr.bf16.mxu0 0
      %3202 = vmatmul.mubr.bf16.gmra.mxu0 %v3052
      %v3203 = vpop.f32.mrf.mxu0
      %v3204 = vadd.f32 0.0, %v3203
      %v3205 = vpop.f32.mrf.mxu0
      %v3206 = vpop.f32.mrf.mxu0
      %v3207 = vadd.f32 0.0, %v3206
      %v3208 = vpop.f32.mrf.mxu0
      %3209 = vmatprep.mubr.bf16.mxu0 0
      %3210 = vmatmul.mubr.bf16.gmra.mxu0 %v3055
      %v3211 = vpop.f32.mrf.mxu0
      %v3212 = vadd.f32 0.0, %v3211
      %v3213 = vpop.f32.mrf.mxu0
      %v3214 = vpop.f32.mrf.mxu0
      %v3215 = vadd.f32 0.0, %v3214
      %v3216 = vpop.f32.mrf.mxu0
      %3217 = vdwg.mxu0
      %v3218 = vadd.f32 %v2744, %v3092
      %v3219 = vadd.f32 %v2745, %v3095
      %v3220 = vadd.f32 %v2746, %v3100
      %v3221 = vadd.f32 %v2747, %v3103
      %v3222 = vadd.f32 %v2748, %v3108
      %v3223 = vadd.f32 %v2749, %v3111
      %v3224 = vadd.f32 %v2750, %v3116
      %v3225 = vadd.f32 %v2751, %v3119
      %v3226 = vadd.f32 %v2752, %v3124
      %v3227 = vadd.f32 %v2753, %v3127
      %v3228 = vadd.f32 %v2754, %v3132
      %v3229 = vadd.f32 %v2755, %v3135
      %v3230 = vadd.f32 %v2756, %v3140
      %v3231 = vadd.f32 %v2757, %v3143
      %v3232 = vadd.f32 %v2758, %v3148
      %v3233 = vadd.f32 %v2759, %v3151
      %v3234 = vadd.f32 %v2760, %v3156
      %v3235 = vadd.f32 %v2761, %v3159
      %v3236 = vadd.f32 %v2762, %v3164
      %v3237 = vadd.f32 %v2763, %v3167
      %v3238 = vadd.f32 %v2764, %v3172
      %v3239 = vadd.f32 %v2765, %v3175
      %v3240 = vadd.f32 %v2766, %v3180
      %v3241 = vadd.f32 %v2767, %v3183
      %v3242 = vadd.f32 %v2768, %v3188
      %v3243 = vadd.f32 %v2769, %v3191
      %v3244 = vadd.f32 %v2770, %v3196
      %v3245 = vadd.f32 %v2771, %v3199
      %v3246 = vadd.f32 %v2772, %v3204
      %v3247 = vadd.f32 %v2773, %v3207
      %v3248 = vadd.f32 %v2774, %v3212
      %v3249 = vadd.f32 %v2775, %v3215
      %s3250 = scalar_lea.vmem %s206, 24
      %v3251 = vld [vmem:[%s3250] sm:$0xf]
      %v3252 = vld [vmem:[%s3250 + $0x4] sm:$0xf]
      %v3253 = vld [vmem:[%s3250 + $0xc] sm:$0xf]
      %v3254 = vld [vmem:[%s3250 + $0x10] sm:$0xf]
      %v3255 = vld [vmem:[%s3250 + $0x18] sm:$0xf]
      %v3256 = vld [vmem:[%s3250 + $0x1c] sm:$0xf]
      %v3257 = vld [vmem:[%s3250 + $0x24] sm:$0xf]
      %v3258 = vld [vmem:[%s3250 + $0x28] sm:$0xf]
      %v3259 = vld [vmem:[%s3250 + $0x30] sm:$0xf]
      %v3260 = vld [vmem:[%s3250 + $0x34] sm:$0xf]
      %v3261 = vld [vmem:[%s3250 + $0x3c] sm:$0xf]
      %v3262 = vld [vmem:[%s3250 + $0x40] sm:$0xf]
      %v3263 = vld [vmem:[%s3250 + $0x48] sm:$0xf]
      %v3264 = vld [vmem:[%s3250 + $0x4c] sm:$0xf]
      %v3265 = vld [vmem:[%s3250 + $0x54] sm:$0xf]
      %v3266 = vld [vmem:[%s3250 + $0x58] sm:$0xf]
      %v3267 = vld [vmem:[%s3250 + $0x60] sm:$0xf]
      %v3268 = vld [vmem:[%s3250 + $0x64] sm:$0xf]
      %v3269 = vld [vmem:[%s3250 + $0x6c] sm:$0xf]
      %v3270 = vld [vmem:[%s3250 + $0x70] sm:$0xf]
      %v3271 = vld [vmem:[%s3250 + $0x78] sm:$0xf]
      %v3272 = vld [vmem:[%s3250 + $0x7c] sm:$0xf]
      %v3273 = vld [vmem:[%s3250 + $0x84] sm:$0xf]
      %v3274 = vld [vmem:[%s3250 + $0x88] sm:$0xf]
      %v3275 = vld [vmem:[%s3250 + $0x90] sm:$0xf]
      %v3276 = vld [vmem:[%s3250 + $0x94] sm:$0xf]
      %v3277 = vld [vmem:[%s3250 + $0x9c] sm:$0xf]
      %v3278 = vld [vmem:[%s3250 + $0xa0] sm:$0xf]
      %v3279 = vld [vmem:[%s3250 + $0xa8] sm:$0xf]
      %v3280 = vld [vmem:[%s3250 + $0xac] sm:$0xf]
      %v3281 = vld [vmem:[%s3250 + $0xb4] sm:$0xf]
      %v3282 = vld [vmem:[%s3250 + $0xb8] sm:$0xf]
      %s3283 = scalar_lea.vmem %s210, 48
      %v3284 = vld [vmem:[%s3283] sm:$0xf]
      %v3285 = vld [vmem:[%s3283 + $0x4] sm:$0xf]
      %v3318 = vunpack.c.l.b16 %v3251
      %v3319 = vunpack.c.l.b16 %v3252
      %v3320 = vunpack.c.l.b16 %v3253
      %v3321 = vunpack.c.l.b16 %v3254
      %v3322 = vunpack.c.l.b16 %v3255
      %v3323 = vunpack.c.l.b16 %v3256
      %v3324 = vunpack.c.l.b16 %v3257
      %v3325 = vunpack.c.l.b16 %v3258
      %v3326 = vunpack.c.l.b16 %v3259
      %v3327 = vunpack.c.l.b16 %v3260
      %v3328 = vunpack.c.l.b16 %v3261
      %v3329 = vunpack.c.l.b16 %v3262
      %v3330 = vunpack.c.l.b16 %v3263
      %v3331 = vunpack.c.l.b16 %v3264
      %v3332 = vunpack.c.l.b16 %v3265
      %v3333 = vunpack.c.l.b16 %v3266
      %v3334 = vunpack.c.l.b16 %v3267
      %v3335 = vunpack.c.l.b16 %v3268
      %v3336 = vunpack.c.l.b16 %v3269
      %v3337 = vunpack.c.l.b16 %v3270
      %v3338 = vunpack.c.l.b16 %v3271
      %v3339 = vunpack.c.l.b16 %v3272
      %v3340 = vunpack.c.l.b16 %v3273
      %v3341 = vunpack.c.l.b16 %v3274
      %v3342 = vunpack.c.l.b16 %v3275
      %v3343 = vunpack.c.l.b16 %v3276
      %v3344 = vunpack.c.l.b16 %v3277
      %v3345 = vunpack.c.l.b16 %v3278
      %v3346 = vunpack.c.l.b16 %v3279
      %v3347 = vunpack.c.l.b16 %v3280
      %v3348 = vunpack.c.l.b16 %v3281
      %v3349 = vunpack.c.l.b16 %v3282
      %v3350 = vpack.c.b16 %v3319, %v3318
      %v3351 = vpack.c.b16 %v3321, %v3320
      %v3352 = vpack.c.b16 %v3323, %v3322
      %v3353 = vpack.c.b16 %v3325, %v3324
      %v3354 = vpack.c.b16 %v3327, %v3326
      %v3355 = vpack.c.b16 %v3329, %v3328
      %v3356 = vpack.c.b16 %v3331, %v3330
      %v3357 = vpack.c.b16 %v3333, %v3332
      %v3358 = vpack.c.b16 %v3335, %v3334
      %v3359 = vpack.c.b16 %v3337, %v3336
      %v3360 = vpack.c.b16 %v3339, %v3338
      %v3361 = vpack.c.b16 %v3341, %v3340
      %v3362 = vpack.c.b16 %v3343, %v3342
      %v3363 = vpack.c.b16 %v3345, %v3344
      %v3364 = vpack.c.b16 %v3347, %v3346
      %v3365 = vpack.c.b16 %v3349, %v3348
      %v3368 = vunpack.c.l.b16 %v3284
      %v3369 = vunpack.c.l.b16 %v3285
      %v3370 = vpack.c.b16 %v3369, %v3368
      %v3373 = vsel %vm717, %v3350, 0
      %v3376 = vsel %vm717, %v3351, 0
      %v3379 = vsel %vm717, %v3352, 0
      %v3382 = vsel %vm717, %v3353, 0
      %v3385 = vsel %vm717, %v3354, 0
      %v3388 = vsel %vm717, %v3355, 0
      %v3391 = vsel %vm717, %v3356, 0
      %v3394 = vsel %vm717, %v3357, 0
      %v3397 = vsel %vm717, %v3358, 0
      %v3400 = vsel %vm717, %v3359, 0
      %v3403 = vsel %vm717, %v3360, 0
      %v3406 = vsel %vm717, %v3361, 0
      %v3409 = vsel %vm717, %v3362, 0
      %v3412 = vsel %vm717, %v3363, 0
      %v3415 = vsel %vm717, %v3364, 0
      %v3418 = vsel %vm717, %v3365, 0
      %3420 = vmatprep.subr.bf16.mxu0 0
      %3421 = vmatpush1.bf16.msra.mxu0 0
      %3422 = vmatprep.subr.bf16.mxu0 0
      %3423 = vmatpush1.bf16.msra.mxu0 0
      %3424 = vmatprep.subr.bf16.mxu0 0
      %3425 = vmatpush1.bf16.msra.mxu0 0
      %3426 = vmatprep.subr.bf16.mxu0 0
      %3427 = vmatpush1.bf16.msra.mxu0 0
      %3428 = vmatprep.subr.bf16.mxu0 0
      %3429 = vmatpush1.bf16.msra.mxu0 0
      %3430 = vmatprep.subr.bf16.mxu0 0
      %3431 = vmatpush1.bf16.msra.mxu0 0
      %3432 = vmatprep.subr.bf16.mxu0 0
      %3433 = vmatpush1.bf16.msra.mxu0 0
      %3434 = vmatprep.subr.bf16.mxu0 0
      %3435 = vmatpush1.bf16.msra.mxu0 %v3370
      %3436 = vmatprep.subr.bf16.mxu0 0
      %3437 = vmatpush2.bf16.msra.mxu0 0
      %3438 = vmatprep.subr.bf16.mxu0 0
      %3439 = vmatpush2.bf16.msra.mxu0 0
      %3440 = vmatprep.subr.bf16.mxu0 0
      %3441 = vmatpush2.bf16.msra.mxu0 0
      %3442 = vmatprep.subr.bf16.mxu0 0
      %3443 = vmatpush2.bf16.msra.mxu0 0
      %3444 = vmatprep.subr.bf16.mxu0 0
      %3445 = vmatpush2.bf16.msra.mxu0 0
      %3446 = vmatprep.subr.bf16.mxu0 0
      %3447 = vmatpush2.bf16.msra.mxu0 0
      %3448 = vmatprep.subr.bf16.mxu0 0
      %3449 = vmatpush2.bf16.msra.mxu0 0
      %3450 = vmatprep.subr.bf16.mxu0 0
      %3451 = vmatpush2.bf16.msra.mxu0 0
      %3452 = vmatprep.mubr.bf16.mxu0 0
      %3453 = vmatmul.mubr.bf16.gmra.mxu0 %v3373
      %v3454 = vpop.f32.mrf.mxu0
      %v3455 = vadd.f32 0.0, %v3454
      %v3456 = vpop.f32.mrf.mxu0
      %v3457 = vpop.f32.mrf.mxu0
      %v3458 = vadd.f32 0.0, %v3457
      %v3459 = vpop.f32.mrf.mxu0
      %3460 = vmatprep.mubr.bf16.mxu0 0
      %3461 = vmatmul.mubr.bf16.gmra.mxu0 %v3376
      %v3462 = vpop.f32.mrf.mxu0
      %v3463 = vadd.f32 0.0, %v3462
      %v3464 = vpop.f32.mrf.mxu0
      %v3465 = vpop.f32.mrf.mxu0
      %v3466 = vadd.f32 0.0, %v3465
      %v3467 = vpop.f32.mrf.mxu0
      %3468 = vmatprep.mubr.bf16.mxu0 0
      %3469 = vmatmul.mubr.bf16.gmra.mxu0 %v3379
      %v3470 = vpop.f32.mrf.mxu0
      %v3471 = vadd.f32 0.0, %v3470
      %v3472 = vpop.f32.mrf.mxu0
      %v3473 = vpop.f32.mrf.mxu0
      %v3474 = vadd.f32 0.0, %v3473
      %v3475 = vpop.f32.mrf.mxu0
      %3476 = vmatprep.mubr.bf16.mxu0 0
      %3477 = vmatmul.mubr.bf16.gmra.mxu0 %v3382
      %v3478 = vpop.f32.mrf.mxu0
      %v3479 = vadd.f32 0.0, %v3478
      %v3480 = vpop.f32.mrf.mxu0
      %v3481 = vpop.f32.mrf.mxu0
      %v3482 = vadd.f32 0.0, %v3481
      %v3483 = vpop.f32.mrf.mxu0
      %3484 = vmatprep.mubr.bf16.mxu0 0
      %3485 = vmatmul.mubr.bf16.gmra.mxu0 %v3385
      %v3486 = vpop.f32.mrf.mxu0
      %v3487 = vadd.f32 0.0, %v3486
      %v3488 = vpop.f32.mrf.mxu0
      %v3489 = vpop.f32.mrf.mxu0
      %v3490 = vadd.f32 0.0, %v3489
      %v3491 = vpop.f32.mrf.mxu0
      %3492 = vmatprep.mubr.bf16.mxu0 0
      %3493 = vmatmul.mubr.bf16.gmra.mxu0 %v3388
      %v3494 = vpop.f32.mrf.mxu0
      %v3495 = vadd.f32 0.0, %v3494
      %v3496 = vpop.f32.mrf.mxu0
      %v3497 = vpop.f32.mrf.mxu0
      %v3498 = vadd.f32 0.0, %v3497
      %v3499 = vpop.f32.mrf.mxu0
      %3500 = vmatprep.mubr.bf16.mxu0 0
      %3501 = vmatmul.mubr.bf16.gmra.mxu0 %v3391
      %v3502 = vpop.f32.mrf.mxu0
      %v3503 = vadd.f32 0.0, %v3502
      %v3504 = vpop.f32.mrf.mxu0
      %v3505 = vpop.f32.mrf.mxu0
      %v3506 = vadd.f32 0.0, %v3505
      %v3507 = vpop.f32.mrf.mxu0
      %3508 = vmatprep.mubr.bf16.mxu0 0
      %3509 = vmatmul.mubr.bf16.gmra.mxu0 %v3394
      %v3510 = vpop.f32.mrf.mxu0
      %v3511 = vadd.f32 0.0, %v3510
      %v3512 = vpop.f32.mrf.mxu0
      %v3513 = vpop.f32.mrf.mxu0
      %v3514 = vadd.f32 0.0, %v3513
      %v3515 = vpop.f32.mrf.mxu0
      %3516 = vmatprep.mubr.bf16.mxu0 0
      %3517 = vmatmul.mubr.bf16.gmra.mxu0 %v3397
      %v3518 = vpop.f32.mrf.mxu0
      %v3519 = vadd.f32 0.0, %v3518
      %v3520 = vpop.f32.mrf.mxu0
      %v3521 = vpop.f32.mrf.mxu0
      %v3522 = vadd.f32 0.0, %v3521
      %v3523 = vpop.f32.mrf.mxu0
      %3524 = vmatprep.mubr.bf16.mxu0 0
      %3525 = vmatmul.mubr.bf16.gmra.mxu0 %v3400
      %v3526 = vpop.f32.mrf.mxu0
      %v3527 = vadd.f32 0.0, %v3526
      %v3528 = vpop.f32.mrf.mxu0
      %v3529 = vpop.f32.mrf.mxu0
      %v3530 = vadd.f32 0.0, %v3529
      %v3531 = vpop.f32.mrf.mxu0
      %3532 = vmatprep.mubr.bf16.mxu0 0
      %3533 = vmatmul.mubr.bf16.gmra.mxu0 %v3403
      %v3534 = vpop.f32.mrf.mxu0
      %v3535 = vadd.f32 0.0, %v3534
      %v3536 = vpop.f32.mrf.mxu0
      %v3537 = vpop.f32.mrf.mxu0
      %v3538 = vadd.f32 0.0, %v3537
      %v3539 = vpop.f32.mrf.mxu0
      %3540 = vmatprep.mubr.bf16.mxu0 0
      %3541 = vmatmul.mubr.bf16.gmra.mxu0 %v3406
      %v3542 = vpop.f32.mrf.mxu0
      %v3543 = vadd.f32 0.0, %v3542
      %v3544 = vpop.f32.mrf.mxu0
      %v3545 = vpop.f32.mrf.mxu0
      %v3546 = vadd.f32 0.0, %v3545
      %v3547 = vpop.f32.mrf.mxu0
      %3548 = vmatprep.mubr.bf16.mxu0 0
      %3549 = vmatmul.mubr.bf16.gmra.mxu0 %v3409
      %v3550 = vpop.f32.mrf.mxu0
      %v3551 = vadd.f32 0.0, %v3550
      %v3552 = vpop.f32.mrf.mxu0
      %v3553 = vpop.f32.mrf.mxu0
      %v3554 = vadd.f32 0.0, %v3553
      %v3555 = vpop.f32.mrf.mxu0
      %3556 = vmatprep.mubr.bf16.mxu0 0
      %3557 = vmatmul.mubr.bf16.gmra.mxu0 %v3412
      %v3558 = vpop.f32.mrf.mxu0
      %v3559 = vadd.f32 0.0, %v3558
      %v3560 = vpop.f32.mrf.mxu0
      %v3561 = vpop.f32.mrf.mxu0
      %v3562 = vadd.f32 0.0, %v3561
      %v3563 = vpop.f32.mrf.mxu0
      %3564 = vmatprep.mubr.bf16.mxu0 0
      %3565 = vmatmul.mubr.bf16.gmra.mxu0 %v3415
      %v3566 = vpop.f32.mrf.mxu0
      %v3567 = vadd.f32 0.0, %v3566
      %v3568 = vpop.f32.mrf.mxu0
      %v3569 = vpop.f32.mrf.mxu0
      %v3570 = vadd.f32 0.0, %v3569
      %v3571 = vpop.f32.mrf.mxu0
      %3572 = vmatprep.mubr.bf16.mxu0 0
      %3573 = vmatmul.mubr.bf16.gmra.mxu0 %v3418
      %v3574 = vpop.f32.mrf.mxu0
      %v3575 = vadd.f32 0.0, %v3574
      %v3576 = vpop.f32.mrf.mxu0
      %v3577 = vpop.f32.mrf.mxu0
      %v3578 = vadd.f32 0.0, %v3577
      %v3579 = vpop.f32.mrf.mxu0
      %3580 = vdwg.mxu0
      %v3581 = vadd.f32 %v3218, %v3455
      %v3582 = vadd.f32 %v3219, %v3458
      %v3583 = vadd.f32 %v3220, %v3463
      %v3584 = vadd.f32 %v3221, %v3466
      %v3585 = vadd.f32 %v3222, %v3471
      %v3586 = vadd.f32 %v3223, %v3474
      %v3587 = vadd.f32 %v3224, %v3479
      %v3588 = vadd.f32 %v3225, %v3482
      %v3589 = vadd.f32 %v3226, %v3487
      %v3590 = vadd.f32 %v3227, %v3490
      %v3591 = vadd.f32 %v3228, %v3495
      %v3592 = vadd.f32 %v3229, %v3498
      %v3593 = vadd.f32 %v3230, %v3503
      %v3594 = vadd.f32 %v3231, %v3506
      %v3595 = vadd.f32 %v3232, %v3511
      %v3596 = vadd.f32 %v3233, %v3514
      %v3597 = vadd.f32 %v3234, %v3519
      %v3598 = vadd.f32 %v3235, %v3522
      %v3599 = vadd.f32 %v3236, %v3527
      %v3600 = vadd.f32 %v3237, %v3530
      %v3601 = vadd.f32 %v3238, %v3535
      %v3602 = vadd.f32 %v3239, %v3538
      %v3603 = vadd.f32 %v3240, %v3543
      %v3604 = vadd.f32 %v3241, %v3546
      %v3605 = vadd.f32 %v3242, %v3551
      %v3606 = vadd.f32 %v3243, %v3554
      %v3607 = vadd.f32 %v3244, %v3559
      %v3608 = vadd.f32 %v3245, %v3562
      %v3609 = vadd.f32 %v3246, %v3567
      %v3610 = vadd.f32 %v3247, %v3570
      %v3611 = vadd.f32 %v3248, %v3575
      %v3612 = vadd.f32 %v3249, %v3578
      %v3613 = vld [vmem:[%s3250] sm:$0xf]
      %v3614 = vld [vmem:[%s3250 + $0x4] sm:$0xf]
      %v3615 = vld [vmem:[%s3250 + $0x8] sm:$0x1]
      %v3616 = vld [vmem:[%s3250 + $0xc] sm:$0xf]
      %v3617 = vld [vmem:[%s3250 + $0x10] sm:$0xf]
      %v3618 = vld [vmem:[%s3250 + $0x14] sm:$0x1]
      %v3619 = vld [vmem:[%s3250 + $0x18] sm:$0xf]
      %v3620 = vld [vmem:[%s3250 + $0x1c] sm:$0xf]
      %v3621 = vld [vmem:[%s3250 + $0x20] sm:$0x1]
      %v3622 = vld [vmem:[%s3250 + $0x24] sm:$0xf]
      %v3623 = vld [vmem:[%s3250 + $0x28] sm:$0xf]
      %v3624 = vld [vmem:[%s3250 + $0x2c] sm:$0x1]
      %v3625 = vld [vmem:[%s3250 + $0x30] sm:$0xf]
      %v3626 = vld [vmem:[%s3250 + $0x34] sm:$0xf]
      %v3627 = vld [vmem:[%s3250 + $0x38] sm:$0x1]
      %v3628 = vld [vmem:[%s3250 + $0x3c] sm:$0xf]
      %v3629 = vld [vmem:[%s3250 + $0x40] sm:$0xf]
      %v3630 = vld [vmem:[%s3250 + $0x44] sm:$0x1]
      %v3631 = vld [vmem:[%s3250 + $0x48] sm:$0xf]
      %v3632 = vld [vmem:[%s3250 + $0x4c] sm:$0xf]
      %v3633 = vld [vmem:[%s3250 + $0x50] sm:$0x1]
      %v3634 = vld [vmem:[%s3250 + $0x54] sm:$0xf]
      %v3635 = vld [vmem:[%s3250 + $0x58] sm:$0xf]
      %v3636 = vld [vmem:[%s3250 + $0x5c] sm:$0x1]
      %v3637 = vld [vmem:[%s3250 + $0x60] sm:$0xf]
      %v3638 = vld [vmem:[%s3250 + $0x64] sm:$0xf]
      %v3639 = vld [vmem:[%s3250 + $0x68] sm:$0x1]
      %v3640 = vld [vmem:[%s3250 + $0x6c] sm:$0xf]
      %v3641 = vld [vmem:[%s3250 + $0x70] sm:$0xf]
      %v3642 = vld [vmem:[%s3250 + $0x74] sm:$0x1]
      %v3643 = vld [vmem:[%s3250 + $0x78] sm:$0xf]
      %v3644 = vld [vmem:[%s3250 + $0x7c] sm:$0xf]
      %v3645 = vld [vmem:[%s3250 + $0x80] sm:$0x1]
      %v3646 = vld [vmem:[%s3250 + $0x84] sm:$0xf]
      %v3647 = vld [vmem:[%s3250 + $0x88] sm:$0xf]
      %v3648 = vld [vmem:[%s3250 + $0x8c] sm:$0x1]
      %v3649 = vld [vmem:[%s3250 + $0x90] sm:$0xf]
      %v3650 = vld [vmem:[%s3250 + $0x94] sm:$0xf]
      %v3651 = vld [vmem:[%s3250 + $0x98] sm:$0x1]
      %v3652 = vld [vmem:[%s3250 + $0x9c] sm:$0xf]
      %v3653 = vld [vmem:[%s3250 + $0xa0] sm:$0xf]
      %v3654 = vld [vmem:[%s3250 + $0xa4] sm:$0x1]
      %v3655 = vld [vmem:[%s3250 + $0xa8] sm:$0xf]
      %v3656 = vld [vmem:[%s3250 + $0xac] sm:$0xf]
      %v3657 = vld [vmem:[%s3250 + $0xb0] sm:$0x1]
      %v3658 = vld [vmem:[%s3250 + $0xb4] sm:$0xf]
      %v3659 = vld [vmem:[%s3250 + $0xb8] sm:$0xf]
      %v3660 = vld [vmem:[%s3250 + $0xbc] sm:$0x1]
      %v3662 = vshrl.u32 %v3613, 16
      %v3664 = vrot.slane %v3662, 4
      %v3665 = vshll.u32 %v3613, 16
      %v3667 = vrot.slane %v3665, 5
      %v3668 = vor.u32 %v3664, %v3667
      %v3669 = vrot.slane %v3668, 4
      %v3671 = vshll.u32 %v3614, 16
      %v3673 = vrot.slane %v3671, 5
      %v3674 = vsel %vm275, %v3669, %v3673
      %v3675 = vshrl.u32 %v3614, 16
      %v3677 = vrot.slane %v3675, 4
      %v3678 = vor.u32 %v3677, %v3673
      %v3679 = vrot.slane %v3678, 4
      %v3681 = vshll.u32 %v3615, 16
      %v3683 = vrot.slane %v3681, 5
      %v3684 = vsel %vm275, %v3679, %v3683
      %v3686 = vshrl.u32 %v3616, 16
      %v3688 = vrot.slane %v3686, 4
      %v3689 = vshll.u32 %v3616, 16
      %v3691 = vrot.slane %v3689, 5
      %v3692 = vor.u32 %v3688, %v3691
      %v3693 = vrot.slane %v3692, 4
      %v3695 = vshll.u32 %v3617, 16
      %v3697 = vrot.slane %v3695, 5
      %v3698 = vsel %vm275, %v3693, %v3697
      %v3699 = vshrl.u32 %v3617, 16
      %v3701 = vrot.slane %v3699, 4
      %v3702 = vor.u32 %v3701, %v3697
      %v3703 = vrot.slane %v3702, 4
      %v3705 = vshll.u32 %v3618, 16
      %v3707 = vrot.slane %v3705, 5
      %v3708 = vsel %vm275, %v3703, %v3707
      %v3710 = vshrl.u32 %v3619, 16
      %v3712 = vrot.slane %v3710, 4
      %v3713 = vshll.u32 %v3619, 16
      %v3715 = vrot.slane %v3713, 5
      %v3716 = vor.u32 %v3712, %v3715
      %v3717 = vrot.slane %v3716, 4
      %v3719 = vshll.u32 %v3620, 16
      %v3721 = vrot.slane %v3719, 5
      %v3722 = vsel %vm275, %v3717, %v3721
      %v3723 = vshrl.u32 %v3620, 16
      %v3725 = vrot.slane %v3723, 4
      %v3726 = vor.u32 %v3725, %v3721
      %v3727 = vrot.slane %v3726, 4
      %v3729 = vshll.u32 %v3621, 16
      %v3731 = vrot.slane %v3729, 5
      %v3732 = vsel %vm275, %v3727, %v3731
      %v3734 = vshrl.u32 %v3622, 16
      %v3736 = vrot.slane %v3734, 4
      %v3737 = vshll.u32 %v3622, 16
      %v3739 = vrot.slane %v3737, 5
      %v3740 = vor.u32 %v3736, %v3739
      %v3741 = vrot.slane %v3740, 4
      %v3743 = vshll.u32 %v3623, 16
      %v3745 = vrot.slane %v3743, 5
      %v3746 = vsel %vm275, %v3741, %v3745
      %v3747 = vshrl.u32 %v3623, 16
      %v3749 = vrot.slane %v3747, 4
      %v3750 = vor.u32 %v3749, %v3745
      %v3751 = vrot.slane %v3750, 4
      %v3753 = vshll.u32 %v3624, 16
      %v3755 = vrot.slane %v3753, 5
      %v3756 = vsel %vm275, %v3751, %v3755
      %v3758 = vshrl.u32 %v3625, 16
      %v3760 = vrot.slane %v3758, 4
      %v3761 = vshll.u32 %v3625, 16
      %v3763 = vrot.slane %v3761, 5
      %v3764 = vor.u32 %v3760, %v3763
      %v3765 = vrot.slane %v3764, 4
      %v3767 = vshll.u32 %v3626, 16
      %v3769 = vrot.slane %v3767, 5
      %v3770 = vsel %vm275, %v3765, %v3769
      %v3771 = vshrl.u32 %v3626, 16
      %v3773 = vrot.slane %v3771, 4
      %v3774 = vor.u32 %v3773, %v3769
      %v3775 = vrot.slane %v3774, 4
      %v3777 = vshll.u32 %v3627, 16
      %v3779 = vrot.slane %v3777, 5
      %v3780 = vsel %vm275, %v3775, %v3779
      %v3782 = vshrl.u32 %v3628, 16
      %v3784 = vrot.slane %v3782, 4
      %v3785 = vshll.u32 %v3628, 16
      %v3787 = vrot.slane %v3785, 5
      %v3788 = vor.u32 %v3784, %v3787
      %v3789 = vrot.slane %v3788, 4
      %v3791 = vshll.u32 %v3629, 16
      %v3793 = vrot.slane %v3791, 5
      %v3794 = vsel %vm275, %v3789, %v3793
      %v3795 = vshrl.u32 %v3629, 16
      %v3797 = vrot.slane %v3795, 4
      %v3798 = vor.u32 %v3797, %v3793
      %v3799 = vrot.slane %v3798, 4
      %v3801 = vshll.u32 %v3630, 16
      %v3803 = vrot.slane %v3801, 5
      %v3804 = vsel %vm275, %v3799, %v3803
      %v3806 = vshrl.u32 %v3631, 16
      %v3808 = vrot.slane %v3806, 4
      %v3809 = vshll.u32 %v3631, 16
      %v3811 = vrot.slane %v3809, 5
      %v3812 = vor.u32 %v3808, %v3811
      %v3813 = vrot.slane %v3812, 4
      %v3815 = vshll.u32 %v3632, 16
      %v3817 = vrot.slane %v3815, 5
      %v3818 = vsel %vm275, %v3813, %v3817
      %v3819 = vshrl.u32 %v3632, 16
      %v3821 = vrot.slane %v3819, 4
      %v3822 = vor.u32 %v3821, %v3817
      %v3823 = vrot.slane %v3822, 4
      %v3825 = vshll.u32 %v3633, 16
      %v3827 = vrot.slane %v3825, 5
      %v3828 = vsel %vm275, %v3823, %v3827
      %v3830 = vshrl.u32 %v3634, 16
      %v3832 = vrot.slane %v3830, 4
      %v3833 = vshll.u32 %v3634, 16
      %v3835 = vrot.slane %v3833, 5
      %v3836 = vor.u32 %v3832, %v3835
      %v3837 = vrot.slane %v3836, 4
      %v3839 = vshll.u32 %v3635, 16
      %v3841 = vrot.slane %v3839, 5
      %v3842 = vsel %vm275, %v3837, %v3841
      %v3843 = vshrl.u32 %v3635, 16
      %v3845 = vrot.slane %v3843, 4
      %v3846 = vor.u32 %v3845, %v3841
      %v3847 = vrot.slane %v3846, 4
      %v3849 = vshll.u32 %v3636, 16
      %v3851 = vrot.slane %v3849, 5
      %v3852 = vsel %vm275, %v3847, %v3851
      %v3854 = vshrl.u32 %v3637, 16
      %v3856 = vrot.slane %v3854, 4
      %v3857 = vshll.u32 %v3637, 16
      %v3859 = vrot.slane %v3857, 5
      %v3860 = vor.u32 %v3856, %v3859
      %v3861 = vrot.slane %v3860, 4
      %v3863 = vshll.u32 %v3638, 16
      %v3865 = vrot.slane %v3863, 5
      %v3866 = vsel %vm275, %v3861, %v3865
      %v3867 = vshrl.u32 %v3638, 16
      %v3869 = vrot.slane %v3867, 4
      %v3870 = vor.u32 %v3869, %v3865
      %v3871 = vrot.slane %v3870, 4
      %v3873 = vshll.u32 %v3639, 16
      %v3875 = vrot.slane %v3873, 5
      %v3876 = vsel %vm275, %v3871, %v3875
      %v3878 = vshrl.u32 %v3640, 16
      %v3880 = vrot.slane %v3878, 4
      %v3881 = vshll.u32 %v3640, 16
      %v3883 = vrot.slane %v3881, 5
      %v3884 = vor.u32 %v3880, %v3883
      %v3885 = vrot.slane %v3884, 4
      %v3887 = vshll.u32 %v3641, 16
      %v3889 = vrot.slane %v3887, 5
      %v3890 = vsel %vm275, %v3885, %v3889
      %v3891 = vshrl.u32 %v3641, 16
      %v3893 = vrot.slane %v3891, 4
      %v3894 = vor.u32 %v3893, %v3889
      %v3895 = vrot.slane %v3894, 4
      %v3897 = vshll.u32 %v3642, 16
      %v3899 = vrot.slane %v3897, 5
      %v3900 = vsel %vm275, %v3895, %v3899
      %v3902 = vshrl.u32 %v3643, 16
      %v3904 = vrot.slane %v3902, 4
      %v3905 = vshll.u32 %v3643, 16
      %v3907 = vrot.slane %v3905, 5
      %v3908 = vor.u32 %v3904, %v3907
      %v3909 = vrot.slane %v3908, 4
      %v3911 = vshll.u32 %v3644, 16
      %v3913 = vrot.slane %v3911, 5
      %v3914 = vsel %vm275, %v3909, %v3913
      %v3915 = vshrl.u32 %v3644, 16
      %v3917 = vrot.slane %v3915, 4
      %v3918 = vor.u32 %v3917, %v3913
      %v3919 = vrot.slane %v3918, 4
      %v3921 = vshll.u32 %v3645, 16
      %v3923 = vrot.slane %v3921, 5
      %v3924 = vsel %vm275, %v3919, %v3923
      %v3926 = vshrl.u32 %v3646, 16
      %v3928 = vrot.slane %v3926, 4
      %v3929 = vshll.u32 %v3646, 16
      %v3931 = vrot.slane %v3929, 5
      %v3932 = vor.u32 %v3928, %v3931
      %v3933 = vrot.slane %v3932, 4
      %v3935 = vshll.u32 %v3647, 16
      %v3937 = vrot.slane %v3935, 5
      %v3938 = vsel %vm275, %v3933, %v3937
      %v3939 = vshrl.u32 %v3647, 16
      %v3941 = vrot.slane %v3939, 4
      %v3942 = vor.u32 %v3941, %v3937
      %v3943 = vrot.slane %v3942, 4
      %v3945 = vshll.u32 %v3648, 16
      %v3947 = vrot.slane %v3945, 5
      %v3948 = vsel %vm275, %v3943, %v3947
      %v3950 = vshrl.u32 %v3649, 16
      %v3952 = vrot.slane %v3950, 4
      %v3953 = vshll.u32 %v3649, 16
      %v3955 = vrot.slane %v3953, 5
      %v3956 = vor.u32 %v3952, %v3955
      %v3957 = vrot.slane %v3956, 4
      %v3959 = vshll.u32 %v3650, 16
      %v3961 = vrot.slane %v3959, 5
      %v3962 = vsel %vm275, %v3957, %v3961
      %v3963 = vshrl.u32 %v3650, 16
      %v3965 = vrot.slane %v3963, 4
      %v3966 = vor.u32 %v3965, %v3961
      %v3967 = vrot.slane %v3966, 4
      %v3969 = vshll.u32 %v3651, 16
      %v3971 = vrot.slane %v3969, 5
      %v3972 = vsel %vm275, %v3967, %v3971
      %v3974 = vshrl.u32 %v3652, 16
      %v3976 = vrot.slane %v3974, 4
      %v3977 = vshll.u32 %v3652, 16
      %v3979 = vrot.slane %v3977, 5
      %v3980 = vor.u32 %v3976, %v3979
      %v3981 = vrot.slane %v3980, 4
      %v3983 = vshll.u32 %v3653, 16
      %v3985 = vrot.slane %v3983, 5
      %v3986 = vsel %vm275, %v3981, %v3985
      %v3987 = vshrl.u32 %v3653, 16
      %v3989 = vrot.slane %v3987, 4
      %v3990 = vor.u32 %v3989, %v3985
      %v3991 = vrot.slane %v3990, 4
      %v3993 = vshll.u32 %v3654, 16
      %v3995 = vrot.slane %v3993, 5
      %v3996 = vsel %vm275, %v3991, %v3995
      %v3998 = vshrl.u32 %v3655, 16
      %v4000 = vrot.slane %v3998, 4
      %v4001 = vshll.u32 %v3655, 16
      %v4003 = vrot.slane %v4001, 5
      %v4004 = vor.u32 %v4000, %v4003
      %v4005 = vrot.slane %v4004, 4
      %v4007 = vshll.u32 %v3656, 16
      %v4009 = vrot.slane %v4007, 5
      %v4010 = vsel %vm275, %v4005, %v4009
      %v4011 = vshrl.u32 %v3656, 16
      %v4013 = vrot.slane %v4011, 4
      %v4014 = vor.u32 %v4013, %v4009
      %v4015 = vrot.slane %v4014, 4
      %v4017 = vshll.u32 %v3657, 16
      %v4019 = vrot.slane %v4017, 5
      %v4020 = vsel %vm275, %v4015, %v4019
      %v4022 = vshrl.u32 %v3658, 16
      %v4024 = vrot.slane %v4022, 4
      %v4025 = vshll.u32 %v3658, 16
      %v4027 = vrot.slane %v4025, 5
      %v4028 = vor.u32 %v4024, %v4027
      %v4029 = vrot.slane %v4028, 4
      %v4031 = vshll.u32 %v3659, 16
      %v4033 = vrot.slane %v4031, 5
      %v4034 = vsel %vm275, %v4029, %v4033
      %v4035 = vshrl.u32 %v3659, 16
      %v4037 = vrot.slane %v4035, 4
      %v4038 = vor.u32 %v4037, %v4033
      %v4039 = vrot.slane %v4038, 4
      %v4041 = vshll.u32 %v3660, 16
      %v4043 = vrot.slane %v4041, 5
      %v4044 = vsel %vm275, %v4039, %v4043
      %s4045 = scalar_lea.vmem %s210, 56
      %v4046 = vld [vmem:[%s4045] sm:$0xf]
      %v4047 = vld [vmem:[%s4045 + $0x4] sm:$0xf]
      %v4048 = vunpack.c.l.b16 %v3674
      %v4049 = vunpack.c.l.b16 %v3684
      %v4050 = vunpack.c.l.b16 %v3698
      %v4051 = vunpack.c.l.b16 %v3708
      %v4052 = vunpack.c.l.b16 %v3722
      %v4053 = vunpack.c.l.b16 %v3732
      %v4054 = vunpack.c.l.b16 %v3746
      %v4055 = vunpack.c.l.b16 %v3756
      %v4056 = vunpack.c.l.b16 %v3770
      %v4057 = vunpack.c.l.b16 %v3780
      %v4058 = vunpack.c.l.b16 %v3794
      %v4059 = vunpack.c.l.b16 %v3804
      %v4060 = vunpack.c.l.b16 %v3818
      %v4061 = vunpack.c.l.b16 %v3828
      %v4062 = vunpack.c.l.b16 %v3842
      %v4063 = vunpack.c.l.b16 %v3852
      %v4064 = vunpack.c.l.b16 %v3866
      %v4065 = vunpack.c.l.b16 %v3876
      %v4066 = vunpack.c.l.b16 %v3890
      %v4067 = vunpack.c.l.b16 %v3900
      %v4068 = vunpack.c.l.b16 %v3914
      %v4069 = vunpack.c.l.b16 %v3924
      %v4070 = vunpack.c.l.b16 %v3938
      %v4071 = vunpack.c.l.b16 %v3948
      %v4072 = vunpack.c.l.b16 %v3962
      %v4073 = vunpack.c.l.b16 %v3972
      %v4074 = vunpack.c.l.b16 %v3986
      %v4075 = vunpack.c.l.b16 %v3996
      %v4076 = vunpack.c.l.b16 %v4010
      %v4077 = vunpack.c.l.b16 %v4020
      %v4078 = vunpack.c.l.b16 %v4034
      %v4079 = vunpack.c.l.b16 %v4044
      %v4080 = vpack.c.b16 %v4049, %v4048
      %v4081 = vpack.c.b16 %v4051, %v4050
      %v4082 = vpack.c.b16 %v4053, %v4052
      %v4083 = vpack.c.b16 %v4055, %v4054
      %v4084 = vpack.c.b16 %v4057, %v4056
      %v4085 = vpack.c.b16 %v4059, %v4058
      %v4086 = vpack.c.b16 %v4061, %v4060
      %v4087 = vpack.c.b16 %v4063, %v4062
      %v4088 = vpack.c.b16 %v4065, %v4064
      %v4089 = vpack.c.b16 %v4067, %v4066
      %v4090 = vpack.c.b16 %v4069, %v4068
      %v4091 = vpack.c.b16 %v4071, %v4070
      %v4092 = vpack.c.b16 %v4073, %v4072
      %v4093 = vpack.c.b16 %v4075, %v4074
      %v4094 = vpack.c.b16 %v4077, %v4076
      %v4095 = vpack.c.b16 %v4079, %v4078
      %v4098 = vunpack.c.l.b16 %v4046
      %v4099 = vunpack.c.l.b16 %v4047
      %v4100 = vpack.c.b16 %v4099, %v4098
      %v4103 = vsel %vm717, %v4080, 0
      %v4106 = vsel %vm717, %v4081, 0
      %v4109 = vsel %vm717, %v4082, 0
      %v4112 = vsel %vm717, %v4083, 0
      %v4115 = vsel %vm717, %v4084, 0
      %v4118 = vsel %vm717, %v4085, 0
      %v4121 = vsel %vm717, %v4086, 0
      %v4124 = vsel %vm717, %v4087, 0
      %v4127 = vsel %vm717, %v4088, 0
      %v4130 = vsel %vm717, %v4089, 0
      %v4133 = vsel %vm717, %v4090, 0
      %v4136 = vsel %vm717, %v4091, 0
      %v4139 = vsel %vm717, %v4092, 0
      %v4142 = vsel %vm717, %v4093, 0
      %v4145 = vsel %vm717, %v4094, 0
      %v4148 = vsel %vm717, %v4095, 0
      %4150 = vmatprep.subr.bf16.mxu0 0
      %4151 = vmatpush1.bf16.msra.mxu0 0
      %4152 = vmatprep.subr.bf16.mxu0 0
      %4153 = vmatpush1.bf16.msra.mxu0 0
      %4154 = vmatprep.subr.bf16.mxu0 0
      %4155 = vmatpush1.bf16.msra.mxu0 0
      %4156 = vmatprep.subr.bf16.mxu0 0
      %4157 = vmatpush1.bf16.msra.mxu0 0
      %4158 = vmatprep.subr.bf16.mxu0 0
      %4159 = vmatpush1.bf16.msra.mxu0 0
      %4160 = vmatprep.subr.bf16.mxu0 0
      %4161 = vmatpush1.bf16.msra.mxu0 0
      %4162 = vmatprep.subr.bf16.mxu0 0
      %4163 = vmatpush1.bf16.msra.mxu0 0
      %4164 = vmatprep.subr.bf16.mxu0 0
      %4165 = vmatpush1.bf16.msra.mxu0 %v4100
      %4166 = vmatprep.subr.bf16.mxu0 0
      %4167 = vmatpush2.bf16.msra.mxu0 0
      %4168 = vmatprep.subr.bf16.mxu0 0
      %4169 = vmatpush2.bf16.msra.mxu0 0
      %4170 = vmatprep.subr.bf16.mxu0 0
      %4171 = vmatpush2.bf16.msra.mxu0 0
      %4172 = vmatprep.subr.bf16.mxu0 0
      %4173 = vmatpush2.bf16.msra.mxu0 0
      %4174 = vmatprep.subr.bf16.mxu0 0
      %4175 = vmatpush2.bf16.msra.mxu0 0
      %4176 = vmatprep.subr.bf16.mxu0 0
      %4177 = vmatpush2.bf16.msra.mxu0 0
      %4178 = vmatprep.subr.bf16.mxu0 0
      %4179 = vmatpush2.bf16.msra.mxu0 0
      %4180 = vmatprep.subr.bf16.mxu0 0
      %4181 = vmatpush2.bf16.msra.mxu0 0
      %4182 = vmatprep.mubr.bf16.mxu0 0
      %4183 = vmatmul.mubr.bf16.gmra.mxu0 %v4103
      %v4184 = vpop.f32.mrf.mxu0
      %v4185 = vadd.f32 0.0, %v4184
      %v4186 = vpop.f32.mrf.mxu0
      %v4187 = vpop.f32.mrf.mxu0
      %v4188 = vadd.f32 0.0, %v4187
      %v4189 = vpop.f32.mrf.mxu0
      %4190 = vmatprep.mubr.bf16.mxu0 0
      %4191 = vmatmul.mubr.bf16.gmra.mxu0 %v4106
      %v4192 = vpop.f32.mrf.mxu0
      %v4193 = vadd.f32 0.0, %v4192
      %v4194 = vpop.f32.mrf.mxu0
      %v4195 = vpop.f32.mrf.mxu0
      %v4196 = vadd.f32 0.0, %v4195
      %v4197 = vpop.f32.mrf.mxu0
      %4198 = vmatprep.mubr.bf16.mxu0 0
      %4199 = vmatmul.mubr.bf16.gmra.mxu0 %v4109
      %v4200 = vpop.f32.mrf.mxu0
      %v4201 = vadd.f32 0.0, %v4200
      %v4202 = vpop.f32.mrf.mxu0
      %v4203 = vpop.f32.mrf.mxu0
      %v4204 = vadd.f32 0.0, %v4203
      %v4205 = vpop.f32.mrf.mxu0
      %4206 = vmatprep.mubr.bf16.mxu0 0
      %4207 = vmatmul.mubr.bf16.gmra.mxu0 %v4112
      %v4208 = vpop.f32.mrf.mxu0
      %v4209 = vadd.f32 0.0, %v4208
      %v4210 = vpop.f32.mrf.mxu0
      %v4211 = vpop.f32.mrf.mxu0
      %v4212 = vadd.f32 0.0, %v4211
      %v4213 = vpop.f32.mrf.mxu0
      %4214 = vmatprep.mubr.bf16.mxu0 0
      %4215 = vmatmul.mubr.bf16.gmra.mxu0 %v4115
      %v4216 = vpop.f32.mrf.mxu0
      %v4217 = vadd.f32 0.0, %v4216
      %v4218 = vpop.f32.mrf.mxu0
      %v4219 = vpop.f32.mrf.mxu0
      %v4220 = vadd.f32 0.0, %v4219
      %v4221 = vpop.f32.mrf.mxu0
      %4222 = vmatprep.mubr.bf16.mxu0 0
      %4223 = vmatmul.mubr.bf16.gmra.mxu0 %v4118
      %v4224 = vpop.f32.mrf.mxu0
      %v4225 = vadd.f32 0.0, %v4224
      %v4226 = vpop.f32.mrf.mxu0
      %v4227 = vpop.f32.mrf.mxu0
      %v4228 = vadd.f32 0.0, %v4227
      %v4229 = vpop.f32.mrf.mxu0
      %4230 = vmatprep.mubr.bf16.mxu0 0
      %4231 = vmatmul.mubr.bf16.gmra.mxu0 %v4121
      %v4232 = vpop.f32.mrf.mxu0
      %v4233 = vadd.f32 0.0, %v4232
      %v4234 = vpop.f32.mrf.mxu0
      %v4235 = vpop.f32.mrf.mxu0
      %v4236 = vadd.f32 0.0, %v4235
      %v4237 = vpop.f32.mrf.mxu0
      %4238 = vmatprep.mubr.bf16.mxu0 0
      %4239 = vmatmul.mubr.bf16.gmra.mxu0 %v4124
      %v4240 = vpop.f32.mrf.mxu0
      %v4241 = vadd.f32 0.0, %v4240
      %v4242 = vpop.f32.mrf.mxu0
      %v4243 = vpop.f32.mrf.mxu0
      %v4244 = vadd.f32 0.0, %v4243
      %v4245 = vpop.f32.mrf.mxu0
      %4246 = vmatprep.mubr.bf16.mxu0 0
      %4247 = vmatmul.mubr.bf16.gmra.mxu0 %v4127
      %v4248 = vpop.f32.mrf.mxu0
      %v4249 = vadd.f32 0.0, %v4248
      %v4250 = vpop.f32.mrf.mxu0
      %v4251 = vpop.f32.mrf.mxu0
      %v4252 = vadd.f32 0.0, %v4251
      %v4253 = vpop.f32.mrf.mxu0
      %4254 = vmatprep.mubr.bf16.mxu0 0
      %4255 = vmatmul.mubr.bf16.gmra.mxu0 %v4130
      %v4256 = vpop.f32.mrf.mxu0
      %v4257 = vadd.f32 0.0, %v4256
      %v4258 = vpop.f32.mrf.mxu0
      %v4259 = vpop.f32.mrf.mxu0
      %v4260 = vadd.f32 0.0, %v4259
      %v4261 = vpop.f32.mrf.mxu0
      %4262 = vmatprep.mubr.bf16.mxu0 0
      %4263 = vmatmul.mubr.bf16.gmra.mxu0 %v4133
      %v4264 = vpop.f32.mrf.mxu0
      %v4265 = vadd.f32 0.0, %v4264
      %v4266 = vpop.f32.mrf.mxu0
      %v4267 = vpop.f32.mrf.mxu0
      %v4268 = vadd.f32 0.0, %v4267
      %v4269 = vpop.f32.mrf.mxu0
      %4270 = vmatprep.mubr.bf16.mxu0 0
      %4271 = vmatmul.mubr.bf16.gmra.mxu0 %v4136
      %v4272 = vpop.f32.mrf.mxu0
      %v4273 = vadd.f32 0.0, %v4272
      %v4274 = vpop.f32.mrf.mxu0
      %v4275 = vpop.f32.mrf.mxu0
      %v4276 = vadd.f32 0.0, %v4275
      %v4277 = vpop.f32.mrf.mxu0
      %4278 = vmatprep.mubr.bf16.mxu0 0
      %4279 = vmatmul.mubr.bf16.gmra.mxu0 %v4139
      %v4280 = vpop.f32.mrf.mxu0
      %v4281 = vadd.f32 0.0, %v4280
      %v4282 = vpop.f32.mrf.mxu0
      %v4283 = vpop.f32.mrf.mxu0
      %v4284 = vadd.f32 0.0, %v4283
      %v4285 = vpop.f32.mrf.mxu0
      %4286 = vmatprep.mubr.bf16.mxu0 0
      %4287 = vmatmul.mubr.bf16.gmra.mxu0 %v4142
      %v4288 = vpop.f32.mrf.mxu0
      %v4289 = vadd.f32 0.0, %v4288
      %v4290 = vpop.f32.mrf.mxu0
      %v4291 = vpop.f32.mrf.mxu0
      %v4292 = vadd.f32 0.0, %v4291
      %v4293 = vpop.f32.mrf.mxu0
      %4294 = vmatprep.mubr.bf16.mxu0 0
      %4295 = vmatmul.mubr.bf16.gmra.mxu0 %v4145
      %v4296 = vpop.f32.mrf.mxu0
      %v4297 = vadd.f32 0.0, %v4296
      %v4298 = vpop.f32.mrf.mxu0
      %v4299 = vpop.f32.mrf.mxu0
      %v4300 = vadd.f32 0.0, %v4299
      %v4301 = vpop.f32.mrf.mxu0
      %4302 = vmatprep.mubr.bf16.mxu0 0
      %4303 = vmatmul.mubr.bf16.gmra.mxu0 %v4148
      %v4304 = vpop.f32.mrf.mxu0
      %v4305 = vadd.f32 0.0, %v4304
      %v4306 = vpop.f32.mrf.mxu0
      %v4307 = vpop.f32.mrf.mxu0
      %v4308 = vadd.f32 0.0, %v4307
      %v4309 = vpop.f32.mrf.mxu0
      %4310 = vdwg.mxu0
      %v4311 = vadd.f32 %v3581, %v4185
      %v4312 = vadd.f32 %v3582, %v4188
      %v4313 = vadd.f32 %v3583, %v4193
      %v4314 = vadd.f32 %v3584, %v4196
      %v4315 = vadd.f32 %v3585, %v4201
      %v4316 = vadd.f32 %v3586, %v4204
      %v4317 = vadd.f32 %v3587, %v4209
      %v4318 = vadd.f32 %v3588, %v4212
      %v4319 = vadd.f32 %v3589, %v4217
      %v4320 = vadd.f32 %v3590, %v4220
      %v4321 = vadd.f32 %v3591, %v4225
      %v4322 = vadd.f32 %v3592, %v4228
      %v4323 = vadd.f32 %v3593, %v4233
      %v4324 = vadd.f32 %v3594, %v4236
      %v4325 = vadd.f32 %v3595, %v4241
      %v4326 = vadd.f32 %v3596, %v4244
      %v4327 = vadd.f32 %v3597, %v4249
      %v4328 = vadd.f32 %v3598, %v4252
      %v4329 = vadd.f32 %v3599, %v4257
      %v4330 = vadd.f32 %v3600, %v4260
      %v4331 = vadd.f32 %v3601, %v4265
      %v4332 = vadd.f32 %v3602, %v4268
      %v4333 = vadd.f32 %v3603, %v4273
      %v4334 = vadd.f32 %v3604, %v4276
      %v4335 = vadd.f32 %v3605, %v4281
      %v4336 = vadd.f32 %v3606, %v4284
      %v4337 = vadd.f32 %v3607, %v4289
      %v4338 = vadd.f32 %v3608, %v4292
      %v4339 = vadd.f32 %v3609, %v4297
      %v4340 = vadd.f32 %v3610, %v4300
      %v4341 = vadd.f32 %v3611, %v4305
      %v4342 = vadd.f32 %v3612, %v4308
      %v4343 = vld [vmem:[%s3250] sm:$0xe]
      %v4344 = vld [vmem:[%s3250 + $0xc] sm:$0xe]
      %v4345 = vld [vmem:[%s3250 + $0x18] sm:$0xe]
      %v4346 = vld [vmem:[%s3250 + $0x24] sm:$0xe]
      %v4347 = vld [vmem:[%s3250 + $0x30] sm:$0xe]
      %v4348 = vld [vmem:[%s3250 + $0x3c] sm:$0xe]
      %v4349 = vld [vmem:[%s3250 + $0x48] sm:$0xe]
      %v4350 = vld [vmem:[%s3250 + $0x54] sm:$0xe]
      %v4351 = vld [vmem:[%s3250 + $0x60] sm:$0xe]
      %v4352 = vld [vmem:[%s3250 + $0x6c] sm:$0xe]
      %v4353 = vld [vmem:[%s3250 + $0x78] sm:$0xe]
      %v4354 = vld [vmem:[%s3250 + $0x84] sm:$0xe]
      %v4355 = vld [vmem:[%s3250 + $0x90] sm:$0xe]
      %v4356 = vld [vmem:[%s3250 + $0x9c] sm:$0xe]
      %v4357 = vld [vmem:[%s3250 + $0xa8] sm:$0xe]
      %v4358 = vld [vmem:[%s3250 + $0xb4] sm:$0xe]
      %v4407 = vrot.slane %v4343, 5
      %v4408 = vrot.slane %v4407, 4
      %v4409 = vrot.slane %v3614, 5
      %v4410 = vsel %vm1272, %v4408, %v4409
      %v4411 = vrot.slane %v4409, 4
      %v4412 = vrot.slane %v3615, 5
      %v4413 = vsel %vm1272, %v4411, %v4412
      %v4414 = vrot.slane %v4344, 5
      %v4415 = vrot.slane %v4414, 4
      %v4416 = vrot.slane %v3617, 5
      %v4417 = vsel %vm1272, %v4415, %v4416
      %v4418 = vrot.slane %v4416, 4
      %v4419 = vrot.slane %v3618, 5
      %v4420 = vsel %vm1272, %v4418, %v4419
      %v4421 = vrot.slane %v4345, 5
      %v4422 = vrot.slane %v4421, 4
      %v4423 = vrot.slane %v3620, 5
      %v4424 = vsel %vm1272, %v4422, %v4423
      %v4425 = vrot.slane %v4423, 4
      %v4426 = vrot.slane %v3621, 5
      %v4427 = vsel %vm1272, %v4425, %v4426
      %v4428 = vrot.slane %v4346, 5
      %v4429 = vrot.slane %v4428, 4
      %v4430 = vrot.slane %v3623, 5
      %v4431 = vsel %vm1272, %v4429, %v4430
      %v4432 = vrot.slane %v4430, 4
      %v4433 = vrot.slane %v3624, 5
      %v4434 = vsel %vm1272, %v4432, %v4433
      %v4435 = vrot.slane %v4347, 5
      %v4436 = vrot.slane %v4435, 4
      %v4437 = vrot.slane %v3626, 5
      %v4438 = vsel %vm1272, %v4436, %v4437
      %v4439 = vrot.slane %v4437, 4
      %v4440 = vrot.slane %v3627, 5
      %v4441 = vsel %vm1272, %v4439, %v4440
      %v4442 = vrot.slane %v4348, 5
      %v4443 = vrot.slane %v4442, 4
      %v4444 = vrot.slane %v3629, 5
      %v4445 = vsel %vm1272, %v4443, %v4444
      %v4446 = vrot.slane %v4444, 4
      %v4447 = vrot.slane %v3630, 5
      %v4448 = vsel %vm1272, %v4446, %v4447
      %v4449 = vrot.slane %v4349, 5
      %v4450 = vrot.slane %v4449, 4
      %v4451 = vrot.slane %v3632, 5
      %v4452 = vsel %vm1272, %v4450, %v4451
      %v4453 = vrot.slane %v4451, 4
      %v4454 = vrot.slane %v3633, 5
      %v4455 = vsel %vm1272, %v4453, %v4454
      %v4456 = vrot.slane %v4350, 5
      %v4457 = vrot.slane %v4456, 4
      %v4458 = vrot.slane %v3635, 5
      %v4459 = vsel %vm1272, %v4457, %v4458
      %v4460 = vrot.slane %v4458, 4
      %v4461 = vrot.slane %v3636, 5
      %v4462 = vsel %vm1272, %v4460, %v4461
      %v4463 = vrot.slane %v4351, 5
      %v4464 = vrot.slane %v4463, 4
      %v4465 = vrot.slane %v3638, 5
      %v4466 = vsel %vm1272, %v4464, %v4465
      %v4467 = vrot.slane %v4465, 4
      %v4468 = vrot.slane %v3639, 5
      %v4469 = vsel %vm1272, %v4467, %v4468
      %v4470 = vrot.slane %v4352, 5
      %v4471 = vrot.slane %v4470, 4
      %v4472 = vrot.slane %v3641, 5
      %v4473 = vsel %vm1272, %v4471, %v4472
      %v4474 = vrot.slane %v4472, 4
      %v4475 = vrot.slane %v3642, 5
      %v4476 = vsel %vm1272, %v4474, %v4475
      %v4477 = vrot.slane %v4353, 5
      %v4478 = vrot.slane %v4477, 4
      %v4479 = vrot.slane %v3644, 5
      %v4480 = vsel %vm1272, %v4478, %v4479
      %v4481 = vrot.slane %v4479, 4
      %v4482 = vrot.slane %v3645, 5
      %v4483 = vsel %vm1272, %v4481, %v4482
      %v4484 = vrot.slane %v4354, 5
      %v4485 = vrot.slane %v4484, 4
      %v4486 = vrot.slane %v3647, 5
      %v4487 = vsel %vm1272, %v4485, %v4486
      %v4488 = vrot.slane %v4486, 4
      %v4489 = vrot.slane %v3648, 5
      %v4490 = vsel %vm1272, %v4488, %v4489
      %v4491 = vrot.slane %v4355, 5
      %v4492 = vrot.slane %v4491, 4
      %v4493 = vrot.slane %v3650, 5
      %v4494 = vsel %vm1272, %v4492, %v4493
      %v4495 = vrot.slane %v4493, 4
      %v4496 = vrot.slane %v3651, 5
      %v4497 = vsel %vm1272, %v4495, %v4496
      %v4498 = vrot.slane %v4356, 5
      %v4499 = vrot.slane %v4498, 4
      %v4500 = vrot.slane %v3653, 5
      %v4501 = vsel %vm1272, %v4499, %v4500
      %v4502 = vrot.slane %v4500, 4
      %v4503 = vrot.slane %v3654, 5
      %v4504 = vsel %vm1272, %v4502, %v4503
      %v4505 = vrot.slane %v4357, 5
      %v4506 = vrot.slane %v4505, 4
      %v4507 = vrot.slane %v3656, 5
      %v4508 = vsel %vm1272, %v4506, %v4507
      %v4509 = vrot.slane %v4507, 4
      %v4510 = vrot.slane %v3657, 5
      %v4511 = vsel %vm1272, %v4509, %v4510
      %v4512 = vrot.slane %v4358, 5
      %v4513 = vrot.slane %v4512, 4
      %v4514 = vrot.slane %v3659, 5
      %v4515 = vsel %vm1272, %v4513, %v4514
      %v4516 = vrot.slane %v4514, 4
      %v4517 = vrot.slane %v3660, 5
      %v4518 = vsel %vm1272, %v4516, %v4517
      %s4519 = scalar_lea.vmem %s210, 64
      %v4520 = vld [vmem:[%s4519] sm:$0xf]
      %v4521 = vld [vmem:[%s4519 + $0x4] sm:$0xf]
      %v4522 = vunpack.c.l.b16 %v4410
      %v4523 = vunpack.c.l.b16 %v4413
      %v4524 = vunpack.c.l.b16 %v4417
      %v4525 = vunpack.c.l.b16 %v4420
      %v4526 = vunpack.c.l.b16 %v4424
      %v4527 = vunpack.c.l.b16 %v4427
      %v4528 = vunpack.c.l.b16 %v4431
      %v4529 = vunpack.c.l.b16 %v4434
      %v4530 = vunpack.c.l.b16 %v4438
      %v4531 = vunpack.c.l.b16 %v4441
      %v4532 = vunpack.c.l.b16 %v4445
      %v4533 = vunpack.c.l.b16 %v4448
      %v4534 = vunpack.c.l.b16 %v4452
      %v4535 = vunpack.c.l.b16 %v4455
      %v4536 = vunpack.c.l.b16 %v4459
      %v4537 = vunpack.c.l.b16 %v4462
      %v4538 = vunpack.c.l.b16 %v4466
      %v4539 = vunpack.c.l.b16 %v4469
      %v4540 = vunpack.c.l.b16 %v4473
      %v4541 = vunpack.c.l.b16 %v4476
      %v4542 = vunpack.c.l.b16 %v4480
      %v4543 = vunpack.c.l.b16 %v4483
      %v4544 = vunpack.c.l.b16 %v4487
      %v4545 = vunpack.c.l.b16 %v4490
      %v4546 = vunpack.c.l.b16 %v4494
      %v4547 = vunpack.c.l.b16 %v4497
      %v4548 = vunpack.c.l.b16 %v4501
      %v4549 = vunpack.c.l.b16 %v4504
      %v4550 = vunpack.c.l.b16 %v4508
      %v4551 = vunpack.c.l.b16 %v4511
      %v4552 = vunpack.c.l.b16 %v4515
      %v4553 = vunpack.c.l.b16 %v4518
      %v4554 = vpack.c.b16 %v4523, %v4522
      %v4555 = vpack.c.b16 %v4525, %v4524
      %v4556 = vpack.c.b16 %v4527, %v4526
      %v4557 = vpack.c.b16 %v4529, %v4528
      %v4558 = vpack.c.b16 %v4531, %v4530
      %v4559 = vpack.c.b16 %v4533, %v4532
      %v4560 = vpack.c.b16 %v4535, %v4534
      %v4561 = vpack.c.b16 %v4537, %v4536
      %v4562 = vpack.c.b16 %v4539, %v4538
      %v4563 = vpack.c.b16 %v4541, %v4540
      %v4564 = vpack.c.b16 %v4543, %v4542
      %v4565 = vpack.c.b16 %v4545, %v4544
      %v4566 = vpack.c.b16 %v4547, %v4546
      %v4567 = vpack.c.b16 %v4549, %v4548
      %v4568 = vpack.c.b16 %v4551, %v4550
      %v4569 = vpack.c.b16 %v4553, %v4552
      %v4572 = vunpack.c.l.b16 %v4520
      %v4573 = vunpack.c.l.b16 %v4521
      %v4574 = vpack.c.b16 %v4573, %v4572
      %v4577 = vsel %vm717, %v4554, 0
      %v4580 = vsel %vm717, %v4555, 0
      %v4583 = vsel %vm717, %v4556, 0
      %v4586 = vsel %vm717, %v4557, 0
      %v4589 = vsel %vm717, %v4558, 0
      %v4592 = vsel %vm717, %v4559, 0
      %v4595 = vsel %vm717, %v4560, 0
      %v4598 = vsel %vm717, %v4561, 0
      %v4601 = vsel %vm717, %v4562, 0
      %v4604 = vsel %vm717, %v4563, 0
      %v4607 = vsel %vm717, %v4564, 0
      %v4610 = vsel %vm717, %v4565, 0
      %v4613 = vsel %vm717, %v4566, 0
      %v4616 = vsel %vm717, %v4567, 0
      %v4619 = vsel %vm717, %v4568, 0
      %v4622 = vsel %vm717, %v4569, 0
      %4624 = vmatprep.subr.bf16.mxu0 0
      %4625 = vmatpush1.bf16.msra.mxu0 0
      %4626 = vmatprep.subr.bf16.mxu0 0
      %4627 = vmatpush1.bf16.msra.mxu0 0
      %4628 = vmatprep.subr.bf16.mxu0 0
      %4629 = vmatpush1.bf16.msra.mxu0 0
      %4630 = vmatprep.subr.bf16.mxu0 0
      %4631 = vmatpush1.bf16.msra.mxu0 0
      %4632 = vmatprep.subr.bf16.mxu0 0
      %4633 = vmatpush1.bf16.msra.mxu0 0
      %4634 = vmatprep.subr.bf16.mxu0 0
      %4635 = vmatpush1.bf16.msra.mxu0 0
      %4636 = vmatprep.subr.bf16.mxu0 0
      %4637 = vmatpush1.bf16.msra.mxu0 0
      %4638 = vmatprep.subr.bf16.mxu0 0
      %4639 = vmatpush1.bf16.msra.mxu0 %v4574
      %4640 = vmatprep.subr.bf16.mxu0 0
      %4641 = vmatpush2.bf16.msra.mxu0 0
      %4642 = vmatprep.subr.bf16.mxu0 0
      %4643 = vmatpush2.bf16.msra.mxu0 0
      %4644 = vmatprep.subr.bf16.mxu0 0
      %4645 = vmatpush2.bf16.msra.mxu0 0
      %4646 = vmatprep.subr.bf16.mxu0 0
      %4647 = vmatpush2.bf16.msra.mxu0 0
      %4648 = vmatprep.subr.bf16.mxu0 0
      %4649 = vmatpush2.bf16.msra.mxu0 0
      %4650 = vmatprep.subr.bf16.mxu0 0
      %4651 = vmatpush2.bf16.msra.mxu0 0
      %4652 = vmatprep.subr.bf16.mxu0 0
      %4653 = vmatpush2.bf16.msra.mxu0 0
      %4654 = vmatprep.subr.bf16.mxu0 0
      %4655 = vmatpush2.bf16.msra.mxu0 0
      %4656 = vmatprep.mubr.bf16.mxu0 0
      %4657 = vmatmul.mubr.bf16.gmra.mxu0 %v4577
      %v4658 = vpop.f32.mrf.mxu0
      %v4659 = vadd.f32 0.0, %v4658
      %v4660 = vpop.f32.mrf.mxu0
      %v4661 = vpop.f32.mrf.mxu0
      %v4662 = vadd.f32 0.0, %v4661
      %v4663 = vpop.f32.mrf.mxu0
      %4664 = vmatprep.mubr.bf16.mxu0 0
      %4665 = vmatmul.mubr.bf16.gmra.mxu0 %v4580
      %v4666 = vpop.f32.mrf.mxu0
      %v4667 = vadd.f32 0.0, %v4666
      %v4668 = vpop.f32.mrf.mxu0
      %v4669 = vpop.f32.mrf.mxu0
      %v4670 = vadd.f32 0.0, %v4669
      %v4671 = vpop.f32.mrf.mxu0
      %4672 = vmatprep.mubr.bf16.mxu0 0
      %4673 = vmatmul.mubr.bf16.gmra.mxu0 %v4583
      %v4674 = vpop.f32.mrf.mxu0
      %v4675 = vadd.f32 0.0, %v4674
      %v4676 = vpop.f32.mrf.mxu0
      %v4677 = vpop.f32.mrf.mxu0
      %v4678 = vadd.f32 0.0, %v4677
      %v4679 = vpop.f32.mrf.mxu0
      %4680 = vmatprep.mubr.bf16.mxu0 0
      %4681 = vmatmul.mubr.bf16.gmra.mxu0 %v4586
      %v4682 = vpop.f32.mrf.mxu0
      %v4683 = vadd.f32 0.0, %v4682
      %v4684 = vpop.f32.mrf.mxu0
      %v4685 = vpop.f32.mrf.mxu0
      %v4686 = vadd.f32 0.0, %v4685
      %v4687 = vpop.f32.mrf.mxu0
      %4688 = vmatprep.mubr.bf16.mxu0 0
      %4689 = vmatmul.mubr.bf16.gmra.mxu0 %v4589
      %v4690 = vpop.f32.mrf.mxu0
      %v4691 = vadd.f32 0.0, %v4690
      %v4692 = vpop.f32.mrf.mxu0
      %v4693 = vpop.f32.mrf.mxu0
      %v4694 = vadd.f32 0.0, %v4693
      %v4695 = vpop.f32.mrf.mxu0
      %4696 = vmatprep.mubr.bf16.mxu0 0
      %4697 = vmatmul.mubr.bf16.gmra.mxu0 %v4592
      %v4698 = vpop.f32.mrf.mxu0
      %v4699 = vadd.f32 0.0, %v4698
      %v4700 = vpop.f32.mrf.mxu0
      %v4701 = vpop.f32.mrf.mxu0
      %v4702 = vadd.f32 0.0, %v4701
      %v4703 = vpop.f32.mrf.mxu0
      %4704 = vmatprep.mubr.bf16.mxu0 0
      %4705 = vmatmul.mubr.bf16.gmra.mxu0 %v4595
      %v4706 = vpop.f32.mrf.mxu0
      %v4707 = vadd.f32 0.0, %v4706
      %v4708 = vpop.f32.mrf.mxu0
      %v4709 = vpop.f32.mrf.mxu0
      %v4710 = vadd.f32 0.0, %v4709
      %v4711 = vpop.f32.mrf.mxu0
      %4712 = vmatprep.mubr.bf16.mxu0 0
      %4713 = vmatmul.mubr.bf16.gmra.mxu0 %v4598
      %v4714 = vpop.f32.mrf.mxu0
      %v4715 = vadd.f32 0.0, %v4714
      %v4716 = vpop.f32.mrf.mxu0
      %v4717 = vpop.f32.mrf.mxu0
      %v4718 = vadd.f32 0.0, %v4717
      %v4719 = vpop.f32.mrf.mxu0
      %4720 = vmatprep.mubr.bf16.mxu0 0
      %4721 = vmatmul.mubr.bf16.gmra.mxu0 %v4601
      %v4722 = vpop.f32.mrf.mxu0
      %v4723 = vadd.f32 0.0, %v4722
      %v4724 = vpop.f32.mrf.mxu0
      %v4725 = vpop.f32.mrf.mxu0
      %v4726 = vadd.f32 0.0, %v4725
      %v4727 = vpop.f32.mrf.mxu0
      %4728 = vmatprep.mubr.bf16.mxu0 0
      %4729 = vmatmul.mubr.bf16.gmra.mxu0 %v4604
      %v4730 = vpop.f32.mrf.mxu0
      %v4731 = vadd.f32 0.0, %v4730
      %v4732 = vpop.f32.mrf.mxu0
      %v4733 = vpop.f32.mrf.mxu0
      %v4734 = vadd.f32 0.0, %v4733
      %v4735 = vpop.f32.mrf.mxu0
      %4736 = vmatprep.mubr.bf16.mxu0 0
      %4737 = vmatmul.mubr.bf16.gmra.mxu0 %v4607
      %v4738 = vpop.f32.mrf.mxu0
      %v4739 = vadd.f32 0.0, %v4738
      %v4740 = vpop.f32.mrf.mxu0
      %v4741 = vpop.f32.mrf.mxu0
      %v4742 = vadd.f32 0.0, %v4741
      %v4743 = vpop.f32.mrf.mxu0
      %4744 = vmatprep.mubr.bf16.mxu0 0
      %4745 = vmatmul.mubr.bf16.gmra.mxu0 %v4610
      %v4746 = vpop.f32.mrf.mxu0
      %v4747 = vadd.f32 0.0, %v4746
      %v4748 = vpop.f32.mrf.mxu0
      %v4749 = vpop.f32.mrf.mxu0
      %v4750 = vadd.f32 0.0, %v4749
      %v4751 = vpop.f32.mrf.mxu0
      %4752 = vmatprep.mubr.bf16.mxu0 0
      %4753 = vmatmul.mubr.bf16.gmra.mxu0 %v4613
      %v4754 = vpop.f32.mrf.mxu0
      %v4755 = vadd.f32 0.0, %v4754
      %v4756 = vpop.f32.mrf.mxu0
      %v4757 = vpop.f32.mrf.mxu0
      %v4758 = vadd.f32 0.0, %v4757
      %v4759 = vpop.f32.mrf.mxu0
      %4760 = vmatprep.mubr.bf16.mxu0 0
      %4761 = vmatmul.mubr.bf16.gmra.mxu0 %v4616
      %v4762 = vpop.f32.mrf.mxu0
      %v4763 = vadd.f32 0.0, %v4762
      %v4764 = vpop.f32.mrf.mxu0
      %v4765 = vpop.f32.mrf.mxu0
      %v4766 = vadd.f32 0.0, %v4765
      %v4767 = vpop.f32.mrf.mxu0
      %4768 = vmatprep.mubr.bf16.mxu0 0
      %4769 = vmatmul.mubr.bf16.gmra.mxu0 %v4619
      %v4770 = vpop.f32.mrf.mxu0
      %v4771 = vadd.f32 0.0, %v4770
      %v4772 = vpop.f32.mrf.mxu0
      %v4773 = vpop.f32.mrf.mxu0
      %v4774 = vadd.f32 0.0, %v4773
      %v4775 = vpop.f32.mrf.mxu0
      %4776 = vmatprep.mubr.bf16.mxu0 0
      %4777 = vmatmul.mubr.bf16.gmra.mxu0 %v4622
      %v4778 = vpop.f32.mrf.mxu0
      %v4779 = vadd.f32 0.0, %v4778
      %v4780 = vpop.f32.mrf.mxu0
      %v4781 = vpop.f32.mrf.mxu0
      %v4782 = vadd.f32 0.0, %v4781
      %v4783 = vpop.f32.mrf.mxu0
      %4784 = vdwg.mxu0
      %v4785 = vadd.f32 %v4311, %v4659
      %v4786 = vadd.f32 %v4312, %v4662
      %v4787 = vadd.f32 %v4313, %v4667
      %v4788 = vadd.f32 %v4314, %v4670
      %v4789 = vadd.f32 %v4315, %v4675
      %v4790 = vadd.f32 %v4316, %v4678
      %v4791 = vadd.f32 %v4317, %v4683
      %v4792 = vadd.f32 %v4318, %v4686
      %v4793 = vadd.f32 %v4319, %v4691
      %v4794 = vadd.f32 %v4320, %v4694
      %v4795 = vadd.f32 %v4321, %v4699
      %v4796 = vadd.f32 %v4322, %v4702
      %v4797 = vadd.f32 %v4323, %v4707
      %v4798 = vadd.f32 %v4324, %v4710
      %v4799 = vadd.f32 %v4325, %v4715
      %v4800 = vadd.f32 %v4326, %v4718
      %v4801 = vadd.f32 %v4327, %v4723
      %v4802 = vadd.f32 %v4328, %v4726
      %v4803 = vadd.f32 %v4329, %v4731
      %v4804 = vadd.f32 %v4330, %v4734
      %v4805 = vadd.f32 %v4331, %v4739
      %v4806 = vadd.f32 %v4332, %v4742
      %v4807 = vadd.f32 %v4333, %v4747
      %v4808 = vadd.f32 %v4334, %v4750
      %v4809 = vadd.f32 %v4335, %v4755
      %v4810 = vadd.f32 %v4336, %v4758
      %v4811 = vadd.f32 %v4337, %v4763
      %v4812 = vadd.f32 %v4338, %v4766
      %v4813 = vadd.f32 %v4339, %v4771
      %v4814 = vadd.f32 %v4340, %v4774
      %v4815 = vadd.f32 %v4341, %v4779
      %v4816 = vadd.f32 %v4342, %v4782
      %v4817 = vld [vmem:[%s213] sm:$0x1]
      %v4819 = vlaneseq
      %v4820 = vshrl.u32 %v4819, 7
      %v4821 = vsub.s32 0, %v4820
      %v4822 = vrot.slane %v4817, %v4821
      %v4824 = vadd.f32 %v4785, %v4822
      %v4825 = vadd.f32 %v4786, %v4822
      %v4826 = vadd.f32 %v4787, %v4822
      %v4827 = vadd.f32 %v4788, %v4822
      %v4828 = vadd.f32 %v4789, %v4822
      %v4829 = vadd.f32 %v4790, %v4822
      %v4830 = vadd.f32 %v4791, %v4822
      %v4831 = vadd.f32 %v4792, %v4822
      %v4832 = vadd.f32 %v4793, %v4822
      %v4833 = vadd.f32 %v4794, %v4822
      %v4834 = vadd.f32 %v4795, %v4822
      %v4835 = vadd.f32 %v4796, %v4822
      %v4836 = vadd.f32 %v4797, %v4822
      %v4837 = vadd.f32 %v4798, %v4822
      %v4838 = vadd.f32 %v4799, %v4822
      %v4839 = vadd.f32 %v4800, %v4822
      %v4840 = vadd.f32 %v4801, %v4822
      %v4841 = vadd.f32 %v4802, %v4822
      %v4842 = vadd.f32 %v4803, %v4822
      %v4843 = vadd.f32 %v4804, %v4822
      %v4844 = vadd.f32 %v4805, %v4822
      %v4845 = vadd.f32 %v4806, %v4822
      %v4846 = vadd.f32 %v4807, %v4822
      %v4847 = vadd.f32 %v4808, %v4822
      %v4848 = vadd.f32 %v4809, %v4822
      %v4849 = vadd.f32 %v4810, %v4822
      %v4850 = vadd.f32 %v4811, %v4822
      %v4851 = vadd.f32 %v4812, %v4822
      %v4852 = vadd.f32 %v4813, %v4822
      %v4853 = vadd.f32 %v4814, %v4822
      %v4854 = vadd.f32 %v4815, %v4822
      %v4855 = vadd.f32 %v4816, %v4822
      %v4856 = vmax.f32 %v4824, 0.0
      %v4857 = vmax.f32 %v4825, 0.0
      %v4858 = vmax.f32 %v4826, 0.0
      %v4859 = vmax.f32 %v4827, 0.0
      %v4860 = vmax.f32 %v4828, 0.0
      %v4861 = vmax.f32 %v4829, 0.0
      %v4862 = vmax.f32 %v4830, 0.0
      %v4863 = vmax.f32 %v4831, 0.0
      %v4864 = vmax.f32 %v4832, 0.0
      %v4865 = vmax.f32 %v4833, 0.0
      %v4866 = vmax.f32 %v4834, 0.0
      %v4867 = vmax.f32 %v4835, 0.0
      %v4868 = vmax.f32 %v4836, 0.0
      %v4869 = vmax.f32 %v4837, 0.0
      %v4870 = vmax.f32 %v4838, 0.0
      %v4871 = vmax.f32 %v4839, 0.0
      %v4872 = vmax.f32 %v4840, 0.0
      %v4873 = vmax.f32 %v4841, 0.0
      %v4874 = vmax.f32 %v4842, 0.0
      %v4875 = vmax.f32 %v4843, 0.0
      %v4876 = vmax.f32 %v4844, 0.0
      %v4877 = vmax.f32 %v4845, 0.0
      %v4878 = vmax.f32 %v4846, 0.0
      %v4879 = vmax.f32 %v4847, 0.0
      %v4880 = vmax.f32 %v4848, 0.0
      %v4881 = vmax.f32 %v4849, 0.0
      %v4882 = vmax.f32 %v4850, 0.0
      %v4883 = vmax.f32 %v4851, 0.0
      %v4884 = vmax.f32 %v4852, 0.0
      %v4885 = vmax.f32 %v4853, 0.0
      %v4886 = vmax.f32 %v4854, 0.0
      %v4887 = vmax.f32 %v4855, 0.0
      %vm4888 = vcmask 64512
      %4889 = vst.msk [vmem:[%s221] sm:$0xff] %vm4888, %v4856
      %4890 = vst.msk [vmem:[%s221 + $0x8] sm:$0xff] %vm4888, %v4857
      %4891 = vst.msk [vmem:[%s221 + $0x10] sm:$0xff] %vm4888, %v4858
      %4892 = vst.msk [vmem:[%s221 + $0x18] sm:$0xff] %vm4888, %v4859
      %4893 = vst.msk [vmem:[%s221 + $0x20] sm:$0xff] %vm4888, %v4860
      %4894 = vst.msk [vmem:[%s221 + $0x28] sm:$0xff] %vm4888, %v4861
      %4895 = vst.msk [vmem:[%s221 + $0x30] sm:$0xff] %vm4888, %v4862
      %4896 = vst.msk [vmem:[%s221 + $0x38] sm:$0xff] %vm4888, %v4863
      %4897 = vst.msk [vmem:[%s221 + $0x40] sm:$0xff] %vm4888, %v4864
      %4898 = vst.msk [vmem:[%s221 + $0x48] sm:$0xff] %vm4888, %v4865
      %4899 = vst.msk [vmem:[%s221 + $0x50] sm:$0xff] %vm4888, %v4866
      %4900 = vst.msk [vmem:[%s221 + $0x58] sm:$0xff] %vm4888, %v4867
      %4901 = vst.msk [vmem:[%s221 + $0x60] sm:$0xff] %vm4888, %v4868
      %4902 = vst.msk [vmem:[%s221 + $0x68] sm:$0xff] %vm4888, %v4869
      %4903 = vst.msk [vmem:[%s221 + $0x70] sm:$0xff] %vm4888, %v4870
      %4904 = vst.msk [vmem:[%s221 + $0x78] sm:$0xff] %vm4888, %v4871
      %4905 = vst.msk [vmem:[%s221 + $0x80] sm:$0xff] %vm4888, %v4872
      %4906 = vst.msk [vmem:[%s221 + $0x88] sm:$0xff] %vm4888, %v4873
      %4907 = vst.msk [vmem:[%s221 + $0x90] sm:$0xff] %vm4888, %v4874
      %4908 = vst.msk [vmem:[%s221 + $0x98] sm:$0xff] %vm4888, %v4875
      %4909 = vst.msk [vmem:[%s221 + $0xa0] sm:$0xff] %vm4888, %v4876
      %4910 = vst.msk [vmem:[%s221 + $0xa8] sm:$0xff] %vm4888, %v4877
      %4911 = vst.msk [vmem:[%s221 + $0xb0] sm:$0xff] %vm4888, %v4878
      %4912 = vst.msk [vmem:[%s221 + $0xb8] sm:$0xff] %vm4888, %v4879
      %4913 = vst.msk [vmem:[%s221 + $0xc0] sm:$0xff] %vm4888, %v4880
      %4914 = vst.msk [vmem:[%s221 + $0xc8] sm:$0xff] %vm4888, %v4881
      %4915 = vst.msk [vmem:[%s221 + $0xd0] sm:$0xff] %vm4888, %v4882
      %4916 = vst.msk [vmem:[%s221 + $0xd8] sm:$0xff] %vm4888, %v4883
      %4917 = vst.msk [vmem:[%s221 + $0xe0] sm:$0xff] %vm4888, %v4884
      %4918 = vst.msk [vmem:[%s221 + $0xe8] sm:$0xff] %vm4888, %v4885
      %4919 = vst.msk [vmem:[%s221 + $0xf0] sm:$0xff] %vm4888, %v4886
      %4920 = vst.msk [vmem:[%s221 + $0xf8] sm:$0xff] %vm4888, %v4887
      %p4921 = scmp.lt.s32.totalorder %s18, 1
      %s4922 = scalar_select %p4921, %s18, 1
      %p4923 = scmp.lt.s32.totalorder %s19, 0
      %s4924 = scalar_select %p4923, %s19, 0
      %s4925 = smul.addr %s4922, 32
      %s4926 = sadd.s32 %s4924, %s4925
      %s4927 = smul.addr %s4926, 8
      %s4928 = scalar_lea.vmem %s3, %s4927
      // Predicated region
      $region33: #{tpu_custom_call.1} parent=31 // pred_check
        %p4929 = pneg %p124
      $region34: #{tpu_custom_call.1} parent=31 // pred_check_branch
        %4931 = sbr.rel (%p4929) target = $region36
      $region35: #{tpu_custom_call.1} parent=31 // pred_region
        _
      $region36: #{tpu_custom_call.1} parent=31 // pred_fallthru
        _
    $region32: #{tpu_custom_call.1} parent=5 // pred_fallthru
      _
    %p4932 = scmp.le.s32.totalorder 2, %s9
    // Predicated region
    $region37: #{tpu_custom_call.1} parent=5 // pred_check
      %p4933 = pneg %p4932
    $region38: #{tpu_custom_call.1} parent=5 // pred_check_branch
      %4935 = sbr.rel (%p4933) target = $region40
    $region39: #{tpu_custom_call.1} parent=5 // pred_region
      %s4936 = ssub.s32 %s9, 2
      // Predicated region
      $region41: #{tpu_custom_call.1} parent=39 // pred_check
        %p4937 = pneg %p130
      $region42: #{tpu_custom_call.1} parent=39 // pred_check_branch
        %4939 = sbr.rel (%p4937) target = $region44
      $region43: #{tpu_custom_call.1} parent=39 // pred_region
        %p4940 = scmp.lt.s32.totalorder %s20, 1
        %s4941 = scalar_select %p4940, %s20, 1
        %p4942 = scmp.lt.s32.totalorder %s21, 0
        %s4943 = scalar_select %p4942, %s21, 0
        %s4944 = smul.addr %s4941, 32
        %s4945 = sadd.s32 %s4943, %s4944
        %s4946 = smul.addr %s4945, 8
        %s4947 = scalar_lea.vmem %s3, %s4946
      $region44: #{tpu_custom_call.1} parent=39 // pred_fallthru
        _
    $region40: #{tpu_custom_call.1} parent=5 // pred_fallthru
      _
  $region6: #{tpu_custom_call.1} parent=0 // loop_footer
    %s13 = sadd.s32 1, %s9
  $region7: #{tpu_custom_call.1} parent=0 // loop_footer_branch
    %8 = sbr.rel target = $region3
  $region8: #{tpu_custom_call.1} parent=0 // loop_exit
    _

</llo_original>
